<compile_context>
chip_gen: v5e
topology: v5e:2x2
jax: 0.10.0
libtpu: 0.0.40
codegen_flags: <defaults>
</compile_context>

<pallas_src>
import functools

import jax
import jax.numpy as jnp
from jax.experimental import pallas as pl
from jax.experimental.pallas import tpu as pltpu


def _round_up(x, m):
    return ((x + m - 1) // m) * m


def _largest_tile(n, limit, multiple):
    """Largest d <= limit with d % multiple == 0 and n % d == 0 (n % multiple == 0)."""
    best = multiple
    d = multiple
    top = min(n, limit)
    while d <= top:
        if n % d == 0:
            best = d
        d += multiple
    return best


def _nbytes(shape, dtype):
    n = 1
    for d in shape:
        n *= int(d)
    return n * jnp.dtype(dtype).itemsize


# ------------------------- Kernel A: LSTM layer stack -------------------------

def lstm_stack_kernel(x_ref, h0_ref, c0_ref, wih0_ref, wihn_ref, whh_ref, b_ref,
                      seq_out_ref, hN_ref, cN_ref,
                      h_sc, c_sc, gx_sc, seq_sc,
                      *, batch_p, hidden_p, chunks):
    Bp, Hp = batch_p, hidden_p
    layer = pl.program_id(0)
    n_layers = pl.num_programs(0)

    # Each layer starts from its own initial state (no cross-layer carry).
    h_sc[...] = h0_ref[0]
    c_sc[...] = c0_ref[0]

    for (t0, tc) in chunks:                 # static python loop over time chunks
        row0 = t0 * Bp
        nrows = tc * Bp

        # Hoisted (time-parallel) input projection for this chunk, bf16 MXU,
        # f32 accumulation.  Layer 0 reads the embedded tokens; layers >= 1
        # read the previous layer's hidden sequence (VMEM-resident scratch).
        @pl.when(layer == 0)
        def _():
            gx_sc[pl.ds(0, nrows), :] = (
                jnp.dot(x_ref[pl.ds(row0, nrows), :], wih0_ref[...],
                        preferred_element_type=jnp.float32)
                + b_ref[0])

        @pl.when(layer > 0)
        def _():
            gx_sc[pl.ds(0, nrows), :] = (
                jnp.dot(seq_sc[pl.ds(row0, nrows), :], wihn_ref[0],
                        preferred_element_type=jnp.float32)
                + b_ref[0])

        # Serial recurrence over the chunk; only (Bp,Hp)@(Hp,4Hp) on the
        # critical path.  Partial unroll keeps LLO visibility without vreg blowup.
        def step(tl, carry):
            grow = pl.multiple_of(tl * Bp, Bp)
            srow = pl.multiple_of(row0 + tl * Bp, Bp)
            gates = (gx_sc[pl.ds(grow, Bp), :]
                     + jnp.dot(h_sc[...].astype(jnp.bfloat16), whh_ref[0],
                               preferred_element_type=jnp.float32))
            if_act = jax.nn.sigmoid(gates[:, 0:2 * Hp])   # fused i|f sigmoid
            i_g = if_act[:, 0:Hp]
            f_g = if_act[:, Hp:2 * Hp]
            g_g = jnp.tanh(gates[:, 2 * Hp:3 * Hp])
            o_g = jax.nn.sigmoid(gates[:, 3 * Hp:4 * Hp])
            c_new = f_g * c_sc[...] + i_g * g_g           # f32 state update
            h_new = o_g * jnp.tanh(c_new)
            c_sc[...] = c_new
            h_sc[...] = h_new
            seq_sc[pl.ds(srow, Bp), :] = h_new.astype(jnp.bfloat16)
            return carry

        jax.lax.fori_loop(0, tc, step, 0, unroll=min(tc, 8))

    # Per-layer final states (written back every grid step via index_map).
    hN_ref[0] = h_sc[...]
    cN_ref[0] = c_sc[...]

    # Only the last layer's hidden sequence leaves the kernel.
    # TODO(synk): inter-layer LSTM dropout (training mode only); eval is identity.
    @pl.when(layer == n_layers - 1)
    def _():
        seq_out_ref[...] = seq_sc[...]


def lstm_stack_call(x2d, h0p, c0p, wih0_p, wihn_p, whh_p, b_p,
                    *, T, Bp, Ep, Hp, L, t_chunk):
    chunks = []
    t0 = 0
    while t0 < T:
        tc = min(t_chunk, T - t0)
        chunks.append((t0, tc))
        t0 += tc
    max_tc = max(tc for _, tc in chunks)

    kernel = functools.partial(lstm_stack_kernel, batch_p=Bp, hidden_p=Hp,
                               chunks=tuple(chunks))

    in_block_bytes = (_nbytes((T * Bp, Ep), jnp.bfloat16)
                      + 2 * _nbytes((1, Bp, Hp), jnp.float32)
                      + _nbytes((Ep, 4 * Hp), jnp.bfloat16)
                      + 2 * _nbytes((1, Hp, 4 * Hp), jnp.bfloat16)
                      + _nbytes((1, 1, 4 * Hp), jnp.float32))
    out_block_bytes = (_nbytes((T * Bp, Hp), jnp.bfloat16)
                       + 2 * _nbytes((1, Bp, Hp), jnp.float32))
    scratch_bytes = (2 * _nbytes((Bp, Hp), jnp.float32)
                     + _nbytes((max_tc * Bp, 4 * Hp), jnp.float32)
                     + _nbytes((T * Bp, Hp), jnp.bfloat16))
    vmem_limit = int(min(64 << 20, max(32 << 20,
                                       2 * (in_block_bytes + out_block_bytes)
                                       + scratch_bytes + (4 << 20))))

    # TODO(synk): on v7x, add a leading "parallel" batch-block grid axis so the
    # two TensorCores process independent sequences.
    return pl.pallas_call(
        kernel,
        out_shape=(jax.ShapeDtypeStruct((T * Bp, Hp), jnp.bfloat16),
                   jax.ShapeDtypeStruct((L, Bp, Hp), jnp.float32),
                   jax.ShapeDtypeStruct((L, Bp, Hp), jnp.float32)),
        grid_spec=pltpu.PrefetchScalarGridSpec(
            num_scalar_prefetch=0,
            grid=(L,),
            in_specs=[
                pl.BlockSpec((T * Bp, Ep), lambda l: (0, 0)),        # embedded x
                pl.BlockSpec((1, Bp, Hp), lambda l: (l, 0, 0)),      # h0[l]
                pl.BlockSpec((1, Bp, Hp), lambda l: (l, 0, 0)),      # c0[l]
                pl.BlockSpec((Ep, 4 * Hp), lambda l: (0, 0)),        # W_ih layer 0
                pl.BlockSpec((1, Hp, 4 * Hp), lambda l: (l, 0, 0)),  # W_ih layers>=1
                pl.BlockSpec((1, Hp, 4 * Hp), lambda l: (l, 0, 0)),  # W_hh[l]
                pl.BlockSpec((1, 1, 4 * Hp), lambda l: (l, 0, 0)),   # bias[l]
            ],
            out_specs=(
                pl.BlockSpec((T * Bp, Hp), lambda l: (0, 0)),        # last-layer seq
                pl.BlockSpec((1, Bp, Hp), lambda l: (l, 0, 0)),      # h_n[l]
                pl.BlockSpec((1, Bp, Hp), lambda l: (l, 0, 0)),      # c_n[l]
            ),
            scratch_shapes=[
                pltpu.VMEM((Bp, Hp), jnp.float32),                   # h state
                pltpu.VMEM((Bp, Hp), jnp.float32),                   # c state
                pltpu.VMEM((max_tc * Bp, 4 * Hp), jnp.float32),      # gate_x chunk
                pltpu.VMEM((T * Bp, Hp), jnp.bfloat16),              # inter-layer seq
            ],
        ),
        compiler_params=pltpu.CompilerParams(
            dimension_semantics=("arbitrary",),
            vmem_limit_bytes=vmem_limit),
    )(x2d, h0p, c0p, wih0_p, wihn_p, whh_p, b_p)


# ------------------------- Kernel B: tiled FC projection -------------------------

def fc_kernel(seq_ref, wfc_ref, bfc_ref, out_ref):
    out_ref[...] = (jnp.dot(seq_ref[...], wfc_ref[...],
                            preferred_element_type=jnp.float32)
                    + bfc_ref[...]).astype(out_ref.dtype)


def fc_call(seq_bm, wfc_p, bfc_p, *, Rp, Hp, Vp):
    tile_r = _largest_tile(Rp, 256, 8)
    tile_v = _largest_tile(Vp, 512, 128)
    grid = (Rp // tile_r, Vp // tile_v)

    block_bytes = (_nbytes((tile_r, Hp), jnp.bfloat16)
                   + _nbytes((Hp, tile_v), jnp.bfloat16)
                   + _nbytes((1, tile_v), jnp.float32)
                   + _nbytes((tile_r, tile_v), jnp.float32))
    vmem_limit = int(min(64 << 20, max(32 << 20, 2 * block_bytes + (4 << 20))))

    return pl.pallas_call(
        fc_kernel,
        out_shape=jax.ShapeDtypeStruct((Rp, Vp), jnp.float32),
        grid_spec=pltpu.PrefetchScalarGridSpec(
            num_scalar_prefetch=0,
            grid=grid,
            in_specs=[
                pl.BlockSpec((tile_r, Hp), lambda r, v: (r, 0)),
                pl.BlockSpec((Hp, tile_v), lambda r, v: (0, v)),
                pl.BlockSpec((1, tile_v), lambda r, v: (0, v)),
            ],
            out_specs=pl.BlockSpec((tile_r, tile_v), lambda r, v: (r, v)),
        ),
        compiler_params=pltpu.CompilerParams(
            dimension_semantics=("parallel", "parallel"),
            vmem_limit_bytes=vmem_limit),
    )(seq_bm, wfc_p, bfc_p)


# ------------------------------ Model wrapper ------------------------------

def _pad_gate_cols(w, H, Hp):
    """Pad the 4H gate axis (last dim) to 4Hp, per gate, keeping [i,f,g,o]."""
    lead = w.shape[:-1]
    w4 = w.reshape(*lead, 4, H)
    w4p = jnp.pad(w4, [(0, 0)] * len(lead) + [(0, 0), (0, Hp - H)])
    return w4p.reshape(*lead, 4 * Hp)


class LyricLSTMPallas:
    def __init__(self, num_hidden, num_layers, embed_size, drop_prob, lr,
                 vocab_size, key):
        self.num_hidden = num_hidden
        self.num_layers = num_layers
        self.embed_size = embed_size
        self.drop_prob = drop_prob
        self.lr = lr
        self.vocab_size = vocab_size

        H = num_hidden
        self.Hp = _round_up(H, 128)
        self.Ep = _round_up(embed_size, 128)
        self.Vp = _round_up(vocab_size, 128)
        Hp, Ep, Vp = self.Hp, self.Ep, self.Vp

        keys = jax.random.split(key, 2 + 4 * num_layers + 2)
        k_it = iter(keys)

        # Embedding (padding_idx=0 -> row 0 zeroed), like nn.Embedding init.
        emb = jax.random.normal(next(k_it), (vocab_size, embed_size),
                                dtype=jnp.float32)
        self.embedding = emb.at[0].set(0.0)

        # LSTM per-layer weights (PyTorch shapes: W_ih (4H, in), W_hh (4H, H)).
        bound = 1.0 / jnp.sqrt(num_hidden)
        self.wih_t, self.whh_t, self.bias = [], [], []   # unpadded f32 (reference)
        wihn_list, whh_list, b_list = [], [], []          # padded bf16/f32 (kernel)
        wih0_p = None
        for layer in range(num_layers):
            in_size = embed_size if layer == 0 else num_hidden
            w_ih = jax.random.uniform(next(k_it), (4 * H, in_size),
                                      minval=-bound, maxval=bound, dtype=jnp.float32)
            w_hh = jax.random.uniform(next(k_it), (4 * H, H),
                                      minval=-bound, maxval=bound, dtype=jnp.float32)
            b_ih = jax.random.uniform(next(k_it), (4 * H,),
                                      minval=-bound, maxval=bound, dtype=jnp.float32)
            b_hh = jax.random.uniform(next(k_it), (4 * H,),
                                      minval=-bound, maxval=bound, dtype=jnp.float32)

            wih_t = w_ih.T                        # (in, 4H)
            whh_t = w_hh.T                        # (H, 4H)
            b = (b_ih + b_hh).reshape(1, -1)      # (1, 4H)
            self.wih_t.append(wih_t)
            self.whh_t.append(whh_t)
            self.bias.append(b)

            if layer == 0:
                wih0_p = jnp.pad(_pad_gate_cols(wih_t, H, Hp),
                                 ((0, Ep - embed_size), (0, 0))).astype(jnp.bfloat16)
                wihn_list.append(jnp.zeros((Hp, 4 * Hp), jnp.bfloat16))  # unused slot
            else:
                wihn_list.append(jnp.pad(_pad_gate_cols(wih_t, H, Hp),
                                         ((0, Hp - H), (0, 0))).astype(jnp.bfloat16))
            whh_list.append(jnp.pad(_pad_gate_cols(whh_t, H, Hp),
                                    ((0, Hp - H), (0, 0))).astype(jnp.bfloat16))
            b_list.append(_pad_gate_cols(b, H, Hp))           # (1, 4Hp) f32

        self.wih0_p = wih0_p                                  # (Ep, 4Hp) bf16
        self.wihn_p = jnp.stack(wihn_list)                    # (L, Hp, 4Hp) bf16
        self.whh_p = jnp.stack(whh_list)                      # (L, Hp, 4Hp) bf16
        self.b_p = jnp.stack(b_list)                          # (L, 1, 4Hp) f32

        # fc: nn.Linear(num_hidden, vocab_size)
        fbound = 1.0 / jnp.sqrt(num_hidden)
        w_fc = jax.random.uniform(next(k_it), (vocab_size, num_hidden),
                                  minval=-fbound, maxval=fbound, dtype=jnp.float32)
        b_fc = jax.random.uniform(next(k_it), (vocab_size,),
                                  minval=-fbound, maxval=fbound, dtype=jnp.float32)
        self.w_fc_t = w_fc.T                 # (H, V)   (reference)
        self.b_fc = b_fc.reshape(1, -1)      # (1, V)
        self.w_fc_t_p = jnp.pad(self.w_fc_t,
                                ((0, Hp - H), (0, Vp - vocab_size))).astype(jnp.bfloat16)
        self.b_fc_p = jnp.pad(self.b_fc, ((0, 0), (0, Vp - vocab_size)))  # f32

    def init_hidden(self, batch_size=32):
        z = jnp.zeros((self.num_layers, batch_size, self.num_hidden), jnp.float32)
        return (z, z)

    def forward(self, x, hidden):
        """x: (B, T) int32 tokens; hidden: (h0, c0) each (L, B, H)."""
        h0_all, c0_all = hidden
        B, T = x.shape
        H, Hp, Ep, V, Vp, L = (self.num_hidden, self.Hp, self.Ep,
                               self.vocab_size, self.Vp, self.num_layers)
        # Batch padded to a multiple of 16 so bf16 sublane-packed stores stay aligned.
        Bp = _round_up(max(B, 16), 16)

        # Embedding lookup directly into time-major layout (transpose the tiny
        # int token matrix, not activations).
        emb_tbe = jnp.take(self.embedding, jnp.transpose(x), axis=0)      # (T,B,E)
        emb_tbe = jnp.pad(emb_tbe, ((0, 0), (0, Bp - B), (0, Ep - self.embed_size)))
        x2d = emb_tbe.reshape(T * Bp, Ep).astype(jnp.bfloat16)

        h0p = jnp.pad(h0_all, ((0, 0), (0, Bp - B), (0, Hp - H)))
        c0p = jnp.pad(c0_all, ((0, 0), (0, Bp - B), (0, Hp - H)))

        seq_p, hN_p, cN_p = lstm_stack_call(
            x2d, h0p, c0p, self.wih0_p, self.wihn_p, self.whh_p, self.b_p,
            T=T, Bp=Bp, Ep=Ep, Hp=Hp, L=L, t_chunk=min(T, 32))

        # Re-order the SMALL hidden sequence (T,B,H) -> batch-major rows, so the
        # FC kernel writes logits directly in (B*T, V) order (no logits transpose).
        seq_bm = jnp.transpose(seq_p.reshape(T, Bp, Hp)[:, :B, :], (1, 0, 2))
        seq_bm = seq_bm.reshape(B * T, Hp)
        Rp = _round_up(B * T, 8)
        seq_bm = jnp.pad(seq_bm, ((0, Rp - B * T), (0, 0)))

        logits_p = fc_call(seq_bm, self.w_fc_t_p, self.b_fc_p, Rp=Rp, Hp=Hp, Vp=Vp)

        # TODO(synk): self.dropout is identity in eval mode; training dropout not implemented.
        out = logits_p[:B * T, :V]                       # (B*T, V)
        h_n = hN_p[:, :B, :H]
        c_n = cN_p[:, :B, :H]
        return out, (h_n, c_n)


# ------------------------------ Pure-JAX reference ------------------------------

def reference_forward(model, x, hidden):
    h0_all, c0_all = hidden
    embedded = jnp.take(model.embedding, x, axis=0)          # (B, T, E)
    layer_in = jnp.transpose(embedded, (1, 0, 2))            # (T, B, E)
    H = model.num_hidden
    h_finals, c_finals = [], []
    for layer in range(model.num_layers):
        wih_t, whh_t, b = model.wih_t[layer], model.whh_t[layer], model.bias[layer]

        def step(carry, x_t):
            h, c = carry
            gates = x_t @ wih_t + h @ whh_t + b
            i = jax.nn.sigmoid(gates[:, 0 * H:1 * H])
            f = jax.nn.sigmoid(gates[:, 1 * H:2 * H])
            g = jnp.tanh(gates[:, 2 * H:3 * H])
            o = jax.nn.sigmoid(gates[:, 3 * H:4 * H])
            c_new = f * c + i * g
            h_new = o * jnp.tanh(c_new)
            return (h_new, c_new), h_new

        (hT, cT), ys = jax.lax.scan(step, (h0_all[layer], c0_all[layer]), layer_in)
        h_finals.append(hT)
        c_finals.append(cT)
        layer_in = ys
    lstm_output = jnp.transpose(layer_in, (1, 0, 2))
    out = lstm_output.reshape(-1, H) @ model.w_fc_t + model.b_fc
    return out, (jnp.stack(h_finals), jnp.stack(c_finals))


# ------------------------------ Main ------------------------------

if __name__ == "__main__":
    key = jax.random.PRNGKey(0)
    k_model, k_tokens = jax.random.split(key)

    num_hidden = 32
    num_layers = 2
    embed_size = 16
    drop_prob = 0.3
    lr = 1e-3
    vocab_size = 50
    batch = 2
    seq = 8

    model = LyricLSTMPallas(num_hidden, num_layers, embed_size, drop_prob,
                            lr, vocab_size, k_model)

    x = jax.random.randint(k_tokens, (batch, seq), 0, vocab_size, dtype=jnp.int32)
    hidden = model.init_hidden(batch_size=batch)

    out, (h_n, c_n) = model.forward(x, hidden)
    out = jax.block_until_ready(out)
    h_n = jax.block_until_ready(h_n)
    c_n = jax.block_until_ready(c_n)

    assert out.shape == (batch * seq, vocab_size)
    assert h_n.shape == (num_layers, batch, num_hidden)
    assert c_n.shape == (num_layers, batch, num_hidden)

    # Cross-check against pure-f32 JAX reference.  The kernel uses bf16 MXU
    # operands (f32 accumulation), so the tolerance is bf16-appropriate.
    ref_out, (ref_h, ref_c) = reference_forward(model, x, hidden)
    assert jnp.allclose(out, ref_out, rtol=3e-2, atol=3e-2)
    assert jnp.allclose(h_n, ref_h, rtol=3e-2, atol=3e-2)
    assert jnp.allclose(c_n, ref_c, rtol=3e-2, atol=3e-2)

    print("KERNEL_OK")
</pallas_src>

<mosaic_0001>
module attributes {stable_mosaic.version = 11 : i64} {
  func.func @lstm_stack_kernel(%arg0: i32, %arg1: memref<128x128xbf16, #tpu.memory_space<vmem>>, %arg2: memref<1x16x128xf32, #tpu.memory_space<vmem>>, %arg3: memref<1x16x128xf32, #tpu.memory_space<vmem>>, %arg4: memref<128x512xbf16, #tpu.memory_space<vmem>>, %arg5: memref<1x128x512xbf16, #tpu.memory_space<vmem>>, %arg6: memref<1x128x512xbf16, #tpu.memory_space<vmem>>, %arg7: memref<1x1x512xf32, #tpu.memory_space<vmem>>, %arg8: memref<128x128xbf16, #tpu.memory_space<vmem>>, %arg9: memref<1x16x128xf32, #tpu.memory_space<vmem>>, %arg10: memref<1x16x128xf32, #tpu.memory_space<vmem>>, %arg11: memref<16x128xf32, #tpu.memory_space<vmem>>, %arg12: memref<16x128xf32, #tpu.memory_space<vmem>>, %arg13: memref<128x512xf32, #tpu.memory_space<vmem>>, %arg14: memref<128x128xbf16, #tpu.memory_space<vmem>>) attributes {dimension_semantics = [#tpu.dimension_semantics<arbitrary>], iteration_bounds = array<i64: 2>, scalar_prefetch = 0 : i64, scratch_operands = 4 : i64, tpu.core_type = #tpu.core_type<tc>, window_params = [{pipeline_mode = #tpu.pipeline_mode<synchronous>, transform_indices = @transform_0, window_bounds = array<i64: 128, 128>}, {transform_indices = @transform_1, window_bounds = array<i64: 1, 16, 128>}, {transform_indices = @transform_2, window_bounds = array<i64: 1, 16, 128>}, {pipeline_mode = #tpu.pipeline_mode<synchronous>, transform_indices = @transform_3, window_bounds = array<i64: 128, 512>}, {transform_indices = @transform_4, window_bounds = array<i64: 1, 128, 512>}, {transform_indices = @transform_5, window_bounds = array<i64: 1, 128, 512>}, {transform_indices = @transform_6, window_bounds = array<i64: 1, 1, 512>}, {pipeline_mode = #tpu.pipeline_mode<synchronous>, transform_indices = @transform_7, window_bounds = array<i64: 128, 128>}, {transform_indices = @transform_8, window_bounds = array<i64: 1, 16, 128>}, {transform_indices = @transform_9, window_bounds = array<i64: 1, 16, 128>}]} {
    %c0 = arith.constant 0 : index
    %c0_0 = arith.constant 0 : index
    %c0_1 = arith.constant 0 : index
    %0 = vector.load %arg2[%c0, %c0_0, %c0_1] : memref<1x16x128xf32, #tpu.memory_space<vmem>>, vector<1x16x128xf32>
    %1 = vector.shape_cast %0 : vector<1x16x128xf32> to vector<16x128xf32>
    %c0_2 = arith.constant 0 : index
    %c0_3 = arith.constant 0 : index
    %2 = vector.load %arg11[%c0_2, %c0_3] : memref<16x128xf32, #tpu.memory_space<vmem>>, vector<16x128xf32>
    tpu.vector_store %arg11[%c0_2, %c0_3], %1 {strides = array<i32>} : memref<16x128xf32, #tpu.memory_space<vmem>>, vector<16x128xf32>,
    %c0_4 = arith.constant 0 : index
    %c0_5 = arith.constant 0 : index
    %c0_6 = arith.constant 0 : index
    %3 = vector.load %arg3[%c0_4, %c0_5, %c0_6] : memref<1x16x128xf32, #tpu.memory_space<vmem>>, vector<1x16x128xf32>
    %4 = vector.shape_cast %3 : vector<1x16x128xf32> to vector<16x128xf32>
    %c0_7 = arith.constant 0 : index
    %c0_8 = arith.constant 0 : index
    %5 = vector.load %arg12[%c0_7, %c0_8] : memref<16x128xf32, #tpu.memory_space<vmem>>, vector<16x128xf32>
    tpu.vector_store %arg12[%c0_7, %c0_8], %4 {strides = array<i32>} : memref<16x128xf32, #tpu.memory_space<vmem>>, vector<16x128xf32>,
    %c0_i32 = arith.constant 0 : i32
    %6 = arith.cmpi eq, %arg0, %c0_i32 : i32
    %7 = arith.extui %6 : i1 to i32
    %c0_i32_9 = arith.constant 0 : i32
    %8 = arith.cmpi ne, %7, %c0_i32_9 : i32
    scf.if %8 {
      %c0_175 = arith.constant 0 : index
      %c0_176 = arith.constant 0 : index
      %343 = vector.load %arg1[%c0_175, %c0_176] : memref<128x128xbf16, #tpu.memory_space<vmem>>, vector<128x128xbf16>
      %c0_177 = arith.constant 0 : index
      %c0_178 = arith.constant 0 : index
      %344 = vector.load %arg4[%c0_177, %c0_178] : memref<128x512xbf16, #tpu.memory_space<vmem>>, vector<128x512xbf16>
      %cst_179 = arith.constant dense<0.000000e+00> : vector<128x512xf32>
      %345 = tpu.matmul %343, %344, %cst_179 {dimension_numbers = #tpu.dot_dimension_numbers<[1], [0], [0], [1], [0, 0, 1, 1], [], []>} : vector<128x128xbf16>, vector<128x512xbf16>, vector<128x512xf32> -> vector<128x512xf32>
      %c0_180 = arith.constant 0 : index
      %c0_181 = arith.constant 0 : index
      %c0_182 = arith.constant 0 : index
      %346 = vector.load %arg7[%c0_180, %c0_181, %c0_182] : memref<1x1x512xf32, #tpu.memory_space<vmem>>, vector<1x1x512xf32>
      %347 = vector.shape_cast %346 : vector<1x1x512xf32> to vector<1x512xf32>
      %348 = vector.broadcast %347 : vector<1x512xf32> to vector<128x512xf32>
      %349 = arith.addf %345, %348 : vector<128x512xf32>
      %c0_183 = arith.constant 0 : index
      %c0_184 = arith.constant 0 : index
      %350 = vector.load %arg13[%c0_183, %c0_184] : memref<128x512xf32, #tpu.memory_space<vmem>>, vector<128x512xf32>
      tpu.vector_store %arg13[%c0_183, %c0_184], %349 {strides = array<i32>} : memref<128x512xf32, #tpu.memory_space<vmem>>, vector<128x512xf32>,
    } else {
    }
    %c0_i32_10 = arith.constant 0 : i32
    %9 = arith.cmpi sgt, %arg0, %c0_i32_10 : i32
    %10 = arith.extui %9 : i1 to i32
    %c0_i32_11 = arith.constant 0 : i32
    %11 = arith.cmpi ne, %10, %c0_i32_11 : i32
    scf.if %11 {
      %c0_175 = arith.constant 0 : index
      %c0_176 = arith.constant 0 : index
      %343 = vector.load %arg14[%c0_175, %c0_176] : memref<128x128xbf16, #tpu.memory_space<vmem>>, vector<128x128xbf16>
      %c0_177 = arith.constant 0 : index
      %c0_178 = arith.constant 0 : index
      %c0_179 = arith.constant 0 : index
      %344 = vector.load %arg5[%c0_177, %c0_178, %c0_179] : memref<1x128x512xbf16, #tpu.memory_space<vmem>>, vector<1x128x512xbf16>
      %345 = vector.shape_cast %344 : vector<1x128x512xbf16> to vector<128x512xbf16>
      %cst_180 = arith.constant dense<0.000000e+00> : vector<128x512xf32>
      %346 = tpu.matmul %343, %345, %cst_180 {dimension_numbers = #tpu.dot_dimension_numbers<[1], [0], [0], [1], [0, 0, 1, 1], [], []>} : vector<128x128xbf16>, vector<128x512xbf16>, vector<128x512xf32> -> vector<128x512xf32>
      %c0_181 = arith.constant 0 : index
      %c0_182 = arith.constant 0 : index
      %c0_183 = arith.constant 0 : index
      %347 = vector.load %arg7[%c0_181, %c0_182, %c0_183] : memref<1x1x512xf32, #tpu.memory_space<vmem>>, vector<1x1x512xf32>
      %348 = vector.shape_cast %347 : vector<1x1x512xf32> to vector<1x512xf32>
      %349 = vector.broadcast %348 : vector<1x512xf32> to vector<128x512xf32>
      %350 = arith.addf %346, %349 : vector<128x512xf32>
      %c0_184 = arith.constant 0 : index
      %c0_185 = arith.constant 0 : index
      %351 = vector.load %arg13[%c0_184, %c0_185] : memref<128x512xf32, #tpu.memory_space<vmem>>, vector<128x512xf32>
      tpu.vector_store %arg13[%c0_184, %c0_185], %350 {strides = array<i32>} : memref<128x512xf32, #tpu.memory_space<vmem>>, vector<128x512xf32>,
    } else {
    }
    %c0_i32_12 = arith.constant 0 : i32
    %c16_i32 = arith.constant 16 : i32
    %12 = arith.muli %c0_i32_12, %c16_i32 : i32
    %13 = tpu.assume_multiple %12, 16 : i32
    %c16_i32_13 = arith.constant 16 : i32
    %14 = arith.muli %c0_i32_12, %c16_i32_13 : i32
    %c0_i32_14 = arith.constant 0 : i32
    %15 = arith.addi %c0_i32_14, %14 : i32
    %16 = tpu.assume_multiple %15, 16 : i32
    %17 = arith.index_cast %13 : i32 to index
    %c0_15 = arith.constant 0 : index
    %18 = vector.load %arg13[%17, %c0_15] : memref<128x512xf32, #tpu.memory_space<vmem>>, vector<16x512xf32>
    %c0_16 = arith.constant 0 : index
    %c0_17 = arith.constant 0 : index
    %19 = vector.load %arg11[%c0_16, %c0_17] : memref<16x128xf32, #tpu.memory_space<vmem>>, vector<16x128xf32>
    %20 = arith.truncf %19 : vector<16x128xf32> to vector<16x128xbf16>
    %c0_18 = arith.constant 0 : index
    %c0_19 = arith.constant 0 : index
    %c0_20 = arith.constant 0 : index
    %21 = vector.load %arg6[%c0_18, %c0_19, %c0_20] : memref<1x128x512xbf16, #tpu.memory_space<vmem>>, vector<1x128x512xbf16>
    %22 = vector.shape_cast %21 : vector<1x128x512xbf16> to vector<128x512xbf16>
    %cst = arith.constant dense<0.000000e+00> : vector<16x512xf32>
    %23 = tpu.matmul %20, %22, %cst {dimension_numbers = #tpu.dot_dimension_numbers<[1], [0], [0], [1], [0, 0, 1, 1], [], []>} : vector<16x128xbf16>, vector<128x512xbf16>, vector<16x512xf32> -> vector<16x512xf32>
    %24 = arith.addf %18, %23 : vector<16x512xf32>
    %25 = vector.extract_strided_slice %24 {offsets = [0, 0], sizes = [16, 256], strides = [1, 1]} : vector<16x512xf32> to vector<16x256xf32>
    %26 = arith.negf %25 : vector<16x256xf32>
    %27 = math.exp %26 : vector<16x256xf32>
    %cst_21 = arith.constant 1.000000e+00 : f32
    %28 = vector.broadcast %cst_21 : f32 to vector<16x256xf32>
    %29 = arith.addf %28, %27 : vector<16x256xf32>
    %30 = arith.divf %28, %29 : vector<16x256xf32>
    %31 = vector.extract_strided_slice %30 {offsets = [0, 0], sizes = [16, 128], strides = [1, 1]} : vector<16x256xf32> to vector<16x128xf32>
    %32 = vector.extract_strided_slice %30 {offsets = [0, 128], sizes = [16, 128], strides = [1, 1]} : vector<16x256xf32> to vector<16x128xf32>
    %33 = vector.extract_strided_slice %24 {offsets = [0, 256], sizes = [16, 128], strides = [1, 1]} : vector<16x512xf32> to vector<16x128xf32>
    %34 = math.tanh %33 : vector<16x128xf32>
    %35 = vector.extract_strided_slice %24 {offsets = [0, 384], sizes = [16, 128], strides = [1, 1]} : vector<16x512xf32> to vector<16x128xf32>
    %36 = arith.negf %35 : vector<16x128xf32>
    %37 = math.exp %36 : vector<16x128xf32>
    %cst_22 = arith.constant 1.000000e+00 : f32
    %38 = vector.broadcast %cst_22 : f32 to vector<16x128xf32>
    %39 = arith.addf %38, %37 : vector<16x128xf32>
    %40 = arith.divf %38, %39 : vector<16x128xf32>
    %c0_23 = arith.constant 0 : index
    %c0_24 = arith.constant 0 : index
    %41 = vector.load %arg12[%c0_23, %c0_24] : memref<16x128xf32, #tpu.memory_space<vmem>>, vector<16x128xf32>
    %42 = arith.mulf %32, %41 : vector<16x128xf32>
    %43 = arith.mulf %31, %34 : vector<16x128xf32>
    %44 = arith.addf %42, %43 : vector<16x128xf32>
    %45 = math.tanh %44 : vector<16x128xf32>
    %46 = arith.mulf %40, %45 : vector<16x128xf32>
    %c0_25 = arith.constant 0 : index
    %c0_26 = arith.constant 0 : index
    %47 = vector.load %arg12[%c0_25, %c0_26] : memref<16x128xf32, #tpu.memory_space<vmem>>, vector<16x128xf32>
    tpu.vector_store %arg12[%c0_25, %c0_26], %44 {strides = array<i32>} : memref<16x128xf32, #tpu.memory_space<vmem>>, vector<16x128xf32>,
    %c0_27 = arith.constant 0 : index
    %c0_28 = arith.constant 0 : index
    %48 = vector.load %arg11[%c0_27, %c0_28] : memref<16x128xf32, #tpu.memory_space<vmem>>, vector<16x128xf32>
    tpu.vector_store %arg11[%c0_27, %c0_28], %46 {strides = array<i32>} : memref<16x128xf32, #tpu.memory_space<vmem>>, vector<16x128xf32>,
    %49 = arith.truncf %46 : vector<16x128xf32> to vector<16x128xbf16>
    %50 = arith.index_cast %16 : i32 to index
    %c0_29 = arith.constant 0 : index
    %51 = vector.load %arg14[%50, %c0_29] : memref<128x128xbf16, #tpu.memory_space<vmem>>, vector<16x128xbf16>
    tpu.vector_store %arg14[%50, %c0_29], %49 {strides = array<i32>} : memref<128x128xbf16, #tpu.memory_space<vmem>>, vector<16x128xbf16>,
    %c1_i32 = arith.constant 1 : i32
    %c16_i32_30 = arith.constant 16 : i32
    %52 = arith.muli %c1_i32, %c16_i32_30 : i32
    %53 = tpu.assume_multiple %52, 16 : i32
    %c16_i32_31 = arith.constant 16 : i32
    %54 = arith.muli %c1_i32, %c16_i32_31 : i32
    %c0_i32_32 = arith.constant 0 : i32
    %55 = arith.addi %c0_i32_32, %54 : i32
    %56 = tpu.assume_multiple %55, 16 : i32
    %57 = arith.index_cast %53 : i32 to index
    %c0_33 = arith.constant 0 : index
    %58 = vector.load %arg13[%57, %c0_33] : memref<128x512xf32, #tpu.memory_space<vmem>>, vector<16x512xf32>
    %c0_34 = arith.constant 0 : index
    %c0_35 = arith.constant 0 : index
    %59 = vector.load %arg11[%c0_34, %c0_35] : memref<16x128xf32, #tpu.memory_space<vmem>>, vector<16x128xf32>
    %60 = arith.truncf %59 : vector<16x128xf32> to vector<16x128xbf16>
    %c0_36 = arith.constant 0 : index
    %c0_37 = arith.constant 0 : index
    %c0_38 = arith.constant 0 : index
    %61 = vector.load %arg6[%c0_36, %c0_37, %c0_38] : memref<1x128x512xbf16, #tpu.memory_space<vmem>>, vector<1x128x512xbf16>
    %62 = vector.shape_cast %61 : vector<1x128x512xbf16> to vector<128x512xbf16>
    %cst_39 = arith.constant dense<0.000000e+00> : vector<16x512xf32>
    %63 = tpu.matmul %60, %62, %cst_39 {dimension_numbers = #tpu.dot_dimension_numbers<[1], [0], [0], [1], [0, 0, 1, 1], [], []>} : vector<16x128xbf16>, vector<128x512xbf16>, vector<16x512xf32> -> vector<16x512xf32>
    %64 = arith.addf %58, %63 : vector<16x512xf32>
    %65 = vector.extract_strided_slice %64 {offsets = [0, 0], sizes = [16, 256], strides = [1, 1]} : vector<16x512xf32> to vector<16x256xf32>
    %66 = arith.negf %65 : vector<16x256xf32>
    %67 = math.exp %66 : vector<16x256xf32>
    %cst_40 = arith.constant 1.000000e+00 : f32
    %68 = vector.broadcast %cst_40 : f32 to vector<16x256xf32>
    %69 = arith.addf %68, %67 : vector<16x256xf32>
    %70 = arith.divf %68, %69 : vector<16x256xf32>
    %71 = vector.extract_strided_slice %70 {offsets = [0, 0], sizes = [16, 128], strides = [1, 1]} : vector<16x256xf32> to vector<16x128xf32>
    %72 = vector.extract_strided_slice %70 {offsets = [0, 128], sizes = [16, 128], strides = [1, 1]} : vector<16x256xf32> to vector<16x128xf32>
    %73 = vector.extract_strided_slice %64 {offsets = [0, 256], sizes = [16, 128], strides = [1, 1]} : vector<16x512xf32> to vector<16x128xf32>
    %74 = math.tanh %73 : vector<16x128xf32>
    %75 = vector.extract_strided_slice %64 {offsets = [0, 384], sizes = [16, 128], strides = [1, 1]} : vector<16x512xf32> to vector<16x128xf32>
    %76 = arith.negf %75 : vector<16x128xf32>
    %77 = math.exp %76 : vector<16x128xf32>
    %cst_41 = arith.constant 1.000000e+00 : f32
    %78 = vector.broadcast %cst_41 : f32 to vector<16x128xf32>
    %79 = arith.addf %78, %77 : vector<16x128xf32>
    %80 = arith.divf %78, %79 : vector<16x128xf32>
    %c0_42 = arith.constant 0 : index
    %c0_43 = arith.constant 0 : index
    %81 = vector.load %arg12[%c0_42, %c0_43] : memref<16x128xf32, #tpu.memory_space<vmem>>, vector<16x128xf32>
    %82 = arith.mulf %72, %81 : vector<16x128xf32>
    %83 = arith.mulf %71, %74 : vector<16x128xf32>
    %84 = arith.addf %82, %83 : vector<16x128xf32>
    %85 = math.tanh %84 : vector<16x128xf32>
    %86 = arith.mulf %80, %85 : vector<16x128xf32>
    %c0_44 = arith.constant 0 : index
    %c0_45 = arith.constant 0 : index
    %87 = vector.load %arg12[%c0_44, %c0_45] : memref<16x128xf32, #tpu.memory_space<vmem>>, vector<16x128xf32>
    tpu.vector_store %arg12[%c0_44, %c0_45], %84 {strides = array<i32>} : memref<16x128xf32, #tpu.memory_space<vmem>>, vector<16x128xf32>,
    %c0_46 = arith.constant 0 : index
    %c0_47 = arith.constant 0 : index
    %88 = vector.load %arg11[%c0_46, %c0_47] : memref<16x128xf32, #tpu.memory_space<vmem>>, vector<16x128xf32>
    tpu.vector_store %arg11[%c0_46, %c0_47], %86 {strides = array<i32>} : memref<16x128xf32, #tpu.memory_space<vmem>>, vector<16x128xf32>,
    %89 = arith.truncf %86 : vector<16x128xf32> to vector<16x128xbf16>
    %90 = arith.index_cast %56 : i32 to index
    %c0_48 = arith.constant 0 : index
    %91 = vector.load %arg14[%90, %c0_48] : memref<128x128xbf16, #tpu.memory_space<vmem>>, vector<16x128xbf16>
    tpu.vector_store %arg14[%90, %c0_48], %89 {strides = array<i32>} : memref<128x128xbf16, #tpu.memory_space<vmem>>, vector<16x128xbf16>,
    %c2_i32 = arith.constant 2 : i32
    %c16_i32_49 = arith.constant 16 : i32
    %92 = arith.muli %c2_i32, %c16_i32_49 : i32
    %93 = tpu.assume_multiple %92, 16 : i32
    %c16_i32_50 = arith.constant 16 : i32
    %94 = arith.muli %c2_i32, %c16_i32_50 : i32
    %c0_i32_51 = arith.constant 0 : i32
    %95 = arith.addi %c0_i32_51, %94 : i32
    %96 = tpu.assume_multiple %95, 16 : i32
    %97 = arith.index_cast %93 : i32 to index
    %c0_52 = arith.constant 0 : index
    %98 = vector.load %arg13[%97, %c0_52] : memref<128x512xf32, #tpu.memory_space<vmem>>, vector<16x512xf32>
    %c0_53 = arith.constant 0 : index
    %c0_54 = arith.constant 0 : index
    %99 = vector.load %arg11[%c0_53, %c0_54] : memref<16x128xf32, #tpu.memory_space<vmem>>, vector<16x128xf32>
    %100 = arith.truncf %99 : vector<16x128xf32> to vector<16x128xbf16>
    %c0_55 = arith.constant 0 : index
    %c0_56 = arith.constant 0 : index
    %c0_57 = arith.constant 0 : index
    %101 = vector.load %arg6[%c0_55, %c0_56, %c0_57] : memref<1x128x512xbf16, #tpu.memory_space<vmem>>, vector<1x128x512xbf16>
    %102 = vector.shape_cast %101 : vector<1x128x512xbf16> to vector<128x512xbf16>
    %cst_58 = arith.constant dense<0.000000e+00> : vector<16x512xf32>
    %103 = tpu.matmul %100, %102, %cst_58 {dimension_numbers = #tpu.dot_dimension_numbers<[1], [0], [0], [1], [0, 0, 1, 1], [], []>} : vector<16x128xbf16>, vector<128x512xbf16>, vector<16x512xf32> -> vector<16x512xf32>
    %104 = arith.addf %98, %103 : vector<16x512xf32>
    %105 = vector.extract_strided_slice %104 {offsets = [0, 0], sizes = [16, 256], strides = [1, 1]} : vector<16x512xf32> to vector<16x256xf32>
    %106 = arith.negf %105 : vector<16x256xf32>
    %107 = math.exp %106 : vector<16x256xf32>
    %cst_59 = arith.constant 1.000000e+00 : f32
    %108 = vector.broadcast %cst_59 : f32 to vector<16x256xf32>
    %109 = arith.addf %108, %107 : vector<16x256xf32>
    %110 = arith.divf %108, %109 : vector<16x256xf32>
    %111 = vector.extract_strided_slice %110 {offsets = [0, 0], sizes = [16, 128], strides = [1, 1]} : vector<16x256xf32> to vector<16x128xf32>
    %112 = vector.extract_strided_slice %110 {offsets = [0, 128], sizes = [16, 128], strides = [1, 1]} : vector<16x256xf32> to vector<16x128xf32>
    %113 = vector.extract_strided_slice %104 {offsets = [0, 256], sizes = [16, 128], strides = [1, 1]} : vector<16x512xf32> to vector<16x128xf32>
    %114 = math.tanh %113 : vector<16x128xf32>
    %115 = vector.extract_strided_slice %104 {offsets = [0, 384], sizes = [16, 128], strides = [1, 1]} : vector<16x512xf32> to vector<16x128xf32>
    %116 = arith.negf %115 : vector<16x128xf32>
    %117 = math.exp %116 : vector<16x128xf32>
    %cst_60 = arith.constant 1.000000e+00 : f32
    %118 = vector.broadcast %cst_60 : f32 to vector<16x128xf32>
    %119 = arith.addf %118, %117 : vector<16x128xf32>
    %120 = arith.divf %118, %119 : vector<16x128xf32>
    %c0_61 = arith.constant 0 : index
    %c0_62 = arith.constant 0 : index
    %121 = vector.load %arg12[%c0_61, %c0_62] : memref<16x128xf32, #tpu.memory_space<vmem>>, vector<16x128xf32>
    %122 = arith.mulf %112, %121 : vector<16x128xf32>
    %123 = arith.mulf %111, %114 : vector<16x128xf32>
    %124 = arith.addf %122, %123 : vector<16x128xf32>
    %125 = math.tanh %124 : vector<16x128xf32>
    %126 = arith.mulf %120, %125 : vector<16x128xf32>
    %c0_63 = arith.constant 0 : index
    %c0_64 = arith.constant 0 : index
    %127 = vector.load %arg12[%c0_63, %c0_64] : memref<16x128xf32, #tpu.memory_space<vmem>>, vector<16x128xf32>
    tpu.vector_store %arg12[%c0_63, %c0_64], %124 {strides = array<i32>} : memref<16x128xf32, #tpu.memory_space<vmem>>, vector<16x128xf32>,
    %c0_65 = arith.constant 0 : index
    %c0_66 = arith.constant 0 : index
    %128 = vector.load %arg11[%c0_65, %c0_66] : memref<16x128xf32, #tpu.memory_space<vmem>>, vector<16x128xf32>
    tpu.vector_store %arg11[%c0_65, %c0_66], %126 {strides = array<i32>} : memref<16x128xf32, #tpu.memory_space<vmem>>, vector<16x128xf32>,
    %129 = arith.truncf %126 : vector<16x128xf32> to vector<16x128xbf16>
    %130 = arith.index_cast %96 : i32 to index
    %c0_67 = arith.constant 0 : index
    %131 = vector.load %arg14[%130, %c0_67] : memref<128x128xbf16, #tpu.memory_space<vmem>>, vector<16x128xbf16>
    tpu.vector_store %arg14[%130, %c0_67], %129 {strides = array<i32>} : memref<128x128xbf16, #tpu.memory_space<vmem>>, vector<16x128xbf16>,
    %c3_i32 = arith.constant 3 : i32
    %c16_i32_68 = arith.constant 16 : i32
    %132 = arith.muli %c3_i32, %c16_i32_68 : i32
    %133 = tpu.assume_multiple %132, 16 : i32
    %c16_i32_69 = arith.constant 16 : i32
    %134 = arith.muli %c3_i32, %c16_i32_69 : i32
    %c0_i32_70 = arith.constant 0 : i32
    %135 = arith.addi %c0_i32_70, %134 : i32
    %136 = tpu.assume_multiple %135, 16 : i32
    %137 = arith.index_cast %133 : i32 to index
    %c0_71 = arith.constant 0 : index
    %138 = vector.load %arg13[%137, %c0_71] : memref<128x512xf32, #tpu.memory_space<vmem>>, vector<16x512xf32>
    %c0_72 = arith.constant 0 : index
    %c0_73 = arith.constant 0 : index
    %139 = vector.load %arg11[%c0_72, %c0_73] : memref<16x128xf32, #tpu.memory_space<vmem>>, vector<16x128xf32>
    %140 = arith.truncf %139 : vector<16x128xf32> to vector<16x128xbf16>
    %c0_74 = arith.constant 0 : index
    %c0_75 = arith.constant 0 : index
    %c0_76 = arith.constant 0 : index
    %141 = vector.load %arg6[%c0_74, %c0_75, %c0_76] : memref<1x128x512xbf16, #tpu.memory_space<vmem>>, vector<1x128x512xbf16>
    %142 = vector.shape_cast %141 : vector<1x128x512xbf16> to vector<128x512xbf16>
    %cst_77 = arith.constant dense<0.000000e+00> : vector<16x512xf32>
    %143 = tpu.matmul %140, %142, %cst_77 {dimension_numbers = #tpu.dot_dimension_numbers<[1], [0], [0], [1], [0, 0, 1, 1], [], []>} : vector<16x128xbf16>, vector<128x512xbf16>, vector<16x512xf32> -> vector<16x512xf32>
    %144 = arith.addf %138, %143 : vector<16x512xf32>
    %145 = vector.extract_strided_slice %144 {offsets = [0, 0], sizes = [16, 256], strides = [1, 1]} : vector<16x512xf32> to vector<16x256xf32>
    %146 = arith.negf %145 : vector<16x256xf32>
    %147 = math.exp %146 : vector<16x256xf32>
    %cst_78 = arith.constant 1.000000e+00 : f32
    %148 = vector.broadcast %cst_78 : f32 to vector<16x256xf32>
    %149 = arith.addf %148, %147 : vector<16x256xf32>
    %150 = arith.divf %148, %149 : vector<16x256xf32>
    %151 = vector.extract_strided_slice %150 {offsets = [0, 0], sizes = [16, 128], strides = [1, 1]} : vector<16x256xf32> to vector<16x128xf32>
    %152 = vector.extract_strided_slice %150 {offsets = [0, 128], sizes = [16, 128], strides = [1, 1]} : vector<16x256xf32> to vector<16x128xf32>
    %153 = vector.extract_strided_slice %144 {offsets = [0, 256], sizes = [16, 128], strides = [1, 1]} : vector<16x512xf32> to vector<16x128xf32>
    %154 = math.tanh %153 : vector<16x128xf32>
    %155 = vector.extract_strided_slice %144 {offsets = [0, 384], sizes = [16, 128], strides = [1, 1]} : vector<16x512xf32> to vector<16x128xf32>
    %156 = arith.negf %155 : vector<16x128xf32>
    %157 = math.exp %156 : vector<16x128xf32>
    %cst_79 = arith.constant 1.000000e+00 : f32
    %158 = vector.broadcast %cst_79 : f32 to vector<16x128xf32>
    %159 = arith.addf %158, %157 : vector<16x128xf32>
    %160 = arith.divf %158, %159 : vector<16x128xf32>
    %c0_80 = arith.constant 0 : index
    %c0_81 = arith.constant 0 : index
    %161 = vector.load %arg12[%c0_80, %c0_81] : memref<16x128xf32, #tpu.memory_space<vmem>>, vector<16x128xf32>
    %162 = arith.mulf %152, %161 : vector<16x128xf32>
    %163 = arith.mulf %151, %154 : vector<16x128xf32>
    %164 = arith.addf %162, %163 : vector<16x128xf32>
    %165 = math.tanh %164 : vector<16x128xf32>
    %166 = arith.mulf %160, %165 : vector<16x128xf32>
    %c0_82 = arith.constant 0 : index
    %c0_83 = arith.constant 0 : index
    %167 = vector.load %arg12[%c0_82, %c0_83] : memref<16x128xf32, #tpu.memory_space<vmem>>, vector<16x128xf32>
    tpu.vector_store %arg12[%c0_82, %c0_83], %164 {strides = array<i32>} : memref<16x128xf32, #tpu.memory_space<vmem>>, vector<16x128xf32>,
    %c0_84 = arith.constant 0 : index
    %c0_85 = arith.constant 0 : index
    %168 = vector.load %arg11[%c0_84, %c0_85] : memref<16x128xf32, #tpu.memory_space<vmem>>, vector<16x128xf32>
    tpu.vector_store %arg11[%c0_84, %c0_85], %166 {strides = array<i32>} : memref<16x128xf32, #tpu.memory_space<vmem>>, vector<16x128xf32>,
    %169 = arith.truncf %166 : vector<16x128xf32> to vector<16x128xbf16>
    %170 = arith.index_cast %136 : i32 to index
    %c0_86 = arith.constant 0 : index
    %171 = vector.load %arg14[%170, %c0_86] : memref<128x128xbf16, #tpu.memory_space<vmem>>, vector<16x128xbf16>
    tpu.vector_store %arg14[%170, %c0_86], %169 {strides = array<i32>} : memref<128x128xbf16, #tpu.memory_space<vmem>>, vector<16x128xbf16>,
    %c4_i32 = arith.constant 4 : i32
    %c16_i32_87 = arith.constant 16 : i32
    %172 = arith.muli %c4_i32, %c16_i32_87 : i32
    %173 = tpu.assume_multiple %172, 16 : i32
    %c16_i32_88 = arith.constant 16 : i32
    %174 = arith.muli %c4_i32, %c16_i32_88 : i32
    %c0_i32_89 = arith.constant 0 : i32
    %175 = arith.addi %c0_i32_89, %174 : i32
    %176 = tpu.assume_multiple %175, 16 : i32
    %177 = arith.index_cast %173 : i32 to index
    %c0_90 = arith.constant 0 : index
    %178 = vector.load %arg13[%177, %c0_90] : memref<128x512xf32, #tpu.memory_space<vmem>>, vector<16x512xf32>
    %c0_91 = arith.constant 0 : index
    %c0_92 = arith.constant 0 : index
    %179 = vector.load %arg11[%c0_91, %c0_92] : memref<16x128xf32, #tpu.memory_space<vmem>>, vector<16x128xf32>
    %180 = arith.truncf %179 : vector<16x128xf32> to vector<16x128xbf16>
    %c0_93 = arith.constant 0 : index
    %c0_94 = arith.constant 0 : index
    %c0_95 = arith.constant 0 : index
    %181 = vector.load %arg6[%c0_93, %c0_94, %c0_95] : memref<1x128x512xbf16, #tpu.memory_space<vmem>>, vector<1x128x512xbf16>
    %182 = vector.shape_cast %181 : vector<1x128x512xbf16> to vector<128x512xbf16>
    %cst_96 = arith.constant dense<0.000000e+00> : vector<16x512xf32>
    %183 = tpu.matmul %180, %182, %cst_96 {dimension_numbers = #tpu.dot_dimension_numbers<[1], [0], [0], [1], [0, 0, 1, 1], [], []>} : vector<16x128xbf16>, vector<128x512xbf16>, vector<16x512xf32> -> vector<16x512xf32>
    %184 = arith.addf %178, %183 : vector<16x512xf32>
    %185 = vector.extract_strided_slice %184 {offsets = [0, 0], sizes = [16, 256], strides = [1, 1]} : vector<16x512xf32> to vector<16x256xf32>
    %186 = arith.negf %185 : vector<16x256xf32>
    %187 = math.exp %186 : vector<16x256xf32>
    %cst_97 = arith.constant 1.000000e+00 : f32
    %188 = vector.broadcast %cst_97 : f32 to vector<16x256xf32>
    %189 = arith.addf %188, %187 : vector<16x256xf32>
    %190 = arith.divf %188, %189 : vector<16x256xf32>
    %191 = vector.extract_strided_slice %190 {offsets = [0, 0], sizes = [16, 128], strides = [1, 1]} : vector<16x256xf32> to vector<16x128xf32>
    %192 = vector.extract_strided_slice %190 {offsets = [0, 128], sizes = [16, 128], strides = [1, 1]} : vector<16x256xf32> to vector<16x128xf32>
    %193 = vector.extract_strided_slice %184 {offsets = [0, 256], sizes = [16, 128], strides = [1, 1]} : vector<16x512xf32> to vector<16x128xf32>
    %194 = math.tanh %193 : vector<16x128xf32>
    %195 = vector.extract_strided_slice %184 {offsets = [0, 384], sizes = [16, 128], strides = [1, 1]} : vector<16x512xf32> to vector<16x128xf32>
    %196 = arith.negf %195 : vector<16x128xf32>
    %197 = math.exp %196 : vector<16x128xf32>
    %cst_98 = arith.constant 1.000000e+00 : f32
    %198 = vector.broadcast %cst_98 : f32 to vector<16x128xf32>
    %199 = arith.addf %198, %197 : vector<16x128xf32>
    %200 = arith.divf %198, %199 : vector<16x128xf32>
    %c0_99 = arith.constant 0 : index
    %c0_100 = arith.constant 0 : index
    %201 = vector.load %arg12[%c0_99, %c0_100] : memref<16x128xf32, #tpu.memory_space<vmem>>, vector<16x128xf32>
    %202 = arith.mulf %192, %201 : vector<16x128xf32>
    %203 = arith.mulf %191, %194 : vector<16x128xf32>
    %204 = arith.addf %202, %203 : vector<16x128xf32>
    %205 = math.tanh %204 : vector<16x128xf32>
    %206 = arith.mulf %200, %205 : vector<16x128xf32>
    %c0_101 = arith.constant 0 : index
    %c0_102 = arith.constant 0 : index
    %207 = vector.load %arg12[%c0_101, %c0_102] : memref<16x128xf32, #tpu.memory_space<vmem>>, vector<16x128xf32>
    tpu.vector_store %arg12[%c0_101, %c0_102], %204 {strides = array<i32>} : memref<16x128xf32, #tpu.memory_space<vmem>>, vector<16x128xf32>,
    %c0_103 = arith.constant 0 : index
    %c0_104 = arith.constant 0 : index
    %208 = vector.load %arg11[%c0_103, %c0_104] : memref<16x128xf32, #tpu.memory_space<vmem>>, vector<16x128xf32>
    tpu.vector_store %arg11[%c0_103, %c0_104], %206 {strides = array<i32>} : memref<16x128xf32, #tpu.memory_space<vmem>>, vector<16x128xf32>,
    %209 = arith.truncf %206 : vector<16x128xf32> to vector<16x128xbf16>
    %210 = arith.index_cast %176 : i32 to index
    %c0_105 = arith.constant 0 : index
    %211 = vector.load %arg14[%210, %c0_105] : memref<128x128xbf16, #tpu.memory_space<vmem>>, vector<16x128xbf16>
    tpu.vector_store %arg14[%210, %c0_105], %209 {strides = array<i32>} : memref<128x128xbf16, #tpu.memory_space<vmem>>, vector<16x128xbf16>,
    %c5_i32 = arith.constant 5 : i32
    %c16_i32_106 = arith.constant 16 : i32
    %212 = arith.muli %c5_i32, %c16_i32_106 : i32
    %213 = tpu.assume_multiple %212, 16 : i32
    %c16_i32_107 = arith.constant 16 : i32
    %214 = arith.muli %c5_i32, %c16_i32_107 : i32
    %c0_i32_108 = arith.constant 0 : i32
    %215 = arith.addi %c0_i32_108, %214 : i32
    %216 = tpu.assume_multiple %215, 16 : i32
    %217 = arith.index_cast %213 : i32 to index
    %c0_109 = arith.constant 0 : index
    %218 = vector.load %arg13[%217, %c0_109] : memref<128x512xf32, #tpu.memory_space<vmem>>, vector<16x512xf32>
    %c0_110 = arith.constant 0 : index
    %c0_111 = arith.constant 0 : index
    %219 = vector.load %arg11[%c0_110, %c0_111] : memref<16x128xf32, #tpu.memory_space<vmem>>, vector<16x128xf32>
    %220 = arith.truncf %219 : vector<16x128xf32> to vector<16x128xbf16>
    %c0_112 = arith.constant 0 : index
    %c0_113 = arith.constant 0 : index
    %c0_114 = arith.constant 0 : index
    %221 = vector.load %arg6[%c0_112, %c0_113, %c0_114] : memref<1x128x512xbf16, #tpu.memory_space<vmem>>, vector<1x128x512xbf16>
    %222 = vector.shape_cast %221 : vector<1x128x512xbf16> to vector<128x512xbf16>
    %cst_115 = arith.constant dense<0.000000e+00> : vector<16x512xf32>
    %223 = tpu.matmul %220, %222, %cst_115 {dimension_numbers = #tpu.dot_dimension_numbers<[1], [0], [0], [1], [0, 0, 1, 1], [], []>} : vector<16x128xbf16>, vector<128x512xbf16>, vector<16x512xf32> -> vector<16x512xf32>
    %224 = arith.addf %218, %223 : vector<16x512xf32>
    %225 = vector.extract_strided_slice %224 {offsets = [0, 0], sizes = [16, 256], strides = [1, 1]} : vector<16x512xf32> to vector<16x256xf32>
    %226 = arith.negf %225 : vector<16x256xf32>
    %227 = math.exp %226 : vector<16x256xf32>
    %cst_116 = arith.constant 1.000000e+00 : f32
    %228 = vector.broadcast %cst_116 : f32 to vector<16x256xf32>
    %229 = arith.addf %228, %227 : vector<16x256xf32>
    %230 = arith.divf %228, %229 : vector<16x256xf32>
    %231 = vector.extract_strided_slice %230 {offsets = [0, 0], sizes = [16, 128], strides = [1, 1]} : vector<16x256xf32> to vector<16x128xf32>
    %232 = vector.extract_strided_slice %230 {offsets = [0, 128], sizes = [16, 128], strides = [1, 1]} : vector<16x256xf32> to vector<16x128xf32>
    %233 = vector.extract_strided_slice %224 {offsets = [0, 256], sizes = [16, 128], strides = [1, 1]} : vector<16x512xf32> to vector<16x128xf32>
    %234 = math.tanh %233 : vector<16x128xf32>
    %235 = vector.extract_strided_slice %224 {offsets = [0, 384], sizes = [16, 128], strides = [1, 1]} : vector<16x512xf32> to vector<16x128xf32>
    %236 = arith.negf %235 : vector<16x128xf32>
    %237 = math.exp %236 : vector<16x128xf32>
    %cst_117 = arith.constant 1.000000e+00 : f32
    %238 = vector.broadcast %cst_117 : f32 to vector<16x128xf32>
    %239 = arith.addf %238, %237 : vector<16x128xf32>
    %240 = arith.divf %238, %239 : vector<16x128xf32>
    %c0_118 = arith.constant 0 : index
    %c0_119 = arith.constant 0 : index
    %241 = vector.load %arg12[%c0_118, %c0_119] : memref<16x128xf32, #tpu.memory_space<vmem>>, vector<16x128xf32>
    %242 = arith.mulf %232, %241 : vector<16x128xf32>
    %243 = arith.mulf %231, %234 : vector<16x128xf32>
    %244 = arith.addf %242, %243 : vector<16x128xf32>
    %245 = math.tanh %244 : vector<16x128xf32>
    %246 = arith.mulf %240, %245 : vector<16x128xf32>
    %c0_120 = arith.constant 0 : index
    %c0_121 = arith.constant 0 : index
    %247 = vector.load %arg12[%c0_120, %c0_121] : memref<16x128xf32, #tpu.memory_space<vmem>>, vector<16x128xf32>
    tpu.vector_store %arg12[%c0_120, %c0_121], %244 {strides = array<i32>} : memref<16x128xf32, #tpu.memory_space<vmem>>, vector<16x128xf32>,
    %c0_122 = arith.constant 0 : index
    %c0_123 = arith.constant 0 : index
    %248 = vector.load %arg11[%c0_122, %c0_123] : memref<16x128xf32, #tpu.memory_space<vmem>>, vector<16x128xf32>
    tpu.vector_store %arg11[%c0_122, %c0_123], %246 {strides = array<i32>} : memref<16x128xf32, #tpu.memory_space<vmem>>, vector<16x128xf32>,
    %249 = arith.truncf %246 : vector<16x128xf32> to vector<16x128xbf16>
    %250 = arith.index_cast %216 : i32 to index
    %c0_124 = arith.constant 0 : index
    %251 = vector.load %arg14[%250, %c0_124] : memref<128x128xbf16, #tpu.memory_space<vmem>>, vector<16x128xbf16>
    tpu.vector_store %arg14[%250, %c0_124], %249 {strides = array<i32>} : memref<128x128xbf16, #tpu.memory_space<vmem>>, vector<16x128xbf16>,
    %c6_i32 = arith.constant 6 : i32
    %c16_i32_125 = arith.constant 16 : i32
    %252 = arith.muli %c6_i32, %c16_i32_125 : i32
    %253 = tpu.assume_multiple %252, 16 : i32
    %c16_i32_126 = arith.constant 16 : i32
    %254 = arith.muli %c6_i32, %c16_i32_126 : i32
    %c0_i32_127 = arith.constant 0 : i32
    %255 = arith.addi %c0_i32_127, %254 : i32
    %256 = tpu.assume_multiple %255, 16 : i32
    %257 = arith.index_cast %253 : i32 to index
    %c0_128 = arith.constant 0 : index
    %258 = vector.load %arg13[%257, %c0_128] : memref<128x512xf32, #tpu.memory_space<vmem>>, vector<16x512xf32>
    %c0_129 = arith.constant 0 : index
    %c0_130 = arith.constant 0 : index
    %259 = vector.load %arg11[%c0_129, %c0_130] : memref<16x128xf32, #tpu.memory_space<vmem>>, vector<16x128xf32>
    %260 = arith.truncf %259 : vector<16x128xf32> to vector<16x128xbf16>
    %c0_131 = arith.constant 0 : index
    %c0_132 = arith.constant 0 : index
    %c0_133 = arith.constant 0 : index
    %261 = vector.load %arg6[%c0_131, %c0_132, %c0_133] : memref<1x128x512xbf16, #tpu.memory_space<vmem>>, vector<1x128x512xbf16>
    %262 = vector.shape_cast %261 : vector<1x128x512xbf16> to vector<128x512xbf16>
    %cst_134 = arith.constant dense<0.000000e+00> : vector<16x512xf32>
    %263 = tpu.matmul %260, %262, %cst_134 {dimension_numbers = #tpu.dot_dimension_numbers<[1], [0], [0], [1], [0, 0, 1, 1], [], []>} : vector<16x128xbf16>, vector<128x512xbf16>, vector<16x512xf32> -> vector<16x512xf32>
    %264 = arith.addf %258, %263 : vector<16x512xf32>
    %265 = vector.extract_strided_slice %264 {offsets = [0, 0], sizes = [16, 256], strides = [1, 1]} : vector<16x512xf32> to vector<16x256xf32>
    %266 = arith.negf %265 : vector<16x256xf32>
    %267 = math.exp %266 : vector<16x256xf32>
    %cst_135 = arith.constant 1.000000e+00 : f32
    %268 = vector.broadcast %cst_135 : f32 to vector<16x256xf32>
    %269 = arith.addf %268, %267 : vector<16x256xf32>
    %270 = arith.divf %268, %269 : vector<16x256xf32>
    %271 = vector.extract_strided_slice %270 {offsets = [0, 0], sizes = [16, 128], strides = [1, 1]} : vector<16x256xf32> to vector<16x128xf32>
    %272 = vector.extract_strided_slice %270 {offsets = [0, 128], sizes = [16, 128], strides = [1, 1]} : vector<16x256xf32> to vector<16x128xf32>
    %273 = vector.extract_strided_slice %264 {offsets = [0, 256], sizes = [16, 128], strides = [1, 1]} : vector<16x512xf32> to vector<16x128xf32>
    %274 = math.tanh %273 : vector<16x128xf32>
    %275 = vector.extract_strided_slice %264 {offsets = [0, 384], sizes = [16, 128], strides = [1, 1]} : vector<16x512xf32> to vector<16x128xf32>
    %276 = arith.negf %275 : vector<16x128xf32>
    %277 = math.exp %276 : vector<16x128xf32>
    %cst_136 = arith.constant 1.000000e+00 : f32
    %278 = vector.broadcast %cst_136 : f32 to vector<16x128xf32>
    %279 = arith.addf %278, %277 : vector<16x128xf32>
    %280 = arith.divf %278, %279 : vector<16x128xf32>
    %c0_137 = arith.constant 0 : index
    %c0_138 = arith.constant 0 : index
    %281 = vector.load %arg12[%c0_137, %c0_138] : memref<16x128xf32, #tpu.memory_space<vmem>>, vector<16x128xf32>
    %282 = arith.mulf %272, %281 : vector<16x128xf32>
    %283 = arith.mulf %271, %274 : vector<16x128xf32>
    %284 = arith.addf %282, %283 : vector<16x128xf32>
    %285 = math.tanh %284 : vector<16x128xf32>
    %286 = arith.mulf %280, %285 : vector<16x128xf32>
    %c0_139 = arith.constant 0 : index
    %c0_140 = arith.constant 0 : index
    %287 = vector.load %arg12[%c0_139, %c0_140] : memref<16x128xf32, #tpu.memory_space<vmem>>, vector<16x128xf32>
    tpu.vector_store %arg12[%c0_139, %c0_140], %284 {strides = array<i32>} : memref<16x128xf32, #tpu.memory_space<vmem>>, vector<16x128xf32>,
    %c0_141 = arith.constant 0 : index
    %c0_142 = arith.constant 0 : index
    %288 = vector.load %arg11[%c0_141, %c0_142] : memref<16x128xf32, #tpu.memory_space<vmem>>, vector<16x128xf32>
    tpu.vector_store %arg11[%c0_141, %c0_142], %286 {strides = array<i32>} : memref<16x128xf32, #tpu.memory_space<vmem>>, vector<16x128xf32>,
    %289 = arith.truncf %286 : vector<16x128xf32> to vector<16x128xbf16>
    %290 = arith.index_cast %256 : i32 to index
    %c0_143 = arith.constant 0 : index
    %291 = vector.load %arg14[%290, %c0_143] : memref<128x128xbf16, #tpu.memory_space<vmem>>, vector<16x128xbf16>
    tpu.vector_store %arg14[%290, %c0_143], %289 {strides = array<i32>} : memref<128x128xbf16, #tpu.memory_space<vmem>>, vector<16x128xbf16>,
    %c7_i32 = arith.constant 7 : i32
    %c16_i32_144 = arith.constant 16 : i32
    %292 = arith.muli %c7_i32, %c16_i32_144 : i32
    %293 = tpu.assume_multiple %292, 16 : i32
    %c16_i32_145 = arith.constant 16 : i32
    %294 = arith.muli %c7_i32, %c16_i32_145 : i32
    %c0_i32_146 = arith.constant 0 : i32
    %295 = arith.addi %c0_i32_146, %294 : i32
    %296 = tpu.assume_multiple %295, 16 : i32
    %297 = arith.index_cast %293 : i32 to index
    %c0_147 = arith.constant 0 : index
    %298 = vector.load %arg13[%297, %c0_147] : memref<128x512xf32, #tpu.memory_space<vmem>>, vector<16x512xf32>
    %c0_148 = arith.constant 0 : index
    %c0_149 = arith.constant 0 : index
    %299 = vector.load %arg11[%c0_148, %c0_149] : memref<16x128xf32, #tpu.memory_space<vmem>>, vector<16x128xf32>
    %300 = arith.truncf %299 : vector<16x128xf32> to vector<16x128xbf16>
    %c0_150 = arith.constant 0 : index
    %c0_151 = arith.constant 0 : index
    %c0_152 = arith.constant 0 : index
    %301 = vector.load %arg6[%c0_150, %c0_151, %c0_152] : memref<1x128x512xbf16, #tpu.memory_space<vmem>>, vector<1x128x512xbf16>
    %302 = vector.shape_cast %301 : vector<1x128x512xbf16> to vector<128x512xbf16>
    %cst_153 = arith.constant dense<0.000000e+00> : vector<16x512xf32>
    %303 = tpu.matmul %300, %302, %cst_153 {dimension_numbers = #tpu.dot_dimension_numbers<[1], [0], [0], [1], [0, 0, 1, 1], [], []>} : vector<16x128xbf16>, vector<128x512xbf16>, vector<16x512xf32> -> vector<16x512xf32>
    %304 = arith.addf %298, %303 : vector<16x512xf32>
    %305 = vector.extract_strided_slice %304 {offsets = [0, 0], sizes = [16, 256], strides = [1, 1]} : vector<16x512xf32> to vector<16x256xf32>
    %306 = arith.negf %305 : vector<16x256xf32>
    %307 = math.exp %306 : vector<16x256xf32>
    %cst_154 = arith.constant 1.000000e+00 : f32
    %308 = vector.broadcast %cst_154 : f32 to vector<16x256xf32>
    %309 = arith.addf %308, %307 : vector<16x256xf32>
    %310 = arith.divf %308, %309 : vector<16x256xf32>
    %311 = vector.extract_strided_slice %310 {offsets = [0, 0], sizes = [16, 128], strides = [1, 1]} : vector<16x256xf32> to vector<16x128xf32>
    %312 = vector.extract_strided_slice %310 {offsets = [0, 128], sizes = [16, 128], strides = [1, 1]} : vector<16x256xf32> to vector<16x128xf32>
    %313 = vector.extract_strided_slice %304 {offsets = [0, 256], sizes = [16, 128], strides = [1, 1]} : vector<16x512xf32> to vector<16x128xf32>
    %314 = math.tanh %313 : vector<16x128xf32>
    %315 = vector.extract_strided_slice %304 {offsets = [0, 384], sizes = [16, 128], strides = [1, 1]} : vector<16x512xf32> to vector<16x128xf32>
    %316 = arith.negf %315 : vector<16x128xf32>
    %317 = math.exp %316 : vector<16x128xf32>
    %cst_155 = arith.constant 1.000000e+00 : f32
    %318 = vector.broadcast %cst_155 : f32 to vector<16x128xf32>
    %319 = arith.addf %318, %317 : vector<16x128xf32>
    %320 = arith.divf %318, %319 : vector<16x128xf32>
    %c0_156 = arith.constant 0 : index
    %c0_157 = arith.constant 0 : index
    %321 = vector.load %arg12[%c0_156, %c0_157] : memref<16x128xf32, #tpu.memory_space<vmem>>, vector<16x128xf32>
    %322 = arith.mulf %312, %321 : vector<16x128xf32>
    %323 = arith.mulf %311, %314 : vector<16x128xf32>
    %324 = arith.addf %322, %323 : vector<16x128xf32>
    %325 = math.tanh %324 : vector<16x128xf32>
    %326 = arith.mulf %320, %325 : vector<16x128xf32>
    %c0_158 = arith.constant 0 : index
    %c0_159 = arith.constant 0 : index
    %327 = vector.load %arg12[%c0_158, %c0_159] : memref<16x128xf32, #tpu.memory_space<vmem>>, vector<16x128xf32>
    tpu.vector_store %arg12[%c0_158, %c0_159], %324 {strides = array<i32>} : memref<16x128xf32, #tpu.memory_space<vmem>>, vector<16x128xf32>,
    %c0_160 = arith.constant 0 : index
    %c0_161 = arith.constant 0 : index
    %328 = vector.load %arg11[%c0_160, %c0_161] : memref<16x128xf32, #tpu.memory_space<vmem>>, vector<16x128xf32>
    tpu.vector_store %arg11[%c0_160, %c0_161], %326 {strides = array<i32>} : memref<16x128xf32, #tpu.memory_space<vmem>>, vector<16x128xf32>,
    %329 = arith.truncf %326 : vector<16x128xf32> to vector<16x128xbf16>
    %330 = arith.index_cast %296 : i32 to index
    %c0_162 = arith.constant 0 : index
    %331 = vector.load %arg14[%330, %c0_162] : memref<128x128xbf16, #tpu.memory_space<vmem>>, vector<16x128xbf16>
    tpu.vector_store %arg14[%330, %c0_162], %329 {strides = array<i32>} : memref<128x128xbf16, #tpu.memory_space<vmem>>, vector<16x128xbf16>,
    %c8_i32 = arith.constant 8 : i32
    %c0_163 = arith.constant 0 : index
    %c0_164 = arith.constant 0 : index
    %332 = vector.load %arg11[%c0_163, %c0_164] : memref<16x128xf32, #tpu.memory_space<vmem>>, vector<16x128xf32>
    %c0_165 = arith.constant 0 : index
    %c0_166 = arith.constant 0 : index
    %c0_167 = arith.constant 0 : index
    %333 = vector.load %arg9[%c0_165, %c0_166, %c0_167] : memref<1x16x128xf32, #tpu.memory_space<vmem>>, vector<1x16x128xf32>
    %334 = vector.shape_cast %333 : vector<1x16x128xf32> to vector<16x128xf32>
    %335 = vector.shape_cast %332 : vector<16x128xf32> to vector<1x16x128xf32>
    tpu.vector_store %arg9[%c0_165, %c0_166, %c0_167], %335 {strides = array<i32>} : memref<1x16x128xf32, #tpu.memory_space<vmem>>, vector<1x16x128xf32>,
    %c0_168 = arith.constant 0 : index
    %c0_169 = arith.constant 0 : index
    %336 = vector.load %arg12[%c0_168, %c0_169] : memref<16x128xf32, #tpu.memory_space<vmem>>, vector<16x128xf32>
    %c0_170 = arith.constant 0 : index
    %c0_171 = arith.constant 0 : index
    %c0_172 = arith.constant 0 : index
    %337 = vector.load %arg10[%c0_170, %c0_171, %c0_172] : memref<1x16x128xf32, #tpu.memory_space<vmem>>, vector<1x16x128xf32>
    %338 = vector.shape_cast %337 : vector<1x16x128xf32> to vector<16x128xf32>
    %339 = vector.shape_cast %336 : vector<16x128xf32> to vector<1x16x128xf32>
    tpu.vector_store %arg10[%c0_170, %c0_171, %c0_172], %339 {strides = array<i32>} : memref<1x16x128xf32, #tpu.memory_space<vmem>>, vector<1x16x128xf32>,
    %c1_i32_173 = arith.constant 1 : i32
    %340 = arith.cmpi eq, %arg0, %c1_i32_173 : i32
    %341 = arith.extui %340 : i1 to i32
    %c0_i32_174 = arith.constant 0 : i32
    %342 = arith.cmpi ne, %341, %c0_i32_174 : i32
    scf.if %342 {
      %c0_175 = arith.constant 0 : index
      %c0_176 = arith.constant 0 : index
      %343 = vector.load %arg14[%c0_175, %c0_176] : memref<128x128xbf16, #tpu.memory_space<vmem>>, vector<128x128xbf16>
      %c0_177 = arith.constant 0 : index
      %c0_178 = arith.constant 0 : index
      %344 = vector.load %arg8[%c0_177, %c0_178] : memref<128x128xbf16, #tpu.memory_space<vmem>>, vector<128x128xbf16>
      tpu.vector_store %arg8[%c0_177, %c0_178], %343 {strides = array<i32>} : memref<128x128xbf16, #tpu.memory_space<vmem>>, vector<128x128xbf16>,
    } else {
    }
    return
  }
  func.func @transform_0(%arg0: i32) -> (i32, i32) {
    %c0_i32 = arith.constant 0 : i32
    %c0_i32_0 = arith.constant 0 : i32
    %c0_i32_1 = arith.constant 0 : i32
    return %c0_i32, %c0_i32_0 : i32, i32
  }
  func.func @transform_1(%arg0: i32) -> (i32, i32, i32) {
    %c0_i32 = arith.constant 0 : i32
    %c0_i32_0 = arith.constant 0 : i32
    %c0_i32_1 = arith.constant 0 : i32
    return %arg0, %c0_i32, %c0_i32_0 : i32, i32, i32
  }
  func.func @transform_2(%arg0: i32) -> (i32, i32, i32) {
    %c0_i32 = arith.constant 0 : i32
    %c0_i32_0 = arith.constant 0 : i32
    %c0_i32_1 = arith.constant 0 : i32
    return %arg0, %c0_i32, %c0_i32_0 : i32, i32, i32
  }
  func.func @transform_3(%arg0: i32) -> (i32, i32) {
    %c0_i32 = arith.constant 0 : i32
    %c0_i32_0 = arith.constant 0 : i32
    %c0_i32_1 = arith.constant 0 : i32
    return %c0_i32, %c0_i32_0 : i32, i32
  }
  func.func @transform_4(%arg0: i32) -> (i32, i32, i32) {
    %c0_i32 = arith.constant 0 : i32
    %c0_i32_0 = arith.constant 0 : i32
    %c0_i32_1 = arith.constant 0 : i32
    return %arg0, %c0_i32, %c0_i32_0 : i32, i32, i32
  }
  func.func @transform_5(%arg0: i32) -> (i32, i32, i32) {
    %c0_i32 = arith.constant 0 : i32
    %c0_i32_0 = arith.constant 0 : i32
    %c0_i32_1 = arith.constant 0 : i32
    return %arg0, %c0_i32, %c0_i32_0 : i32, i32, i32
  }
  func.func @transform_6(%arg0: i32) -> (i32, i32, i32) {
    %c0_i32 = arith.constant 0 : i32
    %c0_i32_0 = arith.constant 0 : i32
    %c0_i32_1 = arith.constant 0 : i32
    return %arg0, %c0_i32, %c0_i32_0 : i32, i32, i32
  }
  func.func @transform_7(%arg0: i32) -> (i32, i32) {
    %c0_i32 = arith.constant 0 : i32
    %c0_i32_0 = arith.constant 0 : i32
    %c0_i32_1 = arith.constant 0 : i32
    return %c0_i32, %c0_i32_0 : i32, i32
  }
  func.func @transform_8(%arg0: i32) -> (i32, i32, i32) {
    %c0_i32 = arith.constant 0 : i32
    %c0_i32_0 = arith.constant 0 : i32
    %c0_i32_1 = arith.constant 0 : i32
    return %arg0, %c0_i32, %c0_i32_0 : i32, i32, i32
  }
  func.func @transform_9(%arg0: i32) -> (i32, i32, i32) {
    %c0_i32 = arith.constant 0 : i32
    %c0_i32_0 = arith.constant 0 : i32
    %c0_i32_1 = arith.constant 0 : i32
    return %arg0, %c0_i32, %c0_i32_0 : i32, i32, i32
  }
}

</mosaic_0001>

<llo_original>
// kernel: tpu_custom_call.1
$region0: #{tpu_custom_call.1}
  #allocation0 [shape = 'u32[]', space=smem, size = 0x4, offset = 0x4, fixed_abs, tag = 'smem constant byte address 0x4 - core index']
  #allocation1 [shape = 'u32[72,128]{1,0:T(1,128)}', space=vmem, size = 0x9000, scoped, tag = 'internal scratch']
  #allocation2 [shape = 'f32[16,128]{1,0:T(8,128)}', space=vmem, size = 0x2000, scoped, tag = 'scratch operand']
  #allocation3 [shape = 'f32[16,128]{1,0:T(8,128)}', space=vmem, size = 0x2000, scoped, tag = 'scratch operand']
  #allocation4 [shape = 'f32[128,512]{1,0:T(8,128)}', space=vmem, size = 0x40000, scoped, tag = 'scratch operand']
  #allocation5 [shape = 'bf16[128,128]{1,0:T(8,128)(2,1)}', space=vmem, size = 0x8000, scoped, tag = 'scratch operand']
  %s0 = inlined_call_operand.hbm [shape: bf16[128,128], index: 0, kind: input, shape index: {}]
  %s1 = inlined_call_operand.hbm [shape: f32[2,16,128], index: 1, kind: input, shape index: {}]
  %s2 = inlined_call_operand.hbm [shape: f32[2,16,128], index: 2, kind: input, shape index: {}]
  %s3 = inlined_call_operand.hbm [shape: bf16[128,512], index: 3, kind: input, shape index: {}]
  %s4 = inlined_call_operand.hbm [shape: bf16[2,128,512], index: 4, kind: input, shape index: {}]
  %s5 = inlined_call_operand.hbm [shape: bf16[2,128,512], index: 5, kind: input, shape index: {}]
  %s6 = inlined_call_operand.hbm [shape: f32[2,1,512], index: 6, kind: input, shape index: {}]
  %s7 = inlined_call_operand.hbm [shape: bf16[128,128], index: 7, kind: output, shape index: {0}]
  %s8 = inlined_call_operand.hbm [shape: f32[2,16,128], index: 8, kind: output, shape index: {1}]
  %s9 = inlined_call_operand.hbm [shape: f32[2,16,128], index: 9, kind: output, shape index: {2}]
  %10 = xla_tuple %s7, %s8, %s9
  %s11 = sld [smem:[#allocation0]]
  $region117: #{tpu_custom_call.1} parent=0
    _
  %s13 = ssub.s32 1, %s11
  %s14 = scalar_select 0, %s13, %s11
  $region1: #{tpu_custom_call.1} parent=0
    #allocation6 [shape = 'u8[32768]{0}', space=vmem, size = 0x8000, scoped, tag = 'input window, operand 0, single buffered']
    #allocation7 [shape = 's32[2]{0}', space=sflag, size = 0x8, scoped, tag = 'scoped memory for tpu_custom_call.1']
    #allocation8 [shape = 's32[2]{0}', space=sflag, size = 0x8, scoped, tag = 'scoped memory for tpu_custom_call.1']
    #allocation9 [shape = 'u8[16384]{0}', space=vmem, size = 0x4000, scoped, tag = 'input window, operand 1']
    #allocation10 [shape = 's32[2]{0}', space=sflag, size = 0x8, scoped, tag = 'scoped memory for tpu_custom_call.1']
    #allocation11 [shape = 'u8[16384]{0}', space=vmem, size = 0x4000, scoped, tag = 'input window, operand 2']
    #allocation12 [shape = 'u8[131072]{0}', space=vmem, size = 0x20000, scoped, tag = 'input window, operand 3, single buffered']
    #allocation13 [shape = 's32[1]{0}', space=sflag, size = 0x4, scoped, tag = 'scoped memory for tpu_custom_call.1']
    #allocation14 [shape = 'u8[262144]{0}', space=vmem, size = 0x40000, scoped, tag = 'input window, operand 4']
    #allocation15 [shape = 'u8[262144]{0}', space=vmem, size = 0x40000, scoped, tag = 'input window, operand 5']
    #allocation16 [shape = 'u8[4096]{0}', space=vmem, size = 0x1000, scoped, tag = 'input window, operand 6']
    #allocation17 [shape = 'u8[32768]{0}', space=vmem, size = 0x8000, scoped, tag = 'output window, operand 0, single buffered']
    #allocation18 [shape = 'u8[16384]{0}', space=vmem, size = 0x4000, scoped, tag = 'output window, operand 1']
    #allocation19 [shape = 's32[2]{0}', space=sflag, size = 0x8, scoped, tag = 'scoped memory for tpu_custom_call.1']
    #allocation20 [shape = 'u8[16384]{0}', space=vmem, size = 0x4000, scoped, tag = 'output window, operand 2']
    %15 = vsyncpa [#allocation7], 0
    %16 = vsyncpa [#allocation10], 0
    %s17 = scalar_lea.sflag [#allocation10], 1
    %18 = vsyncpa %s17, 0
    %19 = vsyncpa [#allocation13], 0
    %20 = vsyncpa [#allocation8], 0
    %21 = vsyncpa [#allocation19], 0
    %s22 = scalar_lea.sflag [#allocation19], 1
    %23 = vsyncpa %s22, 0
    loop: start=0, step=1, limit=4
    $region2: #{tpu_custom_call.1} parent=1 // loop_pre_header
      _
    $region3: #{tpu_custom_call.1} parent=1 // loop_header
      %s25 = sphi 0, %s29
      %p26 = scmp.ge.s32.totalorder %s25, 4
      %s33 = sphi 0, %s33
      %s35 = sphi 0, %s33
      %s36 = sphi 0, %s35
      %s50 = sphi 0, %s36
      %s56 = sphi 0, %s58
      %s59 = sphi 0, %s56
      %s60 = sphi 0, %s59
      %s76 = sphi 0, %s60
      %s82 = sphi 0, %s84
      %s85 = sphi 0, %s82
      %s86 = sphi 0, %s85
      %s102 = sphi 0, %s86
      %s106 = sphi 0, %s106
      %s108 = sphi 0, %s106
      %s109 = sphi 0, %s108
      %s123 = sphi 0, %s109
      %s129 = sphi 0, %s131
      %s132 = sphi 0, %s129
      %s133 = sphi 0, %s132
      %s149 = sphi 0, %s133
      %s155 = sphi 0, %s157
      %s158 = sphi 0, %s155
      %s159 = sphi 0, %s158
      %s175 = sphi 0, %s159
      %s181 = sphi 0, %s183
      %s184 = sphi 0, %s181
      %s185 = sphi 0, %s184
      %s201 = sphi 0, %s185
      %s205 = sphi 0, %s205
      %s207 = sphi 0, %s205
      %s208 = sphi 0, %s207
      %s222 = sphi 0, %s208
      %s228 = sphi 0, %s230
      %s231 = sphi 0, %s228
      %s232 = sphi 0, %s231
      %s248 = sphi 0, %s232
      %s254 = sphi 0, %s256
      %s257 = sphi 0, %s254
      %s258 = sphi 0, %s257
      %s274 = sphi 0, %s258
    $region4: #{tpu_custom_call.1} parent=1 // loop_header_branch
      %28 = sbr.rel (%p26) target = $region8
    $region5: #{tpu_custom_call.1} parent=1 // loop_body
      %s30 = ssub.s32 %s25, 1
      %s31 = ssub.s32 %s25, 2
      %s32 = sadd.s32 %s25, 1
      %s34 = sadd.s32 %s33, 1
      %p37 = scmp.eq.s32.totalorder %s25, 1
      %p38 = scmp.ne.s32.totalorder %s33, %s35
      %p39 = scmp.eq.s32.totalorder %s25, 0
      %p40 = por %p38, %p39
      %p41 = scmp.ne.s32.totalorder %s33, %s35
      %p42 = scmp.eq.s32.totalorder %s30, 1
      %p43 = por %p41, %p42
      %p44 = scmp.ne.s32.totalorder %s35, %s36
      %p45 = scmp.eq.s32.totalorder %s30, 0
      %p46 = por %p44, %p45
      %p47 = scmp.ne.s32.totalorder %s35, %s36
      %p48 = scmp.eq.s32.totalorder %s31, 1
      %p49 = por %p47, %p48
      %p51 = scmp.ne.s32.totalorder %s36, %s50
      %p52 = scmp.eq.s32.totalorder %s31, 0
      %p53 = por %p51, %p52
      %s54 = ssub.s32 %s25, %s32
      %p55 = scmp.eq.s32.totalorder %s54, 0
      %s57 = sadd.s32 %s56, 1
      %s58 = scalar_select %p55, %s56, %s57
      %p61 = pneg %p55
      %p62 = scmp.eq.s32.totalorder %s25, 1
      %p63 = por %p61, %p62
      %p64 = scmp.ne.s32.totalorder %s56, %s59
      %p65 = scmp.eq.s32.totalorder %s25, 0
      %p66 = por %p64, %p65
      %p67 = scmp.ne.s32.totalorder %s56, %s59
      %p68 = scmp.eq.s32.totalorder %s30, 1
      %p69 = por %p67, %p68
      %p70 = scmp.ne.s32.totalorder %s59, %s60
      %p71 = scmp.eq.s32.totalorder %s30, 0
      %p72 = por %p70, %p71
      %p73 = scmp.ne.s32.totalorder %s59, %s60
      %p74 = scmp.eq.s32.totalorder %s31, 1
      %p75 = por %p73, %p74
      %p77 = scmp.ne.s32.totalorder %s60, %s76
      %p78 = scmp.eq.s32.totalorder %s31, 0
      %p79 = por %p77, %p78
      %s80 = ssub.s32 %s25, %s32
      %p81 = scmp.eq.s32.totalorder %s80, 0
      %s83 = sadd.s32 %s82, 1
      %s84 = scalar_select %p81, %s82, %s83
      %p87 = pneg %p81
      %p88 = scmp.eq.s32.totalorder %s25, 1
      %p89 = por %p87, %p88
      %p90 = scmp.ne.s32.totalorder %s82, %s85
      %p91 = scmp.eq.s32.totalorder %s25, 0
      %p92 = por %p90, %p91
      %p93 = scmp.ne.s32.totalorder %s82, %s85
      %p94 = scmp.eq.s32.totalorder %s30, 1
      %p95 = por %p93, %p94
      %p96 = scmp.ne.s32.totalorder %s85, %s86
      %p97 = scmp.eq.s32.totalorder %s30, 0
      %p98 = por %p96, %p97
      %p99 = scmp.ne.s32.totalorder %s85, %s86
      %p100 = scmp.eq.s32.totalorder %s31, 1
      %p101 = por %p99, %p100
      %p103 = scmp.ne.s32.totalorder %s86, %s102
      %p104 = scmp.eq.s32.totalorder %s31, 0
      %p105 = por %p103, %p104
      %s107 = sadd.s32 %s106, 1
      %p110 = scmp.eq.s32.totalorder %s25, 1
      %p111 = scmp.ne.s32.totalorder %s106, %s108
      %p112 = scmp.eq.s32.totalorder %s25, 0
      %p113 = por %p111, %p112
      %p114 = scmp.ne.s32.totalorder %s106, %s108
      %p115 = scmp.eq.s32.totalorder %s30, 1
      %p116 = por %p114, %p115
      %p117 = scmp.ne.s32.totalorder %s108, %s109
      %p118 = scmp.eq.s32.totalorder %s30, 0
      %p119 = por %p117, %p118
      %p120 = scmp.ne.s32.totalorder %s108, %s109
      %p121 = scmp.eq.s32.totalorder %s31, 1
      %p122 = por %p120, %p121
      %p124 = scmp.ne.s32.totalorder %s109, %s123
      %p125 = scmp.eq.s32.totalorder %s31, 0
      %p126 = por %p124, %p125
      %s127 = ssub.s32 %s25, %s32
      %p128 = scmp.eq.s32.totalorder %s127, 0
      %s130 = sadd.s32 %s129, 1
      %s131 = scalar_select %p128, %s129, %s130
      %p134 = pneg %p128
      %p135 = scmp.eq.s32.totalorder %s25, 1
      %p136 = por %p134, %p135
      %p137 = scmp.ne.s32.totalorder %s129, %s132
      %p138 = scmp.eq.s32.totalorder %s25, 0
      %p139 = por %p137, %p138
      %p140 = scmp.ne.s32.totalorder %s129, %s132
      %p141 = scmp.eq.s32.totalorder %s30, 1
      %p142 = por %p140, %p141
      %p143 = scmp.ne.s32.totalorder %s132, %s133
      %p144 = scmp.eq.s32.totalorder %s30, 0
      %p145 = por %p143, %p144
      %p146 = scmp.ne.s32.totalorder %s132, %s133
      %p147 = scmp.eq.s32.totalorder %s31, 1
      %p148 = por %p146, %p147
      %p150 = scmp.ne.s32.totalorder %s133, %s149
      %p151 = scmp.eq.s32.totalorder %s31, 0
      %p152 = por %p150, %p151
      %s153 = ssub.s32 %s25, %s32
      %p154 = scmp.eq.s32.totalorder %s153, 0
      %s156 = sadd.s32 %s155, 1
      %s157 = scalar_select %p154, %s155, %s156
      %p160 = pneg %p154
      %p161 = scmp.eq.s32.totalorder %s25, 1
      %p162 = por %p160, %p161
      %p163 = scmp.ne.s32.totalorder %s155, %s158
      %p164 = scmp.eq.s32.totalorder %s25, 0
      %p165 = por %p163, %p164
      %p166 = scmp.ne.s32.totalorder %s155, %s158
      %p167 = scmp.eq.s32.totalorder %s30, 1
      %p168 = por %p166, %p167
      %p169 = scmp.ne.s32.totalorder %s158, %s159
      %p170 = scmp.eq.s32.totalorder %s30, 0
      %p171 = por %p169, %p170
      %p172 = scmp.ne.s32.totalorder %s158, %s159
      %p173 = scmp.eq.s32.totalorder %s31, 1
      %p174 = por %p172, %p173
      %p176 = scmp.ne.s32.totalorder %s159, %s175
      %p177 = scmp.eq.s32.totalorder %s31, 0
      %p178 = por %p176, %p177
      %s179 = ssub.s32 %s25, %s32
      %p180 = scmp.eq.s32.totalorder %s179, 0
      %s182 = sadd.s32 %s181, 1
      %s183 = scalar_select %p180, %s181, %s182
      %p186 = pneg %p180
      %p187 = scmp.eq.s32.totalorder %s25, 1
      %p188 = por %p186, %p187
      %p189 = scmp.ne.s32.totalorder %s181, %s184
      %p190 = scmp.eq.s32.totalorder %s25, 0
      %p191 = por %p189, %p190
      %p192 = scmp.ne.s32.totalorder %s181, %s184
      %p193 = scmp.eq.s32.totalorder %s30, 1
      %p194 = por %p192, %p193
      %p195 = scmp.ne.s32.totalorder %s184, %s185
      %p196 = scmp.eq.s32.totalorder %s30, 0
      %p197 = por %p195, %p196
      %p198 = scmp.ne.s32.totalorder %s184, %s185
      %p199 = scmp.eq.s32.totalorder %s31, 1
      %p200 = por %p198, %p199
      %p202 = scmp.ne.s32.totalorder %s185, %s201
      %p203 = scmp.eq.s32.totalorder %s31, 0
      %p204 = por %p202, %p203
      %s206 = sadd.s32 %s205, 1
      %p209 = scmp.eq.s32.totalorder %s25, 1
      %p210 = scmp.ne.s32.totalorder %s205, %s207
      %p211 = scmp.eq.s32.totalorder %s25, 0
      %p212 = por %p210, %p211
      %p213 = scmp.ne.s32.totalorder %s205, %s207
      %p214 = scmp.eq.s32.totalorder %s30, 1
      %p215 = por %p213, %p214
      %p216 = scmp.ne.s32.totalorder %s207, %s208
      %p217 = scmp.eq.s32.totalorder %s30, 0
      %p218 = por %p216, %p217
      %p219 = scmp.ne.s32.totalorder %s207, %s208
      %p220 = scmp.eq.s32.totalorder %s31, 1
      %p221 = por %p219, %p220
      %p223 = scmp.ne.s32.totalorder %s208, %s222
      %p224 = scmp.eq.s32.totalorder %s31, 0
      %p225 = por %p223, %p224
      %s226 = ssub.s32 %s25, %s32
      %p227 = scmp.eq.s32.totalorder %s226, 0
      %s229 = sadd.s32 %s228, 1
      %s230 = scalar_select %p227, %s228, %s229
      %p233 = pneg %p227
      %p234 = scmp.eq.s32.totalorder %s25, 1
      %p235 = por %p233, %p234
      %p236 = scmp.ne.s32.totalorder %s228, %s231
      %p237 = scmp.eq.s32.totalorder %s25, 0
      %p238 = por %p236, %p237
      %p239 = scmp.ne.s32.totalorder %s228, %s231
      %p240 = scmp.eq.s32.totalorder %s30, 1
      %p241 = por %p239, %p240
      %p242 = scmp.ne.s32.totalorder %s231, %s232
      %p243 = scmp.eq.s32.totalorder %s30, 0
      %p244 = por %p242, %p243
      %p245 = scmp.ne.s32.totalorder %s231, %s232
      %p246 = scmp.eq.s32.totalorder %s31, 1
      %p247 = por %p245, %p246
      %p249 = scmp.ne.s32.totalorder %s232, %s248
      %p250 = scmp.eq.s32.totalorder %s31, 0
      %p251 = por %p249, %p250
      %s252 = ssub.s32 %s25, %s32
      %p253 = scmp.eq.s32.totalorder %s252, 0
      %s255 = sadd.s32 %s254, 1
      %s256 = scalar_select %p253, %s254, %s255
      %p259 = pneg %p253
      %p260 = scmp.eq.s32.totalorder %s25, 1
      %p261 = por %p259, %p260
      %p262 = scmp.ne.s32.totalorder %s254, %s257
      %p263 = scmp.eq.s32.totalorder %s25, 0
      %p264 = por %p262, %p263
      %p265 = scmp.ne.s32.totalorder %s254, %s257
      %p266 = scmp.eq.s32.totalorder %s30, 1
      %p267 = por %p265, %p266
      %p268 = scmp.ne.s32.totalorder %s257, %s258
      %p269 = scmp.eq.s32.totalorder %s30, 0
      %p270 = por %p268, %p269
      %p271 = scmp.ne.s32.totalorder %s257, %s258
      %p272 = scmp.eq.s32.totalorder %s31, 1
      %p273 = por %p271, %p272
      %p275 = scmp.ne.s32.totalorder %s258, %s274
      %p276 = scmp.eq.s32.totalorder %s31, 0
      %p277 = por %p275, %p276
      %p278 = scmp.le.s32.totalorder 1, %s25
      %p279 = scmp.lt.s32.totalorder %s25, 3
      %p280 = pnand %p278, %p279
      %p281 = pneg %p280
      // Predicated region
      $region9: #{tpu_custom_call.1} parent=5 // pred_check
        _
      $region10: #{tpu_custom_call.1} parent=5 // pred_check_branch
        %283 = sbr.rel (%p280) target = $region12
      $region11: #{tpu_custom_call.1} parent=5 // pred_region
        %s284 = ssub.s32 %s25, 1
        // Predicated region
        $region13: #{tpu_custom_call.1} parent=11 // pred_check
          %p285 = pneg %p46
        $region14: #{tpu_custom_call.1} parent=11 // pred_check_branch
          %287 = sbr.rel (%p285) target = $region16
        $region15: #{tpu_custom_call.1} parent=11 // pred_region
          %289 = vsyncadd [#allocation7], 0
          %s290 = sshll.u32 %s0, 4
          %s291 = int_to_ptr.hbm [resolvable:$true] %s290
          %s292 = sshll.u32 [#allocation6], 4
          %s293 = int_to_ptr.vmem [resolvable:$true] %s292
          %298 = dma.hbm_to_vmem [thread:$0]  %s291, 1024, %s293, [#allocation7], 64, 64, 4
        $region16: #{tpu_custom_call.1} parent=11 // pred_fallthru
          _
        // Predicated region
        $region17: #{tpu_custom_call.1} parent=11 // pred_check
          %p299 = pneg %p119
        $region18: #{tpu_custom_call.1} parent=11 // pred_check_branch
          %301 = sbr.rel (%p299) target = $region20
        $region19: #{tpu_custom_call.1} parent=11 // pred_region
          %303 = vsyncadd [#allocation13], 0
          %s304 = sshll.u32 %s3, 4
          %s305 = int_to_ptr.hbm [resolvable:$true] %s304
          %s306 = sshll.u32 [#allocation12], 4
          %s307 = int_to_ptr.vmem [resolvable:$true] %s306
          %312 = dma.hbm_to_vmem [thread:$0]  %s305, 4096, %s307, [#allocation13], 256, 256, 16
        $region20: #{tpu_custom_call.1} parent=11 // pred_fallthru
          _
      $region12: #{tpu_custom_call.1} parent=5 // pred_fallthru
        _
      %p313 = scmp.lt.s32.totalorder %s25, 2
      // Predicated region
      $region21: #{tpu_custom_call.1} parent=5 // pred_check
        %p314 = pneg %p313
      $region22: #{tpu_custom_call.1} parent=5 // pred_check_branch
        %316 = sbr.rel (%p314) target = $region24
      $region23: #{tpu_custom_call.1} parent=5 // pred_region
        // Predicated region
        $region25: #{tpu_custom_call.1} parent=23 // pred_check
          %p317 = pneg %p66
        $region26: #{tpu_custom_call.1} parent=23 // pred_check_branch
          %319 = sbr.rel (%p317) target = $region28
        $region27: #{tpu_custom_call.1} parent=23 // pred_region
          %s320 = sand.u32 %s25, 1
          %s321 = scalar_lea.sflag [#allocation10], %s320
          %s322 = sand.u32 %s56, 1
          %s323 = smul.addr %s322, 16
          %s324 = scalar_lea.vmem [#allocation9], %s323
          %326 = vsyncadd %s321, 0
          %s327 = smul.addr %s25, 2
          %s328 = smul.addr %s327, 8
          %s329 = scalar_lea.hbm %s1, %s328
          %s330 = sshll.u32 %s329, 4
          %s331 = int_to_ptr.hbm [resolvable:$true] %s330
          %s332 = sshll.u32 %s324, 4
          %s333 = int_to_ptr.vmem [resolvable:$true] %s332
          %338 = dma.hbm_to_vmem [thread:$0]  %s331, 256, %s333, %s321, 128, 128, 8
        $region28: #{tpu_custom_call.1} parent=23 // pred_fallthru
          _
        // Predicated region
        $region29: #{tpu_custom_call.1} parent=23 // pred_check
          %p339 = pneg %p92
        $region30: #{tpu_custom_call.1} parent=23 // pred_check_branch
          %341 = sbr.rel (%p339) target = $region32
        $region31: #{tpu_custom_call.1} parent=23 // pred_region
          %s342 = sand.u32 %s25, 1
          %s343 = scalar_lea.sflag [#allocation10], %s342
          %s344 = sand.u32 %s82, 1
          %s345 = smul.addr %s344, 16
          %s346 = scalar_lea.vmem [#allocation11], %s345
          %348 = vsyncadd %s343, 0
          %s349 = smul.addr %s25, 2
          %s350 = smul.addr %s349, 8
          %s351 = scalar_lea.hbm %s2, %s350
          %s352 = sshll.u32 %s351, 4
          %s353 = int_to_ptr.hbm [resolvable:$true] %s352
          %s354 = sshll.u32 %s346, 4
          %s355 = int_to_ptr.vmem [resolvable:$true] %s354
          %360 = dma.hbm_to_vmem [thread:$0]  %s353, 256, %s355, %s343, 128, 128, 8
        $region32: #{tpu_custom_call.1} parent=23 // pred_fallthru
          _
        // Predicated region
        $region33: #{tpu_custom_call.1} parent=23 // pred_check
          %p361 = pneg %p139
        $region34: #{tpu_custom_call.1} parent=23 // pred_check_branch
          %363 = sbr.rel (%p361) target = $region36
        $region35: #{tpu_custom_call.1} parent=23 // pred_region
          %s364 = sand.u32 %s25, 1
          %s365 = scalar_lea.sflag [#allocation7], %s364
          %s366 = sand.u32 %s129, 1
          %s367 = smul.addr %s366, 256
          %s368 = scalar_lea.vmem [#allocation14], %s367
          %370 = vsyncadd %s365, 0
          %s371 = smul.addr %s25, 64
          %s372 = smul.addr %s371, 4
          %s373 = scalar_lea.hbm %s4, %s372
          %s374 = sshll.u32 %s373, 4
          %s375 = int_to_ptr.hbm [resolvable:$true] %s374
          %s376 = sshll.u32 %s368, 4
          %s377 = int_to_ptr.vmem [resolvable:$true] %s376
          %382 = dma.hbm_to_vmem [thread:$0]  %s375, 4096, %s377, %s365, 256, 256, 16
        $region36: #{tpu_custom_call.1} parent=23 // pred_fallthru
          _
        // Predicated region
        $region37: #{tpu_custom_call.1} parent=23 // pred_check
          %p383 = pneg %p165
        $region38: #{tpu_custom_call.1} parent=23 // pred_check_branch
          %385 = sbr.rel (%p383) target = $region40
        $region39: #{tpu_custom_call.1} parent=23 // pred_region
          %s386 = sand.u32 %s25, 1
          %s387 = scalar_lea.sflag [#allocation10], %s386
          %s388 = sand.u32 %s155, 1
          %s389 = smul.addr %s388, 256
          %s390 = scalar_lea.vmem [#allocation15], %s389
          %392 = vsyncadd %s387, 0
          %s393 = smul.addr %s25, 64
          %s394 = smul.addr %s393, 4
          %s395 = scalar_lea.hbm %s5, %s394
          %s396 = sshll.u32 %s395, 4
          %s397 = int_to_ptr.hbm [resolvable:$true] %s396
          %s398 = sshll.u32 %s390, 4
          %s399 = int_to_ptr.vmem [resolvable:$true] %s398
          %404 = dma.hbm_to_vmem [thread:$0]  %s397, 4096, %s399, %s387, 256, 256, 16
        $region40: #{tpu_custom_call.1} parent=23 // pred_fallthru
          _
        // Predicated region
        $region41: #{tpu_custom_call.1} parent=23 // pred_check
          %p405 = pneg %p191
        $region42: #{tpu_custom_call.1} parent=23 // pred_check_branch
          %407 = sbr.rel (%p405) target = $region44
        $region43: #{tpu_custom_call.1} parent=23 // pred_region
          %s408 = sand.u32 %s25, 1
          %s409 = scalar_lea.sflag [#allocation7], %s408
          %s410 = sand.u32 %s181, 1
          %s411 = smul.addr %s410, 4
          %s412 = scalar_lea.vmem [#allocation16], %s411
          %414 = vsyncadd %s409, 0
          %s415 = smul.addr %s25, 4
          %s416 = scalar_lea.hbm %s6, %s415
          %s418 = sshll.u32 %s416, 4
          %s419 = int_to_ptr.hbm [resolvable:$true] %s418
          %s420 = sshll.u32 %s412, 4
          %s421 = int_to_ptr.vmem [resolvable:$true] %s420
          %423 = dma.hbm_to_vmem [thread:$0]  %s419, 64, %s421, %s409
        $region44: #{tpu_custom_call.1} parent=23 // pred_fallthru
          _
      $region24: #{tpu_custom_call.1} parent=5 // pred_fallthru
        _
      %p424 = scmp.le.s32.totalorder 1, %s25
      %p425 = scmp.lt.s32.totalorder %s25, 3
      %p426 = pnand %p424, %p425
      %p427 = pneg %p426
      // Predicated region
      $region45: #{tpu_custom_call.1} parent=5 // pred_check
        _
      $region46: #{tpu_custom_call.1} parent=5 // pred_check_branch
        %429 = sbr.rel (%p426) target = $region48
      $region47: #{tpu_custom_call.1} parent=5 // pred_region
        %s430 = ssub.s32 %s25, 1
        // Predicated region
        $region49: #{tpu_custom_call.1} parent=47 // pred_check
          %p431 = pneg %p46
        $region50: #{tpu_custom_call.1} parent=47 // pred_check_branch
          %433 = sbr.rel (%p431) target = $region52
        $region51: #{tpu_custom_call.1} parent=47 // pred_region
          %435 = dma.done [#allocation7], 1024
        $region52: #{tpu_custom_call.1} parent=47 // pred_fallthru
          _
        %s436 = sand.u32 %s30, 1
        %s437 = scalar_lea.sflag [#allocation10], %s436
        %s438 = sand.u32 %s59, 1
        %s439 = smul.addr %s438, 16
        %s440 = scalar_lea.vmem [#allocation9], %s439
        // Predicated region
        $region53: #{tpu_custom_call.1} parent=47 // pred_check
          %p441 = pneg %p72
        $region54: #{tpu_custom_call.1} parent=47 // pred_check_branch
          %443 = sbr.rel (%p441) target = $region56
        $region55: #{tpu_custom_call.1} parent=47 // pred_region
          %445 = dma.done %s437, 256
        $region56: #{tpu_custom_call.1} parent=47 // pred_fallthru
          _
        %s446 = sand.u32 %s30, 1
        %s447 = scalar_lea.sflag [#allocation10], %s446
        %s448 = sand.u32 %s85, 1
        %s449 = smul.addr %s448, 16
        %s450 = scalar_lea.vmem [#allocation11], %s449
        // Predicated region
        $region57: #{tpu_custom_call.1} parent=47 // pred_check
          %p451 = pneg %p98
        $region58: #{tpu_custom_call.1} parent=47 // pred_check_branch
          %453 = sbr.rel (%p451) target = $region60
        $region59: #{tpu_custom_call.1} parent=47 // pred_region
          %455 = dma.done %s447, 256
        $region60: #{tpu_custom_call.1} parent=47 // pred_fallthru
          _
        // Predicated region
        $region61: #{tpu_custom_call.1} parent=47 // pred_check
          %p456 = pneg %p119
        $region62: #{tpu_custom_call.1} parent=47 // pred_check_branch
          %458 = sbr.rel (%p456) target = $region64
        $region63: #{tpu_custom_call.1} parent=47 // pred_region
          %460 = dma.done [#allocation13], 4096
        $region64: #{tpu_custom_call.1} parent=47 // pred_fallthru
          _
        %s461 = sand.u32 %s30, 1
        %s462 = scalar_lea.sflag [#allocation7], %s461
        %s463 = sand.u32 %s132, 1
        %s464 = smul.addr %s463, 256
        %s465 = scalar_lea.vmem [#allocation14], %s464
        // Predicated region
        $region65: #{tpu_custom_call.1} parent=47 // pred_check
          %p466 = pneg %p145
        $region66: #{tpu_custom_call.1} parent=47 // pred_check_branch
          %468 = sbr.rel (%p466) target = $region68
        $region67: #{tpu_custom_call.1} parent=47 // pred_region
          %470 = dma.done %s462, 4096
        $region68: #{tpu_custom_call.1} parent=47 // pred_fallthru
          _
        %s471 = sand.u32 %s30, 1
        %s472 = scalar_lea.sflag [#allocation10], %s471
        %s473 = sand.u32 %s158, 1
        %s474 = smul.addr %s473, 256
        %s475 = scalar_lea.vmem [#allocation15], %s474
        // Predicated region
        $region69: #{tpu_custom_call.1} parent=47 // pred_check
          %p476 = pneg %p171
        $region70: #{tpu_custom_call.1} parent=47 // pred_check_branch
          %478 = sbr.rel (%p476) target = $region72
        $region71: #{tpu_custom_call.1} parent=47 // pred_region
          %480 = dma.done %s472, 4096
        $region72: #{tpu_custom_call.1} parent=47 // pred_fallthru
          _
        %s481 = sand.u32 %s30, 1
        %s482 = scalar_lea.sflag [#allocation7], %s481
        %s483 = sand.u32 %s184, 1
        %s484 = smul.addr %s483, 4
        %s485 = scalar_lea.vmem [#allocation16], %s484
        // Predicated region
        $region73: #{tpu_custom_call.1} parent=47 // pred_check
          %p486 = pneg %p197
        $region74: #{tpu_custom_call.1} parent=47 // pred_check_branch
          %488 = sbr.rel (%p486) target = $region76
        $region75: #{tpu_custom_call.1} parent=47 // pred_region
          %490 = dma.done %s482, 64
        $region76: #{tpu_custom_call.1} parent=47 // pred_fallthru
          _
        %p491 = pneg %p46
        %p492 = pneg %p43
        %s493 = sand.u32 %s30, 1
        %s494 = scalar_lea.sflag [#allocation10], %s493
        %s495 = sand.u32 %s59, 1
        %s496 = smul.addr %s495, 16
        %s497 = scalar_lea.vmem [#allocation9], %s496
        %p498 = pneg %p72
        %p499 = pneg %p69
        %s500 = sand.u32 %s30, 1
        %s501 = scalar_lea.sflag [#allocation10], %s500
        %s502 = sand.u32 %s85, 1
        %s503 = smul.addr %s502, 16
        %s504 = scalar_lea.vmem [#allocation11], %s503
        %p505 = pneg %p98
        %p506 = pneg %p95
        %p507 = pneg %p119
        %p508 = pneg %p116
        %s509 = sand.u32 %s30, 1
        %s510 = scalar_lea.sflag [#allocation7], %s509
        %s511 = sand.u32 %s132, 1
        %s512 = smul.addr %s511, 256
        %s513 = scalar_lea.vmem [#allocation14], %s512
        %p514 = pneg %p145
        %p515 = pneg %p142
        %s516 = sand.u32 %s30, 1
        %s517 = scalar_lea.sflag [#allocation10], %s516
        %s518 = sand.u32 %s158, 1
        %s519 = smul.addr %s518, 256
        %s520 = scalar_lea.vmem [#allocation15], %s519
        %p521 = pneg %p171
        %p522 = pneg %p168
        %s523 = sand.u32 %s30, 1
        %s524 = scalar_lea.sflag [#allocation7], %s523
        %s525 = sand.u32 %s184, 1
        %s526 = smul.addr %s525, 4
        %s527 = scalar_lea.vmem [#allocation16], %s526
        %p528 = pneg %p197
        %p529 = pneg %p194
        %p530 = pneg %p218
        %p531 = pneg %p215
        %p532 = pneg %p244
        %p533 = pneg %p241
        %s534 = sand.u32 %s30, 1
        %s535 = scalar_lea.sflag [#allocation19], %s534
        %s536 = sand.u32 %s231, 1
        %s537 = smul.addr %s536, 16
        %s538 = scalar_lea.vmem [#allocation18], %s537
        %p539 = pneg %p270
        %p540 = pneg %p267
        %s541 = sand.u32 %s30, 1
        %s542 = scalar_lea.sflag [#allocation19], %s541
        %s543 = sand.u32 %s257, 1
        %s544 = smul.addr %s543, 16
        %s545 = scalar_lea.vmem [#allocation20], %s544
        %v546 = vld [vmem:[%s440] sm:$0xff]
        %v547 = vld [vmem:[%s440 + $0x8] sm:$0xff]
        %548 = vst [vmem:[#allocation2] sm:$0xff] %v546
        %549 = vst [vmem:[#allocation2 + $0x8] sm:$0xff] %v547
        %v550 = vld [vmem:[%s450] sm:$0xff]
        %v551 = vld [vmem:[%s450 + $0x8] sm:$0xff]
        %552 = vst [vmem:[#allocation3] sm:$0xff] %v550
        %553 = vst [vmem:[#allocation3 + $0x8] sm:$0xff] %v551
        %p554 = scmp.eq.s32.totalorder %s30, 0
        // Predicated region
        $region77: #{tpu_custom_call.1} parent=47 // pred_check
          %p555 = pneg %p554
        $region78: #{tpu_custom_call.1} parent=47 // pred_check_branch
          %557 = sbr.rel (%p555) target = $region80
        $region79: #{tpu_custom_call.1} parent=47 // pred_region
          %v558 = vld [vmem:[#allocation6] sm:$0xf]
          %v559 = vld [vmem:[#allocation6 + $0x4] sm:$0xf]
          %v560 = vld [vmem:[#allocation6 + $0x8] sm:$0xf]
          %v561 = vld [vmem:[#allocation6 + $0xc] sm:$0xf]
          %v562 = vld [vmem:[#allocation6 + $0x10] sm:$0xf]
          %v563 = vld [vmem:[#allocation6 + $0x14] sm:$0xf]
          %v564 = vld [vmem:[#allocation6 + $0x18] sm:$0xf]
          %v565 = vld [vmem:[#allocation6 + $0x1c] sm:$0xf]
          %v566 = vld [vmem:[#allocation6 + $0x20] sm:$0xf]
          %v567 = vld [vmem:[#allocation6 + $0x24] sm:$0xf]
          %v568 = vld [vmem:[#allocation6 + $0x28] sm:$0xf]
          %v569 = vld [vmem:[#allocation6 + $0x2c] sm:$0xf]
          %v570 = vld [vmem:[#allocation6 + $0x30] sm:$0xf]
          %v571 = vld [vmem:[#allocation6 + $0x34] sm:$0xf]
          %v572 = vld [vmem:[#allocation6 + $0x38] sm:$0xf]
          %v573 = vld [vmem:[#allocation6 + $0x3c] sm:$0xf]
          %v574 = vld [vmem:[#allocation12] sm:$0xff]
          %v575 = vld [vmem:[#allocation12 + $0x8] sm:$0xff]
          %v576 = vld [vmem:[#allocation12 + $0x10] sm:$0xff]
          %v577 = vld [vmem:[#allocation12 + $0x18] sm:$0xff]
          %v578 = vld [vmem:[#allocation12 + $0x20] sm:$0xff]
          %v579 = vld [vmem:[#allocation12 + $0x28] sm:$0xff]
          %v580 = vld [vmem:[#allocation12 + $0x30] sm:$0xff]
          %v581 = vld [vmem:[#allocation12 + $0x38] sm:$0xff]
          %v582 = vld [vmem:[#allocation12 + $0x40] sm:$0xff]
          %v583 = vld [vmem:[#allocation12 + $0x48] sm:$0xff]
          %v584 = vld [vmem:[#allocation12 + $0x50] sm:$0xff]
          %v585 = vld [vmem:[#allocation12 + $0x58] sm:$0xff]
          %v586 = vld [vmem:[#allocation12 + $0x60] sm:$0xff]
          %v587 = vld [vmem:[#allocation12 + $0x68] sm:$0xff]
          %v588 = vld [vmem:[#allocation12 + $0x70] sm:$0xff]
          %v589 = vld [vmem:[#allocation12 + $0x78] sm:$0xff]
          %v590 = vld [vmem:[#allocation12 + $0x80] sm:$0xff]
          %v591 = vld [vmem:[#allocation12 + $0x88] sm:$0xff]
          %v592 = vld [vmem:[#allocation12 + $0x90] sm:$0xff]
          %v593 = vld [vmem:[#allocation12 + $0x98] sm:$0xff]
          %v594 = vld [vmem:[#allocation12 + $0xa0] sm:$0xff]
          %v595 = vld [vmem:[#allocation12 + $0xa8] sm:$0xff]
          %v596 = vld [vmem:[#allocation12 + $0xb0] sm:$0xff]
          %v597 = vld [vmem:[#allocation12 + $0xb8] sm:$0xff]
          %v598 = vld [vmem:[#allocation12 + $0xc0] sm:$0xff]
          %v599 = vld [vmem:[#allocation12 + $0xc8] sm:$0xff]
          %v600 = vld [vmem:[#allocation12 + $0xd0] sm:$0xff]
          %v601 = vld [vmem:[#allocation12 + $0xd8] sm:$0xff]
          %v602 = vld [vmem:[#allocation12 + $0xe0] sm:$0xff]
          %v603 = vld [vmem:[#allocation12 + $0xe8] sm:$0xff]
          %v604 = vld [vmem:[#allocation12 + $0xf0] sm:$0xff]
          %v605 = vld [vmem:[#allocation12 + $0xf8] sm:$0xff]
          %v606 = vld [vmem:[%s485] sm:$0xf]
          %v608 = vperm.slane %v606, 0
          %v609 = vperm.slane %v606, 1
          %v610 = vperm.slane %v606, 2
          %v611 = vperm.slane %v606, 3
          %v632 = vunpack.c.l.b16 %v558
          %v633 = vunpack.c.l.b16 %v559
          %v634 = vunpack.c.l.b16 %v560
          %v635 = vunpack.c.l.b16 %v561
          %v636 = vunpack.c.l.b16 %v562
          %v637 = vunpack.c.l.b16 %v563
          %v638 = vunpack.c.l.b16 %v564
          %v639 = vunpack.c.l.b16 %v565
          %v640 = vunpack.c.l.b16 %v566
          %v641 = vunpack.c.l.b16 %v567
          %v642 = vunpack.c.l.b16 %v568
          %v643 = vunpack.c.l.b16 %v569
          %v644 = vunpack.c.l.b16 %v570
          %v645 = vunpack.c.l.b16 %v571
          %v646 = vunpack.c.l.b16 %v572
          %v647 = vunpack.c.l.b16 %v573
          %v648 = vpack.c.b16 %v633, %v632
          %v649 = vpack.c.b16 %v635, %v634
          %v650 = vpack.c.b16 %v637, %v636
          %v651 = vpack.c.b16 %v639, %v638
          %v652 = vpack.c.b16 %v641, %v640
          %v653 = vpack.c.b16 %v643, %v642
          %v654 = vpack.c.b16 %v645, %v644
          %v655 = vpack.c.b16 %v647, %v646
          %v696 = vunpack.c.l.b16 %v574
          %v697 = vunpack.c.h.b16 %v574
          %v698 = vunpack.c.l.b16 %v575
          %v699 = vunpack.c.h.b16 %v575
          %v700 = vunpack.c.l.b16 %v576
          %v701 = vunpack.c.h.b16 %v576
          %v702 = vunpack.c.l.b16 %v577
          %v703 = vunpack.c.h.b16 %v577
          %v704 = vunpack.c.l.b16 %v578
          %v705 = vunpack.c.h.b16 %v578
          %v706 = vunpack.c.l.b16 %v579
          %v707 = vunpack.c.h.b16 %v579
          %v708 = vunpack.c.l.b16 %v580
          %v709 = vunpack.c.h.b16 %v580
          %v710 = vunpack.c.l.b16 %v581
          %v711 = vunpack.c.h.b16 %v581
          %v712 = vunpack.c.l.b16 %v582
          %v713 = vunpack.c.h.b16 %v582
          %v714 = vunpack.c.l.b16 %v583
          %v715 = vunpack.c.h.b16 %v583
          %v716 = vunpack.c.l.b16 %v584
          %v717 = vunpack.c.h.b16 %v584
          %v718 = vunpack.c.l.b16 %v585
          %v719 = vunpack.c.h.b16 %v585
          %v720 = vunpack.c.l.b16 %v586
          %v721 = vunpack.c.h.b16 %v586
          %v722 = vunpack.c.l.b16 %v587
          %v723 = vunpack.c.h.b16 %v587
          %v724 = vunpack.c.l.b16 %v588
          %v725 = vunpack.c.h.b16 %v588
          %v726 = vunpack.c.l.b16 %v589
          %v727 = vunpack.c.h.b16 %v589
          %v728 = vunpack.c.l.b16 %v590
          %v729 = vunpack.c.h.b16 %v590
          %v730 = vunpack.c.l.b16 %v591
          %v731 = vunpack.c.h.b16 %v591
          %v732 = vunpack.c.l.b16 %v592
          %v733 = vunpack.c.h.b16 %v592
          %v734 = vunpack.c.l.b16 %v593
          %v735 = vunpack.c.h.b16 %v593
          %v736 = vunpack.c.l.b16 %v594
          %v737 = vunpack.c.h.b16 %v594
          %v738 = vunpack.c.l.b16 %v595
          %v739 = vunpack.c.h.b16 %v595
          %v740 = vunpack.c.l.b16 %v596
          %v741 = vunpack.c.h.b16 %v596
          %v742 = vunpack.c.l.b16 %v597
          %v743 = vunpack.c.h.b16 %v597
          %v744 = vunpack.c.l.b16 %v598
          %v745 = vunpack.c.h.b16 %v598
          %v746 = vunpack.c.l.b16 %v599
          %v747 = vunpack.c.h.b16 %v599
          %v748 = vunpack.c.l.b16 %v600
          %v749 = vunpack.c.h.b16 %v600
          %v750 = vunpack.c.l.b16 %v601
          %v751 = vunpack.c.h.b16 %v601
          %v752 = vunpack.c.l.b16 %v602
          %v753 = vunpack.c.h.b16 %v602
          %v754 = vunpack.c.l.b16 %v603
          %v755 = vunpack.c.h.b16 %v603
          %v756 = vunpack.c.l.b16 %v604
          %v757 = vunpack.c.h.b16 %v604
          %v758 = vunpack.c.l.b16 %v605
          %v759 = vunpack.c.h.b16 %v605
          %v760 = vpack.c.b16 %v700, %v696
          %v761 = vpack.c.b16 %v701, %v697
          %v762 = vpack.c.b16 %v702, %v698
          %v763 = vpack.c.b16 %v703, %v699
          %v764 = vpack.c.b16 %v708, %v704
          %v765 = vpack.c.b16 %v709, %v705
          %v766 = vpack.c.b16 %v710, %v706
          %v767 = vpack.c.b16 %v711, %v707
          %v768 = vpack.c.b16 %v716, %v712
          %v769 = vpack.c.b16 %v717, %v713
          %v770 = vpack.c.b16 %v718, %v714
          %v771 = vpack.c.b16 %v719, %v715
          %v772 = vpack.c.b16 %v724, %v720
          %v773 = vpack.c.b16 %v725, %v721
          %v774 = vpack.c.b16 %v726, %v722
          %v775 = vpack.c.b16 %v727, %v723
          %v776 = vpack.c.b16 %v732, %v728
          %v777 = vpack.c.b16 %v733, %v729
          %v778 = vpack.c.b16 %v734, %v730
          %v779 = vpack.c.b16 %v735, %v731
          %v780 = vpack.c.b16 %v740, %v736
          %v781 = vpack.c.b16 %v741, %v737
          %v782 = vpack.c.b16 %v742, %v738
          %v783 = vpack.c.b16 %v743, %v739
          %v784 = vpack.c.b16 %v748, %v744
          %v785 = vpack.c.b16 %v749, %v745
          %v786 = vpack.c.b16 %v750, %v746
          %v787 = vpack.c.b16 %v751, %v747
          %v788 = vpack.c.b16 %v756, %v752
          %v789 = vpack.c.b16 %v757, %v753
          %v790 = vpack.c.b16 %v758, %v754
          %v791 = vpack.c.b16 %v759, %v755
          %824 = vmatpush.bf16.msra.mxu0 %v788
          %825 = vmatpush.bf16.msra.mxu0 %v784
          %826 = vmatpush.bf16.msra.mxu0 %v780
          %827 = vmatpush.bf16.msra.mxu0 %v776
          %828 = vmatpush.bf16.msra.mxu0 %v772
          %829 = vmatpush.bf16.msra.mxu0 %v768
          %830 = vmatpush.bf16.msra.mxu0 %v764
          %831 = vmatpush.bf16.msra.mxu0 %v760
          %832 = vmatmul.bf16.gmra.mxu0 %v648
          %v833 = vpop.f32.mrf.mxu0
          %v834 = vadd.f32 %v608, %v833
          %v835 = vpop.f32.mrf.mxu0
          %v836 = vadd.f32 %v608, %v835
          %837 = vmatmul.bf16.gmra.mxu0 %v649
          %v838 = vpop.f32.mrf.mxu0
          %v839 = vadd.f32 %v608, %v838
          %v840 = vpop.f32.mrf.mxu0
          %v841 = vadd.f32 %v608, %v840
          %842 = vmatmul.bf16.gmra.mxu0 %v650
          %v843 = vpop.f32.mrf.mxu0
          %v844 = vadd.f32 %v608, %v843
          %v845 = vpop.f32.mrf.mxu0
          %v846 = vadd.f32 %v608, %v845
          %847 = vmatmul.bf16.gmra.mxu0 %v651
          %v848 = vpop.f32.mrf.mxu0
          %v849 = vadd.f32 %v608, %v848
          %v850 = vpop.f32.mrf.mxu0
          %v851 = vadd.f32 %v608, %v850
          %852 = vmatmul.bf16.gmra.mxu0 %v652
          %v853 = vpop.f32.mrf.mxu0
          %v854 = vadd.f32 %v608, %v853
          %v855 = vpop.f32.mrf.mxu0
          %v856 = vadd.f32 %v608, %v855
          %857 = vmatmul.bf16.gmra.mxu0 %v653
          %v858 = vpop.f32.mrf.mxu0
          %v859 = vadd.f32 %v608, %v858
          %v860 = vpop.f32.mrf.mxu0
          %v861 = vadd.f32 %v608, %v860
          %862 = vmatmul.bf16.gmra.mxu0 %v654
          %v863 = vpop.f32.mrf.mxu0
          %v864 = vadd.f32 %v608, %v863
          %v865 = vpop.f32.mrf.mxu0
          %v866 = vadd.f32 %v608, %v865
          %867 = vmatmul.bf16.gmra.mxu0 %v655
          %v868 = vpop.f32.mrf.mxu0
          %v869 = vadd.f32 %v608, %v868
          %v870 = vpop.f32.mrf.mxu0
          %v871 = vadd.f32 %v608, %v870
          %872 = vdwg.mxu0
          %873 = vmatpush.bf16.msra.mxu0 %v789
          %874 = vmatpush.bf16.msra.mxu0 %v785
          %875 = vmatpush.bf16.msra.mxu0 %v781
          %876 = vmatpush.bf16.msra.mxu0 %v777
          %877 = vmatpush.bf16.msra.mxu0 %v773
          %878 = vmatpush.bf16.msra.mxu0 %v769
          %879 = vmatpush.bf16.msra.mxu0 %v765
          %880 = vmatpush.bf16.msra.mxu0 %v761
          %881 = vmatmul.bf16.gmra.mxu0 %v648
          %v882 = vpop.f32.mrf.mxu0
          %v883 = vadd.f32 %v609, %v882
          %v884 = vpop.f32.mrf.mxu0
          %v885 = vadd.f32 %v609, %v884
          %886 = vmatmul.bf16.gmra.mxu0 %v649
          %v887 = vpop.f32.mrf.mxu0
          %v888 = vadd.f32 %v609, %v887
          %v889 = vpop.f32.mrf.mxu0
          %v890 = vadd.f32 %v609, %v889
          %891 = vmatmul.bf16.gmra.mxu0 %v650
          %v892 = vpop.f32.mrf.mxu0
          %v893 = vadd.f32 %v609, %v892
          %v894 = vpop.f32.mrf.mxu0
          %v895 = vadd.f32 %v609, %v894
          %896 = vmatmul.bf16.gmra.mxu0 %v651
          %v897 = vpop.f32.mrf.mxu0
          %v898 = vadd.f32 %v609, %v897
          %v899 = vpop.f32.mrf.mxu0
          %v900 = vadd.f32 %v609, %v899
          %901 = vmatmul.bf16.gmra.mxu0 %v652
          %v902 = vpop.f32.mrf.mxu0
          %v903 = vadd.f32 %v609, %v902
          %v904 = vpop.f32.mrf.mxu0
          %v905 = vadd.f32 %v609, %v904
          %906 = vmatmul.bf16.gmra.mxu0 %v653
          %v907 = vpop.f32.mrf.mxu0
          %v908 = vadd.f32 %v609, %v907
          %v909 = vpop.f32.mrf.mxu0
          %v910 = vadd.f32 %v609, %v909
          %911 = vmatmul.bf16.gmra.mxu0 %v654
          %v912 = vpop.f32.mrf.mxu0
          %v913 = vadd.f32 %v609, %v912
          %v914 = vpop.f32.mrf.mxu0
          %v915 = vadd.f32 %v609, %v914
          %916 = vmatmul.bf16.gmra.mxu0 %v655
          %v917 = vpop.f32.mrf.mxu0
          %v918 = vadd.f32 %v609, %v917
          %v919 = vpop.f32.mrf.mxu0
          %v920 = vadd.f32 %v609, %v919
          %921 = vdwg.mxu0
          %922 = vmatpush.bf16.msra.mxu0 %v790
          %923 = vmatpush.bf16.msra.mxu0 %v786
          %924 = vmatpush.bf16.msra.mxu0 %v782
          %925 = vmatpush.bf16.msra.mxu0 %v778
          %926 = vmatpush.bf16.msra.mxu0 %v774
          %927 = vmatpush.bf16.msra.mxu0 %v770
          %928 = vmatpush.bf16.msra.mxu0 %v766
          %929 = vmatpush.bf16.msra.mxu0 %v762
          %930 = vmatmul.bf16.gmra.mxu0 %v648
          %v931 = vpop.f32.mrf.mxu0
          %v932 = vadd.f32 %v610, %v931
          %v933 = vpop.f32.mrf.mxu0
          %v934 = vadd.f32 %v610, %v933
          %935 = vmatmul.bf16.gmra.mxu0 %v649
          %v936 = vpop.f32.mrf.mxu0
          %v937 = vadd.f32 %v610, %v936
          %v938 = vpop.f32.mrf.mxu0
          %v939 = vadd.f32 %v610, %v938
          %940 = vmatmul.bf16.gmra.mxu0 %v650
          %v941 = vpop.f32.mrf.mxu0
          %v942 = vadd.f32 %v610, %v941
          %v943 = vpop.f32.mrf.mxu0
          %v944 = vadd.f32 %v610, %v943
          %945 = vmatmul.bf16.gmra.mxu0 %v651
          %v946 = vpop.f32.mrf.mxu0
          %v947 = vadd.f32 %v610, %v946
          %v948 = vpop.f32.mrf.mxu0
          %v949 = vadd.f32 %v610, %v948
          %950 = vmatmul.bf16.gmra.mxu0 %v652
          %v951 = vpop.f32.mrf.mxu0
          %v952 = vadd.f32 %v610, %v951
          %v953 = vpop.f32.mrf.mxu0
          %v954 = vadd.f32 %v610, %v953
          %955 = vmatmul.bf16.gmra.mxu0 %v653
          %v956 = vpop.f32.mrf.mxu0
          %v957 = vadd.f32 %v610, %v956
          %v958 = vpop.f32.mrf.mxu0
          %v959 = vadd.f32 %v610, %v958
          %960 = vmatmul.bf16.gmra.mxu0 %v654
          %v961 = vpop.f32.mrf.mxu0
          %v962 = vadd.f32 %v610, %v961
          %v963 = vpop.f32.mrf.mxu0
          %v964 = vadd.f32 %v610, %v963
          %965 = vmatmul.bf16.gmra.mxu0 %v655
          %v966 = vpop.f32.mrf.mxu0
          %v967 = vadd.f32 %v610, %v966
          %v968 = vpop.f32.mrf.mxu0
          %v969 = vadd.f32 %v610, %v968
          %970 = vdwg.mxu0
          %971 = vmatpush.bf16.msra.mxu0 %v791
          %972 = vmatpush.bf16.msra.mxu0 %v787
          %973 = vmatpush.bf16.msra.mxu0 %v783
          %974 = vmatpush.bf16.msra.mxu0 %v779
          %975 = vmatpush.bf16.msra.mxu0 %v775
          %976 = vmatpush.bf16.msra.mxu0 %v771
          %977 = vmatpush.bf16.msra.mxu0 %v767
          %978 = vmatpush.bf16.msra.mxu0 %v763
          %979 = vmatmul.bf16.gmra.mxu0 %v648
          %v980 = vpop.f32.mrf.mxu0
          %v981 = vadd.f32 %v611, %v980
          %v982 = vpop.f32.mrf.mxu0
          %v983 = vadd.f32 %v611, %v982
          %984 = vmatmul.bf16.gmra.mxu0 %v649
          %v985 = vpop.f32.mrf.mxu0
          %v986 = vadd.f32 %v611, %v985
          %v987 = vpop.f32.mrf.mxu0
          %v988 = vadd.f32 %v611, %v987
          %989 = vmatmul.bf16.gmra.mxu0 %v650
          %v990 = vpop.f32.mrf.mxu0
          %v991 = vadd.f32 %v611, %v990
          %v992 = vpop.f32.mrf.mxu0
          %v993 = vadd.f32 %v611, %v992
          %994 = vmatmul.bf16.gmra.mxu0 %v651
          %v995 = vpop.f32.mrf.mxu0
          %v996 = vadd.f32 %v611, %v995
          %v997 = vpop.f32.mrf.mxu0
          %v998 = vadd.f32 %v611, %v997
          %999 = vmatmul.bf16.gmra.mxu0 %v652
          %v1000 = vpop.f32.mrf.mxu0
          %v1001 = vadd.f32 %v611, %v1000
          %v1002 = vpop.f32.mrf.mxu0
          %v1003 = vadd.f32 %v611, %v1002
          %1004 = vmatmul.bf16.gmra.mxu0 %v653
          %v1005 = vpop.f32.mrf.mxu0
          %v1006 = vadd.f32 %v611, %v1005
          %v1007 = vpop.f32.mrf.mxu0
          %v1008 = vadd.f32 %v611, %v1007
          %1009 = vmatmul.bf16.gmra.mxu0 %v654
          %v1010 = vpop.f32.mrf.mxu0
          %v1011 = vadd.f32 %v611, %v1010
          %v1012 = vpop.f32.mrf.mxu0
          %v1013 = vadd.f32 %v611, %v1012
          %1014 = vmatmul.bf16.gmra.mxu0 %v655
          %v1015 = vpop.f32.mrf.mxu0
          %v1016 = vadd.f32 %v611, %v1015
          %v1017 = vpop.f32.mrf.mxu0
          %v1018 = vadd.f32 %v611, %v1017
          %1019 = vdwg.mxu0
          %1020 = vst [vmem:[#allocation4] sm:$0xff] %v834
          %1021 = vst [vmem:[#allocation4 + $0x8] sm:$0xff] %v883
          %1022 = vst [vmem:[#allocation4 + $0x10] sm:$0xff] %v932
          %1023 = vst [vmem:[#allocation4 + $0x18] sm:$0xff] %v981
          %1024 = vst [vmem:[#allocation4 + $0x20] sm:$0xff] %v836
          %1025 = vst [vmem:[#allocation4 + $0x28] sm:$0xff] %v885
          %1026 = vst [vmem:[#allocation4 + $0x30] sm:$0xff] %v934
          %1027 = vst [vmem:[#allocation4 + $0x38] sm:$0xff] %v983
          %1028 = vst [vmem:[#allocation4 + $0x40] sm:$0xff] %v839
          %1029 = vst [vmem:[#allocation4 + $0x48] sm:$0xff] %v888
          %1030 = vst [vmem:[#allocation4 + $0x50] sm:$0xff] %v937
          %1031 = vst [vmem:[#allocation4 + $0x58] sm:$0xff] %v986
          %1032 = vst [vmem:[#allocation4 + $0x60] sm:$0xff] %v841
          %1033 = vst [vmem:[#allocation4 + $0x68] sm:$0xff] %v890
          %1034 = vst [vmem:[#allocation4 + $0x70] sm:$0xff] %v939
          %1035 = vst [vmem:[#allocation4 + $0x78] sm:$0xff] %v988
          %1036 = vst [vmem:[#allocation4 + $0x80] sm:$0xff] %v844
          %1037 = vst [vmem:[#allocation4 + $0x88] sm:$0xff] %v893
          %1038 = vst [vmem:[#allocation4 + $0x90] sm:$0xff] %v942
          %1039 = vst [vmem:[#allocation4 + $0x98] sm:$0xff] %v991
          %1040 = vst [vmem:[#allocation4 + $0xa0] sm:$0xff] %v846
          %1041 = vst [vmem:[#allocation4 + $0xa8] sm:$0xff] %v895
          %1042 = vst [vmem:[#allocation4 + $0xb0] sm:$0xff] %v944
          %1043 = vst [vmem:[#allocation4 + $0xb8] sm:$0xff] %v993
          %1044 = vst [vmem:[#allocation4 + $0xc0] sm:$0xff] %v849
          %1045 = vst [vmem:[#allocation4 + $0xc8] sm:$0xff] %v898
          %1046 = vst [vmem:[#allocation4 + $0xd0] sm:$0xff] %v947
          %1047 = vst [vmem:[#allocation4 + $0xd8] sm:$0xff] %v996
          %1048 = vst [vmem:[#allocation4 + $0xe0] sm:$0xff] %v851
          %1049 = vst [vmem:[#allocation4 + $0xe8] sm:$0xff] %v900
          %1050 = vst [vmem:[#allocation4 + $0xf0] sm:$0xff] %v949
          %1051 = vst [vmem:[#allocation4 + $0xf8] sm:$0xff] %v998
          %1052 = vst [vmem:[#allocation4 + $0x100] sm:$0xff] %v854
          %1053 = vst [vmem:[#allocation4 + $0x108] sm:$0xff] %v903
          %1054 = vst [vmem:[#allocation4 + $0x110] sm:$0xff] %v952
          %1055 = vst [vmem:[#allocation4 + $0x118] sm:$0xff] %v1001
          %1056 = vst [vmem:[#allocation4 + $0x120] sm:$0xff] %v856
          %1057 = vst [vmem:[#allocation4 + $0x128] sm:$0xff] %v905
          %1058 = vst [vmem:[#allocation4 + $0x130] sm:$0xff] %v954
          %1059 = vst [vmem:[#allocation4 + $0x138] sm:$0xff] %v1003
          %1060 = vst [vmem:[#allocation4 + $0x140] sm:$0xff] %v859
          %1061 = vst [vmem:[#allocation4 + $0x148] sm:$0xff] %v908
          %1062 = vst [vmem:[#allocation4 + $0x150] sm:$0xff] %v957
          %1063 = vst [vmem:[#allocation4 + $0x158] sm:$0xff] %v1006
          %1064 = vst [vmem:[#allocation4 + $0x160] sm:$0xff] %v861
          %1065 = vst [vmem:[#allocation4 + $0x168] sm:$0xff] %v910
          %1066 = vst [vmem:[#allocation4 + $0x170] sm:$0xff] %v959
          %1067 = vst [vmem:[#allocation4 + $0x178] sm:$0xff] %v1008
          %1068 = vst [vmem:[#allocation4 + $0x180] sm:$0xff] %v864
          %1069 = vst [vmem:[#allocation4 + $0x188] sm:$0xff] %v913
          %1070 = vst [vmem:[#allocation4 + $0x190] sm:$0xff] %v962
          %1071 = vst [vmem:[#allocation4 + $0x198] sm:$0xff] %v1011
          %1072 = vst [vmem:[#allocation4 + $0x1a0] sm:$0xff] %v866
          %1073 = vst [vmem:[#allocation4 + $0x1a8] sm:$0xff] %v915
          %1074 = vst [vmem:[#allocation4 + $0x1b0] sm:$0xff] %v964
          %1075 = vst [vmem:[#allocation4 + $0x1b8] sm:$0xff] %v1013
          %1076 = vst [vmem:[#allocation4 + $0x1c0] sm:$0xff] %v869
          %1077 = vst [vmem:[#allocation4 + $0x1c8] sm:$0xff] %v918
          %1078 = vst [vmem:[#allocation4 + $0x1d0] sm:$0xff] %v967
          %1079 = vst [vmem:[#allocation4 + $0x1d8] sm:$0xff] %v1016
          %1080 = vst [vmem:[#allocation4 + $0x1e0] sm:$0xff] %v871
          %1081 = vst [vmem:[#allocation4 + $0x1e8] sm:$0xff] %v920
          %1082 = vst [vmem:[#allocation4 + $0x1f0] sm:$0xff] %v969
          %1083 = vst [vmem:[#allocation4 + $0x1f8] sm:$0xff] %v1018
        $region80: #{tpu_custom_call.1} parent=47 // pred_fallthru
          _
        %p1084 = scmp.gt.s32.totalorder %s30, 0
        // Predicated region
        $region81: #{tpu_custom_call.1} parent=47 // pred_check
          %p1085 = pneg %p1084
        $region82: #{tpu_custom_call.1} parent=47 // pred_check_branch
          %1087 = sbr.rel (%p1085) target = $region84
        $region83: #{tpu_custom_call.1} parent=47 // pred_region
          %v1088 = vld [vmem:[#allocation5] sm:$0xf]
          %v1089 = vld [vmem:[#allocation5 + $0x4] sm:$0xf]
          %v1090 = vld [vmem:[#allocation5 + $0x8] sm:$0xf]
          %v1091 = vld [vmem:[#allocation5 + $0xc] sm:$0xf]
          %v1092 = vld [vmem:[#allocation5 + $0x10] sm:$0xf]
          %v1093 = vld [vmem:[#allocation5 + $0x14] sm:$0xf]
          %v1094 = vld [vmem:[#allocation5 + $0x18] sm:$0xf]
          %v1095 = vld [vmem:[#allocation5 + $0x1c] sm:$0xf]
          %v1096 = vld [vmem:[#allocation5 + $0x20] sm:$0xf]
          %v1097 = vld [vmem:[#allocation5 + $0x24] sm:$0xf]
          %v1098 = vld [vmem:[#allocation5 + $0x28] sm:$0xf]
          %v1099 = vld [vmem:[#allocation5 + $0x2c] sm:$0xf]
          %v1100 = vld [vmem:[#allocation5 + $0x30] sm:$0xf]
          %v1101 = vld [vmem:[#allocation5 + $0x34] sm:$0xf]
          %v1102 = vld [vmem:[#allocation5 + $0x38] sm:$0xf]
          %v1103 = vld [vmem:[#allocation5 + $0x3c] sm:$0xf]
          %v1104 = vld [vmem:[%s465] sm:$0xff]
          %v1105 = vld [vmem:[%s465 + $0x8] sm:$0xff]
          %v1106 = vld [vmem:[%s465 + $0x10] sm:$0xff]
          %v1107 = vld [vmem:[%s465 + $0x18] sm:$0xff]
          %v1108 = vld [vmem:[%s465 + $0x20] sm:$0xff]
          %v1109 = vld [vmem:[%s465 + $0x28] sm:$0xff]
          %v1110 = vld [vmem:[%s465 + $0x30] sm:$0xff]
          %v1111 = vld [vmem:[%s465 + $0x38] sm:$0xff]
          %v1112 = vld [vmem:[%s465 + $0x40] sm:$0xff]
          %v1113 = vld [vmem:[%s465 + $0x48] sm:$0xff]
          %v1114 = vld [vmem:[%s465 + $0x50] sm:$0xff]
          %v1115 = vld [vmem:[%s465 + $0x58] sm:$0xff]
          %v1116 = vld [vmem:[%s465 + $0x60] sm:$0xff]
          %v1117 = vld [vmem:[%s465 + $0x68] sm:$0xff]
          %v1118 = vld [vmem:[%s465 + $0x70] sm:$0xff]
          %v1119 = vld [vmem:[%s465 + $0x78] sm:$0xff]
          %v1120 = vld [vmem:[%s465 + $0x80] sm:$0xff]
          %v1121 = vld [vmem:[%s465 + $0x88] sm:$0xff]
          %v1122 = vld [vmem:[%s465 + $0x90] sm:$0xff]
          %v1123 = vld [vmem:[%s465 + $0x98] sm:$0xff]
          %v1124 = vld [vmem:[%s465 + $0xa0] sm:$0xff]
          %v1125 = vld [vmem:[%s465 + $0xa8] sm:$0xff]
          %v1126 = vld [vmem:[%s465 + $0xb0] sm:$0xff]
          %v1127 = vld [vmem:[%s465 + $0xb8] sm:$0xff]
          %v1128 = vld [vmem:[%s465 + $0xc0] sm:$0xff]
          %v1129 = vld [vmem:[%s465 + $0xc8] sm:$0xff]
          %v1130 = vld [vmem:[%s465 + $0xd0] sm:$0xff]
          %v1131 = vld [vmem:[%s465 + $0xd8] sm:$0xff]
          %v1132 = vld [vmem:[%s465 + $0xe0] sm:$0xff]
          %v1133 = vld [vmem:[%s465 + $0xe8] sm:$0xff]
          %v1134 = vld [vmem:[%s465 + $0xf0] sm:$0xff]
          %v1135 = vld [vmem:[%s465 + $0xf8] sm:$0xff]
          %v1136 = vld [vmem:[%s485] sm:$0xf]
          %v1138 = vperm.slane %v1136, 0
          %v1139 = vperm.slane %v1136, 1
          %v1140 = vperm.slane %v1136, 2
          %v1141 = vperm.slane %v1136, 3
          %v1162 = vunpack.c.l.b16 %v1088
          %v1163 = vunpack.c.l.b16 %v1089
          %v1164 = vunpack.c.l.b16 %v1090
          %v1165 = vunpack.c.l.b16 %v1091
          %v1166 = vunpack.c.l.b16 %v1092
          %v1167 = vunpack.c.l.b16 %v1093
          %v1168 = vunpack.c.l.b16 %v1094
          %v1169 = vunpack.c.l.b16 %v1095
          %v1170 = vunpack.c.l.b16 %v1096
          %v1171 = vunpack.c.l.b16 %v1097
          %v1172 = vunpack.c.l.b16 %v1098
          %v1173 = vunpack.c.l.b16 %v1099
          %v1174 = vunpack.c.l.b16 %v1100
          %v1175 = vunpack.c.l.b16 %v1101
          %v1176 = vunpack.c.l.b16 %v1102
          %v1177 = vunpack.c.l.b16 %v1103
          %v1178 = vpack.c.b16 %v1163, %v1162
          %v1179 = vpack.c.b16 %v1165, %v1164
          %v1180 = vpack.c.b16 %v1167, %v1166
          %v1181 = vpack.c.b16 %v1169, %v1168
          %v1182 = vpack.c.b16 %v1171, %v1170
          %v1183 = vpack.c.b16 %v1173, %v1172
          %v1184 = vpack.c.b16 %v1175, %v1174
          %v1185 = vpack.c.b16 %v1177, %v1176
          %v1226 = vunpack.c.l.b16 %v1104
          %v1227 = vunpack.c.h.b16 %v1104
          %v1228 = vunpack.c.l.b16 %v1105
          %v1229 = vunpack.c.h.b16 %v1105
          %v1230 = vunpack.c.l.b16 %v1106
          %v1231 = vunpack.c.h.b16 %v1106
          %v1232 = vunpack.c.l.b16 %v1107
          %v1233 = vunpack.c.h.b16 %v1107
          %v1234 = vunpack.c.l.b16 %v1108
          %v1235 = vunpack.c.h.b16 %v1108
          %v1236 = vunpack.c.l.b16 %v1109
          %v1237 = vunpack.c.h.b16 %v1109
          %v1238 = vunpack.c.l.b16 %v1110
          %v1239 = vunpack.c.h.b16 %v1110
          %v1240 = vunpack.c.l.b16 %v1111
          %v1241 = vunpack.c.h.b16 %v1111
          %v1242 = vunpack.c.l.b16 %v1112
          %v1243 = vunpack.c.h.b16 %v1112
          %v1244 = vunpack.c.l.b16 %v1113
          %v1245 = vunpack.c.h.b16 %v1113
          %v1246 = vunpack.c.l.b16 %v1114
          %v1247 = vunpack.c.h.b16 %v1114
          %v1248 = vunpack.c.l.b16 %v1115
          %v1249 = vunpack.c.h.b16 %v1115
          %v1250 = vunpack.c.l.b16 %v1116
          %v1251 = vunpack.c.h.b16 %v1116
          %v1252 = vunpack.c.l.b16 %v1117
          %v1253 = vunpack.c.h.b16 %v1117
          %v1254 = vunpack.c.l.b16 %v1118
          %v1255 = vunpack.c.h.b16 %v1118
          %v1256 = vunpack.c.l.b16 %v1119
          %v1257 = vunpack.c.h.b16 %v1119
          %v1258 = vunpack.c.l.b16 %v1120
          %v1259 = vunpack.c.h.b16 %v1120
          %v1260 = vunpack.c.l.b16 %v1121
          %v1261 = vunpack.c.h.b16 %v1121
          %v1262 = vunpack.c.l.b16 %v1122
          %v1263 = vunpack.c.h.b16 %v1122
          %v1264 = vunpack.c.l.b16 %v1123
          %v1265 = vunpack.c.h.b16 %v1123
          %v1266 = vunpack.c.l.b16 %v1124
          %v1267 = vunpack.c.h.b16 %v1124
          %v1268 = vunpack.c.l.b16 %v1125
          %v1269 = vunpack.c.h.b16 %v1125
          %v1270 = vunpack.c.l.b16 %v1126
          %v1271 = vunpack.c.h.b16 %v1126
          %v1272 = vunpack.c.l.b16 %v1127
          %v1273 = vunpack.c.h.b16 %v1127
          %v1274 = vunpack.c.l.b16 %v1128
          %v1275 = vunpack.c.h.b16 %v1128
          %v1276 = vunpack.c.l.b16 %v1129
          %v1277 = vunpack.c.h.b16 %v1129
          %v1278 = vunpack.c.l.b16 %v1130
          %v1279 = vunpack.c.h.b16 %v1130
          %v1280 = vunpack.c.l.b16 %v1131
          %v1281 = vunpack.c.h.b16 %v1131
          %v1282 = vunpack.c.l.b16 %v1132
          %v1283 = vunpack.c.h.b16 %v1132
          %v1284 = vunpack.c.l.b16 %v1133
          %v1285 = vunpack.c.h.b16 %v1133
          %v1286 = vunpack.c.l.b16 %v1134
          %v1287 = vunpack.c.h.b16 %v1134
          %v1288 = vunpack.c.l.b16 %v1135
          %v1289 = vunpack.c.h.b16 %v1135
          %v1290 = vpack.c.b16 %v1230, %v1226
          %v1291 = vpack.c.b16 %v1231, %v1227
          %v1292 = vpack.c.b16 %v1232, %v1228
          %v1293 = vpack.c.b16 %v1233, %v1229
          %v1294 = vpack.c.b16 %v1238, %v1234
          %v1295 = vpack.c.b16 %v1239, %v1235
          %v1296 = vpack.c.b16 %v1240, %v1236
          %v1297 = vpack.c.b16 %v1241, %v1237
          %v1298 = vpack.c.b16 %v1246, %v1242
          %v1299 = vpack.c.b16 %v1247, %v1243
          %v1300 = vpack.c.b16 %v1248, %v1244
          %v1301 = vpack.c.b16 %v1249, %v1245
          %v1302 = vpack.c.b16 %v1254, %v1250
          %v1303 = vpack.c.b16 %v1255, %v1251
          %v1304 = vpack.c.b16 %v1256, %v1252
          %v1305 = vpack.c.b16 %v1257, %v1253
          %v1306 = vpack.c.b16 %v1262, %v1258
          %v1307 = vpack.c.b16 %v1263, %v1259
          %v1308 = vpack.c.b16 %v1264, %v1260
          %v1309 = vpack.c.b16 %v1265, %v1261
          %v1310 = vpack.c.b16 %v1270, %v1266
          %v1311 = vpack.c.b16 %v1271, %v1267
          %v1312 = vpack.c.b16 %v1272, %v1268
          %v1313 = vpack.c.b16 %v1273, %v1269
          %v1314 = vpack.c.b16 %v1278, %v1274
          %v1315 = vpack.c.b16 %v1279, %v1275
          %v1316 = vpack.c.b16 %v1280, %v1276
          %v1317 = vpack.c.b16 %v1281, %v1277
          %v1318 = vpack.c.b16 %v1286, %v1282
          %v1319 = vpack.c.b16 %v1287, %v1283
          %v1320 = vpack.c.b16 %v1288, %v1284
          %v1321 = vpack.c.b16 %v1289, %v1285
          %1354 = vmatpush.bf16.msra.mxu0 %v1318
          %1355 = vmatpush.bf16.msra.mxu0 %v1314
          %1356 = vmatpush.bf16.msra.mxu0 %v1310
          %1357 = vmatpush.bf16.msra.mxu0 %v1306
          %1358 = vmatpush.bf16.msra.mxu0 %v1302
          %1359 = vmatpush.bf16.msra.mxu0 %v1298
          %1360 = vmatpush.bf16.msra.mxu0 %v1294
          %1361 = vmatpush.bf16.msra.mxu0 %v1290
          %1362 = vmatmul.bf16.gmra.mxu0 %v1178
          %v1363 = vpop.f32.mrf.mxu0
          %v1364 = vadd.f32 %v1138, %v1363
          %v1365 = vpop.f32.mrf.mxu0
          %v1366 = vadd.f32 %v1138, %v1365
          %1367 = vmatmul.bf16.gmra.mxu0 %v1179
          %v1368 = vpop.f32.mrf.mxu0
          %v1369 = vadd.f32 %v1138, %v1368
          %v1370 = vpop.f32.mrf.mxu0
          %v1371 = vadd.f32 %v1138, %v1370
          %1372 = vmatmul.bf16.gmra.mxu0 %v1180
          %v1373 = vpop.f32.mrf.mxu0
          %v1374 = vadd.f32 %v1138, %v1373
          %v1375 = vpop.f32.mrf.mxu0
          %v1376 = vadd.f32 %v1138, %v1375
          %1377 = vmatmul.bf16.gmra.mxu0 %v1181
          %v1378 = vpop.f32.mrf.mxu0
          %v1379 = vadd.f32 %v1138, %v1378
          %v1380 = vpop.f32.mrf.mxu0
          %v1381 = vadd.f32 %v1138, %v1380
          %1382 = vmatmul.bf16.gmra.mxu0 %v1182
          %v1383 = vpop.f32.mrf.mxu0
          %v1384 = vadd.f32 %v1138, %v1383
          %v1385 = vpop.f32.mrf.mxu0
          %v1386 = vadd.f32 %v1138, %v1385
          %1387 = vmatmul.bf16.gmra.mxu0 %v1183
          %v1388 = vpop.f32.mrf.mxu0
          %v1389 = vadd.f32 %v1138, %v1388
          %v1390 = vpop.f32.mrf.mxu0
          %v1391 = vadd.f32 %v1138, %v1390
          %1392 = vmatmul.bf16.gmra.mxu0 %v1184
          %v1393 = vpop.f32.mrf.mxu0
          %v1394 = vadd.f32 %v1138, %v1393
          %v1395 = vpop.f32.mrf.mxu0
          %v1396 = vadd.f32 %v1138, %v1395
          %1397 = vmatmul.bf16.gmra.mxu0 %v1185
          %v1398 = vpop.f32.mrf.mxu0
          %v1399 = vadd.f32 %v1138, %v1398
          %v1400 = vpop.f32.mrf.mxu0
          %v1401 = vadd.f32 %v1138, %v1400
          %1402 = vdwg.mxu0
          %1403 = vmatpush.bf16.msra.mxu0 %v1319
          %1404 = vmatpush.bf16.msra.mxu0 %v1315
          %1405 = vmatpush.bf16.msra.mxu0 %v1311
          %1406 = vmatpush.bf16.msra.mxu0 %v1307
          %1407 = vmatpush.bf16.msra.mxu0 %v1303
          %1408 = vmatpush.bf16.msra.mxu0 %v1299
          %1409 = vmatpush.bf16.msra.mxu0 %v1295
          %1410 = vmatpush.bf16.msra.mxu0 %v1291
          %1411 = vmatmul.bf16.gmra.mxu0 %v1178
          %v1412 = vpop.f32.mrf.mxu0
          %v1413 = vadd.f32 %v1139, %v1412
          %v1414 = vpop.f32.mrf.mxu0
          %v1415 = vadd.f32 %v1139, %v1414
          %1416 = vmatmul.bf16.gmra.mxu0 %v1179
          %v1417 = vpop.f32.mrf.mxu0
          %v1418 = vadd.f32 %v1139, %v1417
          %v1419 = vpop.f32.mrf.mxu0
          %v1420 = vadd.f32 %v1139, %v1419
          %1421 = vmatmul.bf16.gmra.mxu0 %v1180
          %v1422 = vpop.f32.mrf.mxu0
          %v1423 = vadd.f32 %v1139, %v1422
          %v1424 = vpop.f32.mrf.mxu0
          %v1425 = vadd.f32 %v1139, %v1424
          %1426 = vmatmul.bf16.gmra.mxu0 %v1181
          %v1427 = vpop.f32.mrf.mxu0
          %v1428 = vadd.f32 %v1139, %v1427
          %v1429 = vpop.f32.mrf.mxu0
          %v1430 = vadd.f32 %v1139, %v1429
          %1431 = vmatmul.bf16.gmra.mxu0 %v1182
          %v1432 = vpop.f32.mrf.mxu0
          %v1433 = vadd.f32 %v1139, %v1432
          %v1434 = vpop.f32.mrf.mxu0
          %v1435 = vadd.f32 %v1139, %v1434
          %1436 = vmatmul.bf16.gmra.mxu0 %v1183
          %v1437 = vpop.f32.mrf.mxu0
          %v1438 = vadd.f32 %v1139, %v1437
          %v1439 = vpop.f32.mrf.mxu0
          %v1440 = vadd.f32 %v1139, %v1439
          %1441 = vmatmul.bf16.gmra.mxu0 %v1184
          %v1442 = vpop.f32.mrf.mxu0
          %v1443 = vadd.f32 %v1139, %v1442
          %v1444 = vpop.f32.mrf.mxu0
          %v1445 = vadd.f32 %v1139, %v1444
          %1446 = vmatmul.bf16.gmra.mxu0 %v1185
          %v1447 = vpop.f32.mrf.mxu0
          %v1448 = vadd.f32 %v1139, %v1447
          %v1449 = vpop.f32.mrf.mxu0
          %v1450 = vadd.f32 %v1139, %v1449
          %1451 = vdwg.mxu0
          %1452 = vmatpush.bf16.msra.mxu0 %v1320
          %1453 = vmatpush.bf16.msra.mxu0 %v1316
          %1454 = vmatpush.bf16.msra.mxu0 %v1312
          %1455 = vmatpush.bf16.msra.mxu0 %v1308
          %1456 = vmatpush.bf16.msra.mxu0 %v1304
          %1457 = vmatpush.bf16.msra.mxu0 %v1300
          %1458 = vmatpush.bf16.msra.mxu0 %v1296
          %1459 = vmatpush.bf16.msra.mxu0 %v1292
          %1460 = vmatmul.bf16.gmra.mxu0 %v1178
          %v1461 = vpop.f32.mrf.mxu0
          %v1462 = vadd.f32 %v1140, %v1461
          %v1463 = vpop.f32.mrf.mxu0
          %v1464 = vadd.f32 %v1140, %v1463
          %1465 = vmatmul.bf16.gmra.mxu0 %v1179
          %v1466 = vpop.f32.mrf.mxu0
          %v1467 = vadd.f32 %v1140, %v1466
          %v1468 = vpop.f32.mrf.mxu0
          %v1469 = vadd.f32 %v1140, %v1468
          %1470 = vmatmul.bf16.gmra.mxu0 %v1180
          %v1471 = vpop.f32.mrf.mxu0
          %v1472 = vadd.f32 %v1140, %v1471
          %v1473 = vpop.f32.mrf.mxu0
          %v1474 = vadd.f32 %v1140, %v1473
          %1475 = vmatmul.bf16.gmra.mxu0 %v1181
          %v1476 = vpop.f32.mrf.mxu0
          %v1477 = vadd.f32 %v1140, %v1476
          %v1478 = vpop.f32.mrf.mxu0
          %v1479 = vadd.f32 %v1140, %v1478
          %1480 = vmatmul.bf16.gmra.mxu0 %v1182
          %v1481 = vpop.f32.mrf.mxu0
          %v1482 = vadd.f32 %v1140, %v1481
          %v1483 = vpop.f32.mrf.mxu0
          %v1484 = vadd.f32 %v1140, %v1483
          %1485 = vmatmul.bf16.gmra.mxu0 %v1183
          %v1486 = vpop.f32.mrf.mxu0
          %v1487 = vadd.f32 %v1140, %v1486
          %v1488 = vpop.f32.mrf.mxu0
          %v1489 = vadd.f32 %v1140, %v1488
          %1490 = vmatmul.bf16.gmra.mxu0 %v1184
          %v1491 = vpop.f32.mrf.mxu0
          %v1492 = vadd.f32 %v1140, %v1491
          %v1493 = vpop.f32.mrf.mxu0
          %v1494 = vadd.f32 %v1140, %v1493
          %1495 = vmatmul.bf16.gmra.mxu0 %v1185
          %v1496 = vpop.f32.mrf.mxu0
          %v1497 = vadd.f32 %v1140, %v1496
          %v1498 = vpop.f32.mrf.mxu0
          %v1499 = vadd.f32 %v1140, %v1498
          %1500 = vdwg.mxu0
          %1501 = vmatpush.bf16.msra.mxu0 %v1321
          %1502 = vmatpush.bf16.msra.mxu0 %v1317
          %1503 = vmatpush.bf16.msra.mxu0 %v1313
          %1504 = vmatpush.bf16.msra.mxu0 %v1309
          %1505 = vmatpush.bf16.msra.mxu0 %v1305
          %1506 = vmatpush.bf16.msra.mxu0 %v1301
          %1507 = vmatpush.bf16.msra.mxu0 %v1297
          %1508 = vmatpush.bf16.msra.mxu0 %v1293
          %1509 = vmatmul.bf16.gmra.mxu0 %v1178
          %v1510 = vpop.f32.mrf.mxu0
          %v1511 = vadd.f32 %v1141, %v1510
          %v1512 = vpop.f32.mrf.mxu0
          %v1513 = vadd.f32 %v1141, %v1512
          %1514 = vmatmul.bf16.gmra.mxu0 %v1179
          %v1515 = vpop.f32.mrf.mxu0
          %v1516 = vadd.f32 %v1141, %v1515
          %v1517 = vpop.f32.mrf.mxu0
          %v1518 = vadd.f32 %v1141, %v1517
          %1519 = vmatmul.bf16.gmra.mxu0 %v1180
          %v1520 = vpop.f32.mrf.mxu0
          %v1521 = vadd.f32 %v1141, %v1520
          %v1522 = vpop.f32.mrf.mxu0
          %v1523 = vadd.f32 %v1141, %v1522
          %1524 = vmatmul.bf16.gmra.mxu0 %v1181
          %v1525 = vpop.f32.mrf.mxu0
          %v1526 = vadd.f32 %v1141, %v1525
          %v1527 = vpop.f32.mrf.mxu0
          %v1528 = vadd.f32 %v1141, %v1527
          %1529 = vmatmul.bf16.gmra.mxu0 %v1182
          %v1530 = vpop.f32.mrf.mxu0
          %v1531 = vadd.f32 %v1141, %v1530
          %v1532 = vpop.f32.mrf.mxu0
          %v1533 = vadd.f32 %v1141, %v1532
          %1534 = vmatmul.bf16.gmra.mxu0 %v1183
          %v1535 = vpop.f32.mrf.mxu0
          %v1536 = vadd.f32 %v1141, %v1535
          %v1537 = vpop.f32.mrf.mxu0
          %v1538 = vadd.f32 %v1141, %v1537
          %1539 = vmatmul.bf16.gmra.mxu0 %v1184
          %v1540 = vpop.f32.mrf.mxu0
          %v1541 = vadd.f32 %v1141, %v1540
          %v1542 = vpop.f32.mrf.mxu0
          %v1543 = vadd.f32 %v1141, %v1542
          %1544 = vmatmul.bf16.gmra.mxu0 %v1185
          %v1545 = vpop.f32.mrf.mxu0
          %v1546 = vadd.f32 %v1141, %v1545
          %v1547 = vpop.f32.mrf.mxu0
          %v1548 = vadd.f32 %v1141, %v1547
          %1549 = vdwg.mxu0
          %1550 = vst [vmem:[#allocation4] sm:$0xff] %v1364
          %1551 = vst [vmem:[#allocation4 + $0x8] sm:$0xff] %v1413
          %1552 = vst [vmem:[#allocation4 + $0x10] sm:$0xff] %v1462
          %1553 = vst [vmem:[#allocation4 + $0x18] sm:$0xff] %v1511
          %1554 = vst [vmem:[#allocation4 + $0x20] sm:$0xff] %v1366
          %1555 = vst [vmem:[#allocation4 + $0x28] sm:$0xff] %v1415
          %1556 = vst [vmem:[#allocation4 + $0x30] sm:$0xff] %v1464
          %1557 = vst [vmem:[#allocation4 + $0x38] sm:$0xff] %v1513
          %1558 = vst [vmem:[#allocation4 + $0x40] sm:$0xff] %v1369
          %1559 = vst [vmem:[#allocation4 + $0x48] sm:$0xff] %v1418
          %1560 = vst [vmem:[#allocation4 + $0x50] sm:$0xff] %v1467
          %1561 = vst [vmem:[#allocation4 + $0x58] sm:$0xff] %v1516
          %1562 = vst [vmem:[#allocation4 + $0x60] sm:$0xff] %v1371
          %1563 = vst [vmem:[#allocation4 + $0x68] sm:$0xff] %v1420
          %1564 = vst [vmem:[#allocation4 + $0x70] sm:$0xff] %v1469
          %1565 = vst [vmem:[#allocation4 + $0x78] sm:$0xff] %v1518
          %1566 = vst [vmem:[#allocation4 + $0x80] sm:$0xff] %v1374
          %1567 = vst [vmem:[#allocation4 + $0x88] sm:$0xff] %v1423
          %1568 = vst [vmem:[#allocation4 + $0x90] sm:$0xff] %v1472
          %1569 = vst [vmem:[#allocation4 + $0x98] sm:$0xff] %v1521
          %1570 = vst [vmem:[#allocation4 + $0xa0] sm:$0xff] %v1376
          %1571 = vst [vmem:[#allocation4 + $0xa8] sm:$0xff] %v1425
          %1572 = vst [vmem:[#allocation4 + $0xb0] sm:$0xff] %v1474
          %1573 = vst [vmem:[#allocation4 + $0xb8] sm:$0xff] %v1523
          %1574 = vst [vmem:[#allocation4 + $0xc0] sm:$0xff] %v1379
          %1575 = vst [vmem:[#allocation4 + $0xc8] sm:$0xff] %v1428
          %1576 = vst [vmem:[#allocation4 + $0xd0] sm:$0xff] %v1477
          %1577 = vst [vmem:[#allocation4 + $0xd8] sm:$0xff] %v1526
          %1578 = vst [vmem:[#allocation4 + $0xe0] sm:$0xff] %v1381
          %1579 = vst [vmem:[#allocation4 + $0xe8] sm:$0xff] %v1430
          %1580 = vst [vmem:[#allocation4 + $0xf0] sm:$0xff] %v1479
          %1581 = vst [vmem:[#allocation4 + $0xf8] sm:$0xff] %v1528
          %1582 = vst [vmem:[#allocation4 + $0x100] sm:$0xff] %v1384
          %1583 = vst [vmem:[#allocation4 + $0x108] sm:$0xff] %v1433
          %1584 = vst [vmem:[#allocation4 + $0x110] sm:$0xff] %v1482
          %1585 = vst [vmem:[#allocation4 + $0x118] sm:$0xff] %v1531
          %1586 = vst [vmem:[#allocation4 + $0x120] sm:$0xff] %v1386
          %1587 = vst [vmem:[#allocation4 + $0x128] sm:$0xff] %v1435
          %1588 = vst [vmem:[#allocation4 + $0x130] sm:$0xff] %v1484
          %1589 = vst [vmem:[#allocation4 + $0x138] sm:$0xff] %v1533
          %1590 = vst [vmem:[#allocation4 + $0x140] sm:$0xff] %v1389
          %1591 = vst [vmem:[#allocation4 + $0x148] sm:$0xff] %v1438
          %1592 = vst [vmem:[#allocation4 + $0x150] sm:$0xff] %v1487
          %1593 = vst [vmem:[#allocation4 + $0x158] sm:$0xff] %v1536
          %1594 = vst [vmem:[#allocation4 + $0x160] sm:$0xff] %v1391
          %1595 = vst [vmem:[#allocation4 + $0x168] sm:$0xff] %v1440
          %1596 = vst [vmem:[#allocation4 + $0x170] sm:$0xff] %v1489
          %1597 = vst [vmem:[#allocation4 + $0x178] sm:$0xff] %v1538
          %1598 = vst [vmem:[#allocation4 + $0x180] sm:$0xff] %v1394
          %1599 = vst [vmem:[#allocation4 + $0x188] sm:$0xff] %v1443
          %1600 = vst [vmem:[#allocation4 + $0x190] sm:$0xff] %v1492
          %1601 = vst [vmem:[#allocation4 + $0x198] sm:$0xff] %v1541
          %1602 = vst [vmem:[#allocation4 + $0x1a0] sm:$0xff] %v1396
          %1603 = vst [vmem:[#allocation4 + $0x1a8] sm:$0xff] %v1445
          %1604 = vst [vmem:[#allocation4 + $0x1b0] sm:$0xff] %v1494
          %1605 = vst [vmem:[#allocation4 + $0x1b8] sm:$0xff] %v1543
          %1606 = vst [vmem:[#allocation4 + $0x1c0] sm:$0xff] %v1399
          %1607 = vst [vmem:[#allocation4 + $0x1c8] sm:$0xff] %v1448
          %1608 = vst [vmem:[#allocation4 + $0x1d0] sm:$0xff] %v1497
          %1609 = vst [vmem:[#allocation4 + $0x1d8] sm:$0xff] %v1546
          %1610 = vst [vmem:[#allocation4 + $0x1e0] sm:$0xff] %v1401
          %1611 = vst [vmem:[#allocation4 + $0x1e8] sm:$0xff] %v1450
          %1612 = vst [vmem:[#allocation4 + $0x1f0] sm:$0xff] %v1499
          %1613 = vst [vmem:[#allocation4 + $0x1f8] sm:$0xff] %v1548
        $region84: #{tpu_custom_call.1} parent=47 // pred_fallthru
          _
        %s1614 = smul.u32 0, 4
        %s1615 = smul.addr %s1614, 8
        %s1616 = scalar_lea.vmem [#allocation4], %s1615
        %v1617 = vld [vmem:[%s1616] sm:$0xff]
        %v1618 = vld [vmem:[%s1616 + $0x8] sm:$0xff]
        %v1619 = vld [vmem:[%s1616 + $0x10] sm:$0xff]
        %v1620 = vld [vmem:[%s1616 + $0x18] sm:$0xff]
        %v1621 = vld [vmem:[%s1616 + $0x20] sm:$0xff]
        %v1622 = vld [vmem:[%s1616 + $0x28] sm:$0xff]
        %v1623 = vld [vmem:[%s1616 + $0x30] sm:$0xff]
        %v1624 = vld [vmem:[%s1616 + $0x38] sm:$0xff]
        %v1625 = vld [vmem:[#allocation2] sm:$0xff]
        %v1626 = vld [vmem:[#allocation2 + $0x8] sm:$0xff]
        %v1627 = vpack.c.bf16 %v1626, %v1625
        %v1628 = vld [vmem:[%s475] sm:$0xff]
        %v1629 = vld [vmem:[%s475 + $0x8] sm:$0xff]
        %v1630 = vld [vmem:[%s475 + $0x10] sm:$0xff]
        %v1631 = vld [vmem:[%s475 + $0x18] sm:$0xff]
        %v1632 = vld [vmem:[%s475 + $0x20] sm:$0xff]
        %v1633 = vld [vmem:[%s475 + $0x28] sm:$0xff]
        %v1634 = vld [vmem:[%s475 + $0x30] sm:$0xff]
        %v1635 = vld [vmem:[%s475 + $0x38] sm:$0xff]
        %v1636 = vld [vmem:[%s475 + $0x40] sm:$0xff]
        %v1637 = vld [vmem:[%s475 + $0x48] sm:$0xff]
        %v1638 = vld [vmem:[%s475 + $0x50] sm:$0xff]
        %v1639 = vld [vmem:[%s475 + $0x58] sm:$0xff]
        %v1640 = vld [vmem:[%s475 + $0x60] sm:$0xff]
        %v1641 = vld [vmem:[%s475 + $0x68] sm:$0xff]
        %v1642 = vld [vmem:[%s475 + $0x70] sm:$0xff]
        %v1643 = vld [vmem:[%s475 + $0x78] sm:$0xff]
        %v1644 = vld [vmem:[%s475 + $0x80] sm:$0xff]
        %v1645 = vld [vmem:[%s475 + $0x88] sm:$0xff]
        %v1646 = vld [vmem:[%s475 + $0x90] sm:$0xff]
        %v1647 = vld [vmem:[%s475 + $0x98] sm:$0xff]
        %v1648 = vld [vmem:[%s475 + $0xa0] sm:$0xff]
        %v1649 = vld [vmem:[%s475 + $0xa8] sm:$0xff]
        %v1650 = vld [vmem:[%s475 + $0xb0] sm:$0xff]
        %v1651 = vld [vmem:[%s475 + $0xb8] sm:$0xff]
        %v1652 = vld [vmem:[%s475 + $0xc0] sm:$0xff]
        %v1653 = vld [vmem:[%s475 + $0xc8] sm:$0xff]
        %v1654 = vld [vmem:[%s475 + $0xd0] sm:$0xff]
        %v1655 = vld [vmem:[%s475 + $0xd8] sm:$0xff]
        %v1656 = vld [vmem:[%s475 + $0xe0] sm:$0xff]
        %v1657 = vld [vmem:[%s475 + $0xe8] sm:$0xff]
        %v1658 = vld [vmem:[%s475 + $0xf0] sm:$0xff]
        %v1659 = vld [vmem:[%s475 + $0xf8] sm:$0xff]
        %v1692 = vunpack.c.l.b16 %v1628
        %v1693 = vunpack.c.h.b16 %v1628
        %v1694 = vunpack.c.l.b16 %v1629
        %v1695 = vunpack.c.h.b16 %v1629
        %v1696 = vunpack.c.l.b16 %v1630
        %v1697 = vunpack.c.h.b16 %v1630
        %v1698 = vunpack.c.l.b16 %v1631
        %v1699 = vunpack.c.h.b16 %v1631
        %v1700 = vunpack.c.l.b16 %v1632
        %v1701 = vunpack.c.h.b16 %v1632
        %v1702 = vunpack.c.l.b16 %v1633
        %v1703 = vunpack.c.h.b16 %v1633
        %v1704 = vunpack.c.l.b16 %v1634
        %v1705 = vunpack.c.h.b16 %v1634
        %v1706 = vunpack.c.l.b16 %v1635
        %v1707 = vunpack.c.h.b16 %v1635
        %v1708 = vunpack.c.l.b16 %v1636
        %v1709 = vunpack.c.h.b16 %v1636
        %v1710 = vunpack.c.l.b16 %v1637
        %v1711 = vunpack.c.h.b16 %v1637
        %v1712 = vunpack.c.l.b16 %v1638
        %v1713 = vunpack.c.h.b16 %v1638
        %v1714 = vunpack.c.l.b16 %v1639
        %v1715 = vunpack.c.h.b16 %v1639
        %v1716 = vunpack.c.l.b16 %v1640
        %v1717 = vunpack.c.h.b16 %v1640
        %v1718 = vunpack.c.l.b16 %v1641
        %v1719 = vunpack.c.h.b16 %v1641
        %v1720 = vunpack.c.l.b16 %v1642
        %v1721 = vunpack.c.h.b16 %v1642
        %v1722 = vunpack.c.l.b16 %v1643
        %v1723 = vunpack.c.h.b16 %v1643
        %v1724 = vunpack.c.l.b16 %v1644
        %v1725 = vunpack.c.h.b16 %v1644
        %v1726 = vunpack.c.l.b16 %v1645
        %v1727 = vunpack.c.h.b16 %v1645
        %v1728 = vunpack.c.l.b16 %v1646
        %v1729 = vunpack.c.h.b16 %v1646
        %v1730 = vunpack.c.l.b16 %v1647
        %v1731 = vunpack.c.h.b16 %v1647
        %v1732 = vunpack.c.l.b16 %v1648
        %v1733 = vunpack.c.h.b16 %v1648
        %v1734 = vunpack.c.l.b16 %v1649
        %v1735 = vunpack.c.h.b16 %v1649
        %v1736 = vunpack.c.l.b16 %v1650
        %v1737 = vunpack.c.h.b16 %v1650
        %v1738 = vunpack.c.l.b16 %v1651
        %v1739 = vunpack.c.h.b16 %v1651
        %v1740 = vunpack.c.l.b16 %v1652
        %v1741 = vunpack.c.h.b16 %v1652
        %v1742 = vunpack.c.l.b16 %v1653
        %v1743 = vunpack.c.h.b16 %v1653
        %v1744 = vunpack.c.l.b16 %v1654
        %v1745 = vunpack.c.h.b16 %v1654
        %v1746 = vunpack.c.l.b16 %v1655
        %v1747 = vunpack.c.h.b16 %v1655
        %v1748 = vunpack.c.l.b16 %v1656
        %v1749 = vunpack.c.h.b16 %v1656
        %v1750 = vunpack.c.l.b16 %v1657
        %v1751 = vunpack.c.h.b16 %v1657
        %v1752 = vunpack.c.l.b16 %v1658
        %v1753 = vunpack.c.h.b16 %v1658
        %v1754 = vunpack.c.l.b16 %v1659
        %v1755 = vunpack.c.h.b16 %v1659
        %v1756 = vpack.c.b16 %v1696, %v1692
        %v1757 = vpack.c.b16 %v1697, %v1693
        %v1758 = vpack.c.b16 %v1698, %v1694
        %v1759 = vpack.c.b16 %v1699, %v1695
        %v1760 = vpack.c.b16 %v1704, %v1700
        %v1761 = vpack.c.b16 %v1705, %v1701
        %v1762 = vpack.c.b16 %v1706, %v1702
        %v1763 = vpack.c.b16 %v1707, %v1703
        %v1764 = vpack.c.b16 %v1712, %v1708
        %v1765 = vpack.c.b16 %v1713, %v1709
        %v1766 = vpack.c.b16 %v1714, %v1710
        %v1767 = vpack.c.b16 %v1715, %v1711
        %v1768 = vpack.c.b16 %v1720, %v1716
        %v1769 = vpack.c.b16 %v1721, %v1717
        %v1770 = vpack.c.b16 %v1722, %v1718
        %v1771 = vpack.c.b16 %v1723, %v1719
        %v1772 = vpack.c.b16 %v1728, %v1724
        %v1773 = vpack.c.b16 %v1729, %v1725
        %v1774 = vpack.c.b16 %v1730, %v1726
        %v1775 = vpack.c.b16 %v1731, %v1727
        %v1776 = vpack.c.b16 %v1736, %v1732
        %v1777 = vpack.c.b16 %v1737, %v1733
        %v1778 = vpack.c.b16 %v1738, %v1734
        %v1779 = vpack.c.b16 %v1739, %v1735
        %v1780 = vpack.c.b16 %v1744, %v1740
        %v1781 = vpack.c.b16 %v1745, %v1741
        %v1782 = vpack.c.b16 %v1746, %v1742
        %v1783 = vpack.c.b16 %v1747, %v1743
        %v1784 = vpack.c.b16 %v1752, %v1748
        %v1785 = vpack.c.b16 %v1753, %v1749
        %v1786 = vpack.c.b16 %v1754, %v1750
        %v1787 = vpack.c.b16 %v1755, %v1751
        %1820 = vmatpush.bf16.msra.mxu0 %v1784
        %1821 = vmatpush.bf16.msra.mxu0 %v1780
        %1822 = vmatpush.bf16.msra.mxu0 %v1776
        %1823 = vmatpush.bf16.msra.mxu0 %v1772
        %1824 = vmatpush.bf16.msra.mxu0 %v1768
        %1825 = vmatpush.bf16.msra.mxu0 %v1764
        %1826 = vmatpush.bf16.msra.mxu0 %v1760
        %1827 = vmatpush.bf16.msra.mxu0 %v1756
        %1828 = vmatmul.bf16.gmra.mxu0 %v1627
        %v1829 = vpop.f32.mrf.mxu0
        %v1830 = vadd.f32 0.0, %v1829
        %v1831 = vpop.f32.mrf.mxu0
        %v1832 = vadd.f32 0.0, %v1831
        %1833 = vdwg.mxu0
        %1834 = vmatpush.bf16.msra.mxu0 %v1785
        %1835 = vmatpush.bf16.msra.mxu0 %v1781
        %1836 = vmatpush.bf16.msra.mxu0 %v1777
        %1837 = vmatpush.bf16.msra.mxu0 %v1773
        %1838 = vmatpush.bf16.msra.mxu0 %v1769
        %1839 = vmatpush.bf16.msra.mxu0 %v1765
        %1840 = vmatpush.bf16.msra.mxu0 %v1761
        %1841 = vmatpush.bf16.msra.mxu0 %v1757
        %1842 = vmatmul.bf16.gmra.mxu0 %v1627
        %v1843 = vpop.f32.mrf.mxu0
        %v1844 = vadd.f32 0.0, %v1843
        %v1845 = vpop.f32.mrf.mxu0
        %v1846 = vadd.f32 0.0, %v1845
        %1847 = vdwg.mxu0
        %1848 = vmatpush.bf16.msra.mxu0 %v1786
        %1849 = vmatpush.bf16.msra.mxu0 %v1782
        %1850 = vmatpush.bf16.msra.mxu0 %v1778
        %1851 = vmatpush.bf16.msra.mxu0 %v1774
        %1852 = vmatpush.bf16.msra.mxu0 %v1770
        %1853 = vmatpush.bf16.msra.mxu0 %v1766
        %1854 = vmatpush.bf16.msra.mxu0 %v1762
        %1855 = vmatpush.bf16.msra.mxu0 %v1758
        %1856 = vmatmul.bf16.gmra.mxu0 %v1627
        %v1857 = vpop.f32.mrf.mxu0
        %v1858 = vadd.f32 0.0, %v1857
        %v1859 = vpop.f32.mrf.mxu0
        %v1860 = vadd.f32 0.0, %v1859
        %1861 = vdwg.mxu0
        %1862 = vmatpush.bf16.msra.mxu0 %v1787
        %1863 = vmatpush.bf16.msra.mxu0 %v1783
        %1864 = vmatpush.bf16.msra.mxu0 %v1779
        %1865 = vmatpush.bf16.msra.mxu0 %v1775
        %1866 = vmatpush.bf16.msra.mxu0 %v1771
        %1867 = vmatpush.bf16.msra.mxu0 %v1767
        %1868 = vmatpush.bf16.msra.mxu0 %v1763
        %1869 = vmatpush.bf16.msra.mxu0 %v1759
        %1870 = vmatmul.bf16.gmra.mxu0 %v1627
        %v1871 = vpop.f32.mrf.mxu0
        %v1872 = vadd.f32 0.0, %v1871
        %v1873 = vpop.f32.mrf.mxu0
        %v1874 = vadd.f32 0.0, %v1873
        %1875 = vdwg.mxu0
        %v1876 = vadd.f32 %v1617, %v1830
        %v1877 = vadd.f32 %v1618, %v1844
        %v1878 = vadd.f32 %v1619, %v1858
        %v1879 = vadd.f32 %v1620, %v1872
        %v1880 = vadd.f32 %v1621, %v1832
        %v1881 = vadd.f32 %v1622, %v1846
        %v1882 = vadd.f32 %v1623, %v1860
        %v1883 = vadd.f32 %v1624, %v1874
        %v1884 = vxor.u32 %v1876, 2147483648
        %v1885 = vxor.u32 %v1877, 2147483648
        %v1886 = vxor.u32 %v1880, 2147483648
        %v1887 = vxor.u32 %v1881, 2147483648
        %v1888 = vmul.f32 %v1884, 1.442695
        %v1889 = vpow.pop %v1888
        %v1890 = vmul.f32 %v1885, 1.442695
        %v1891 = vpow.pop %v1890
        %v1892 = vmul.f32 %v1886, 1.442695
        %v1893 = vpow.pop %v1892
        %v1894 = vmul.f32 %v1887, 1.442695
        %v1895 = vpow.pop %v1894
        %v1896 = vadd.f32 %v1889, 1.0
        %v1897 = vadd.f32 %v1891, 1.0
        %v1898 = vadd.f32 %v1893, 1.0
        %v1899 = vadd.f32 %v1895, 1.0
        %v1900 = vrcp.pop %v1896
        %v1901 = vmul.f32 %v1896, %v1900
        %v1902 = vsub.f32 1.0, %v1901
        %v1903 = vmul.f32 %v1900, %v1902
        %v1904 = vadd.f32 %v1900, %v1903
        %vm1905 = vweird.f32 %v1896
        %vm1906 = vweird.f32 %v1900
        %vm1907 = vmor %vm1905, %vm1906
        %v1908 = vsel %vm1907, %v1900, %v1904
        %v1909 = vand.u32 2147483647, %v1896
        %vm1910 = vcmp.eq.f32.partialorder %v1909, 8.507059e+37
        %v1911 = vand.u32 %v1896, 2147483648
        %v1912 = vor.u32 1.1754944e-38, %v1911
        %v1913 = vsel %vm1910, %v1912, %v1908
        %v1914 = vmul.f32 1.0, %v1913
        %v1915 = vrcp.pop %v1897
        %v1916 = vmul.f32 %v1897, %v1915
        %v1917 = vsub.f32 1.0, %v1916
        %v1918 = vmul.f32 %v1915, %v1917
        %v1919 = vadd.f32 %v1915, %v1918
        %vm1920 = vweird.f32 %v1897
        %vm1921 = vweird.f32 %v1915
        %vm1922 = vmor %vm1920, %vm1921
        %v1923 = vsel %vm1922, %v1915, %v1919
        %v1924 = vand.u32 2147483647, %v1897
        %vm1925 = vcmp.eq.f32.partialorder %v1924, 8.507059e+37
        %v1926 = vand.u32 %v1897, 2147483648
        %v1927 = vor.u32 1.1754944e-38, %v1926
        %v1928 = vsel %vm1925, %v1927, %v1923
        %v1929 = vmul.f32 1.0, %v1928
        %v1930 = vrcp.pop %v1898
        %v1931 = vmul.f32 %v1898, %v1930
        %v1932 = vsub.f32 1.0, %v1931
        %v1933 = vmul.f32 %v1930, %v1932
        %v1934 = vadd.f32 %v1930, %v1933
        %vm1935 = vweird.f32 %v1898
        %vm1936 = vweird.f32 %v1930
        %vm1937 = vmor %vm1935, %vm1936
        %v1938 = vsel %vm1937, %v1930, %v1934
        %v1939 = vand.u32 2147483647, %v1898
        %vm1940 = vcmp.eq.f32.partialorder %v1939, 8.507059e+37
        %v1941 = vand.u32 %v1898, 2147483648
        %v1942 = vor.u32 1.1754944e-38, %v1941
        %v1943 = vsel %vm1940, %v1942, %v1938
        %v1944 = vmul.f32 1.0, %v1943
        %v1945 = vrcp.pop %v1899
        %v1946 = vmul.f32 %v1899, %v1945
        %v1947 = vsub.f32 1.0, %v1946
        %v1948 = vmul.f32 %v1945, %v1947
        %v1949 = vadd.f32 %v1945, %v1948
        %vm1950 = vweird.f32 %v1899
        %vm1951 = vweird.f32 %v1945
        %vm1952 = vmor %vm1950, %vm1951
        %v1953 = vsel %vm1952, %v1945, %v1949
        %v1954 = vand.u32 2147483647, %v1899
        %vm1955 = vcmp.eq.f32.partialorder %v1954, 8.507059e+37
        %v1956 = vand.u32 %v1899, 2147483648
        %v1957 = vor.u32 1.1754944e-38, %v1956
        %v1958 = vsel %vm1955, %v1957, %v1953
        %v1959 = vmul.f32 1.0, %v1958
        %v1960 = vtanh.pop %v1878
        %v1961 = vtanh.pop %v1882
        %v1962 = vxor.u32 %v1879, 2147483648
        %v1963 = vxor.u32 %v1883, 2147483648
        %v1964 = vmul.f32 %v1962, 1.442695
        %v1965 = vpow.pop %v1964
        %v1966 = vmul.f32 %v1963, 1.442695
        %v1967 = vpow.pop %v1966
        %v1968 = vadd.f32 %v1965, 1.0
        %v1969 = vadd.f32 %v1967, 1.0
        %v1970 = vrcp.pop %v1968
        %v1971 = vmul.f32 %v1968, %v1970
        %v1972 = vsub.f32 1.0, %v1971
        %v1973 = vmul.f32 %v1970, %v1972
        %v1974 = vadd.f32 %v1970, %v1973
        %vm1975 = vweird.f32 %v1968
        %vm1976 = vweird.f32 %v1970
        %vm1977 = vmor %vm1975, %vm1976
        %v1978 = vsel %vm1977, %v1970, %v1974
        %v1979 = vand.u32 2147483647, %v1968
        %vm1980 = vcmp.eq.f32.partialorder %v1979, 8.507059e+37
        %v1981 = vand.u32 %v1968, 2147483648
        %v1982 = vor.u32 1.1754944e-38, %v1981
        %v1983 = vsel %vm1980, %v1982, %v1978
        %v1984 = vmul.f32 1.0, %v1983
        %v1985 = vrcp.pop %v1969
        %v1986 = vmul.f32 %v1969, %v1985
        %v1987 = vsub.f32 1.0, %v1986
        %v1988 = vmul.f32 %v1985, %v1987
        %v1989 = vadd.f32 %v1985, %v1988
        %vm1990 = vweird.f32 %v1969
        %vm1991 = vweird.f32 %v1985
        %vm1992 = vmor %vm1990, %vm1991
        %v1993 = vsel %vm1992, %v1985, %v1989
        %v1994 = vand.u32 2147483647, %v1969
        %vm1995 = vcmp.eq.f32.partialorder %v1994, 8.507059e+37
        %v1996 = vand.u32 %v1969, 2147483648
        %v1997 = vor.u32 1.1754944e-38, %v1996
        %v1998 = vsel %vm1995, %v1997, %v1993
        %v1999 = vmul.f32 1.0, %v1998
        %v2000 = vld [vmem:[#allocation3] sm:$0xff]
        %v2001 = vld [vmem:[#allocation3 + $0x8] sm:$0xff]
        %v2002 = vmul.f32 %v1929, %v2000
        %v2003 = vmul.f32 %v1959, %v2001
        %v2004 = vmul.f32 %v1914, %v1960
        %v2005 = vmul.f32 %v1944, %v1961
        %v2006 = vadd.f32 %v2002, %v2004
        %v2007 = vadd.f32 %v2003, %v2005
        %v2008 = vtanh.pop %v2006
        %v2009 = vtanh.pop %v2007
        %v2010 = vmul.f32 %v1984, %v2008
        %v2011 = vmul.f32 %v1999, %v2009
        %2012 = vst [vmem:[#allocation3] sm:$0xff] %v2006
        %2013 = vst [vmem:[#allocation3 + $0x8] sm:$0xff] %v2007
        %2014 = vst [vmem:[#allocation2] sm:$0xff] %v2010
        %2015 = vst [vmem:[#allocation2 + $0x8] sm:$0xff] %v2011
        %v2016 = vpack.c.bf16 %v2010, %v2010
        %v2017 = vpack.c.bf16 %v2011, %v2011
        %2018 = vst [vmem:[#allocation5] sm:$0xf] %v2016
        %2019 = vst [vmem:[#allocation5 + $0x4] sm:$0xf] %v2017
        %s2020 = smul.u32 2, 4
        %s2021 = smul.addr %s2020, 8
        %s2022 = scalar_lea.vmem [#allocation4], %s2021
        %v2023 = vld [vmem:[%s2022] sm:$0xff]
        %v2024 = vld [vmem:[%s2022 + $0x8] sm:$0xff]
        %v2025 = vld [vmem:[%s2022 + $0x10] sm:$0xff]
        %v2026 = vld [vmem:[%s2022 + $0x18] sm:$0xff]
        %v2027 = vld [vmem:[%s2022 + $0x20] sm:$0xff]
        %v2028 = vld [vmem:[%s2022 + $0x28] sm:$0xff]
        %v2029 = vld [vmem:[%s2022 + $0x30] sm:$0xff]
        %v2030 = vld [vmem:[%s2022 + $0x38] sm:$0xff]
        %v2031 = vld [vmem:[#allocation2] sm:$0xff]
        %v2032 = vld [vmem:[#allocation2 + $0x8] sm:$0xff]
        %v2033 = vpack.c.bf16 %v2032, %v2031
        %v2034 = vld [vmem:[%s475] sm:$0xff]
        %v2035 = vld [vmem:[%s475 + $0x8] sm:$0xff]
        %v2036 = vld [vmem:[%s475 + $0x10] sm:$0xff]
        %v2037 = vld [vmem:[%s475 + $0x18] sm:$0xff]
        %v2038 = vld [vmem:[%s475 + $0x20] sm:$0xff]
        %v2039 = vld [vmem:[%s475 + $0x28] sm:$0xff]
        %v2040 = vld [vmem:[%s475 + $0x30] sm:$0xff]
        %v2041 = vld [vmem:[%s475 + $0x38] sm:$0xff]
        %v2042 = vld [vmem:[%s475 + $0x40] sm:$0xff]
        %v2043 = vld [vmem:[%s475 + $0x48] sm:$0xff]
        %v2044 = vld [vmem:[%s475 + $0x50] sm:$0xff]
        %v2045 = vld [vmem:[%s475 + $0x58] sm:$0xff]
        %v2046 = vld [vmem:[%s475 + $0x60] sm:$0xff]
        %v2047 = vld [vmem:[%s475 + $0x68] sm:$0xff]
        %v2048 = vld [vmem:[%s475 + $0x70] sm:$0xff]
        %v2049 = vld [vmem:[%s475 + $0x78] sm:$0xff]
        %v2050 = vld [vmem:[%s475 + $0x80] sm:$0xff]
        %v2051 = vld [vmem:[%s475 + $0x88] sm:$0xff]
        %v2052 = vld [vmem:[%s475 + $0x90] sm:$0xff]
        %v2053 = vld [vmem:[%s475 + $0x98] sm:$0xff]
        %v2054 = vld [vmem:[%s475 + $0xa0] sm:$0xff]
        %v2055 = vld [vmem:[%s475 + $0xa8] sm:$0xff]
        %v2056 = vld [vmem:[%s475 + $0xb0] sm:$0xff]
        %v2057 = vld [vmem:[%s475 + $0xb8] sm:$0xff]
        %v2058 = vld [vmem:[%s475 + $0xc0] sm:$0xff]
        %v2059 = vld [vmem:[%s475 + $0xc8] sm:$0xff]
        %v2060 = vld [vmem:[%s475 + $0xd0] sm:$0xff]
        %v2061 = vld [vmem:[%s475 + $0xd8] sm:$0xff]
        %v2062 = vld [vmem:[%s475 + $0xe0] sm:$0xff]
        %v2063 = vld [vmem:[%s475 + $0xe8] sm:$0xff]
        %v2064 = vld [vmem:[%s475 + $0xf0] sm:$0xff]
        %v2065 = vld [vmem:[%s475 + $0xf8] sm:$0xff]
        %v2098 = vunpack.c.l.b16 %v2034
        %v2099 = vunpack.c.h.b16 %v2034
        %v2100 = vunpack.c.l.b16 %v2035
        %v2101 = vunpack.c.h.b16 %v2035
        %v2102 = vunpack.c.l.b16 %v2036
        %v2103 = vunpack.c.h.b16 %v2036
        %v2104 = vunpack.c.l.b16 %v2037
        %v2105 = vunpack.c.h.b16 %v2037
        %v2106 = vunpack.c.l.b16 %v2038
        %v2107 = vunpack.c.h.b16 %v2038
        %v2108 = vunpack.c.l.b16 %v2039
        %v2109 = vunpack.c.h.b16 %v2039
        %v2110 = vunpack.c.l.b16 %v2040
        %v2111 = vunpack.c.h.b16 %v2040
        %v2112 = vunpack.c.l.b16 %v2041
        %v2113 = vunpack.c.h.b16 %v2041
        %v2114 = vunpack.c.l.b16 %v2042
        %v2115 = vunpack.c.h.b16 %v2042
        %v2116 = vunpack.c.l.b16 %v2043
        %v2117 = vunpack.c.h.b16 %v2043
        %v2118 = vunpack.c.l.b16 %v2044
        %v2119 = vunpack.c.h.b16 %v2044
        %v2120 = vunpack.c.l.b16 %v2045
        %v2121 = vunpack.c.h.b16 %v2045
        %v2122 = vunpack.c.l.b16 %v2046
        %v2123 = vunpack.c.h.b16 %v2046
        %v2124 = vunpack.c.l.b16 %v2047
        %v2125 = vunpack.c.h.b16 %v2047
        %v2126 = vunpack.c.l.b16 %v2048
        %v2127 = vunpack.c.h.b16 %v2048
        %v2128 = vunpack.c.l.b16 %v2049
        %v2129 = vunpack.c.h.b16 %v2049
        %v2130 = vunpack.c.l.b16 %v2050
        %v2131 = vunpack.c.h.b16 %v2050
        %v2132 = vunpack.c.l.b16 %v2051
        %v2133 = vunpack.c.h.b16 %v2051
        %v2134 = vunpack.c.l.b16 %v2052
        %v2135 = vunpack.c.h.b16 %v2052
        %v2136 = vunpack.c.l.b16 %v2053
        %v2137 = vunpack.c.h.b16 %v2053
        %v2138 = vunpack.c.l.b16 %v2054
        %v2139 = vunpack.c.h.b16 %v2054
        %v2140 = vunpack.c.l.b16 %v2055
        %v2141 = vunpack.c.h.b16 %v2055
        %v2142 = vunpack.c.l.b16 %v2056
        %v2143 = vunpack.c.h.b16 %v2056
        %v2144 = vunpack.c.l.b16 %v2057
        %v2145 = vunpack.c.h.b16 %v2057
        %v2146 = vunpack.c.l.b16 %v2058
        %v2147 = vunpack.c.h.b16 %v2058
        %v2148 = vunpack.c.l.b16 %v2059
        %v2149 = vunpack.c.h.b16 %v2059
        %v2150 = vunpack.c.l.b16 %v2060
        %v2151 = vunpack.c.h.b16 %v2060
        %v2152 = vunpack.c.l.b16 %v2061
        %v2153 = vunpack.c.h.b16 %v2061
        %v2154 = vunpack.c.l.b16 %v2062
        %v2155 = vunpack.c.h.b16 %v2062
        %v2156 = vunpack.c.l.b16 %v2063
        %v2157 = vunpack.c.h.b16 %v2063
        %v2158 = vunpack.c.l.b16 %v2064
        %v2159 = vunpack.c.h.b16 %v2064
        %v2160 = vunpack.c.l.b16 %v2065
        %v2161 = vunpack.c.h.b16 %v2065
        %v2162 = vpack.c.b16 %v2102, %v2098
        %v2163 = vpack.c.b16 %v2103, %v2099
        %v2164 = vpack.c.b16 %v2104, %v2100
        %v2165 = vpack.c.b16 %v2105, %v2101
        %v2166 = vpack.c.b16 %v2110, %v2106
        %v2167 = vpack.c.b16 %v2111, %v2107
        %v2168 = vpack.c.b16 %v2112, %v2108
        %v2169 = vpack.c.b16 %v2113, %v2109
        %v2170 = vpack.c.b16 %v2118, %v2114
        %v2171 = vpack.c.b16 %v2119, %v2115
        %v2172 = vpack.c.b16 %v2120, %v2116
        %v2173 = vpack.c.b16 %v2121, %v2117
        %v2174 = vpack.c.b16 %v2126, %v2122
        %v2175 = vpack.c.b16 %v2127, %v2123
        %v2176 = vpack.c.b16 %v2128, %v2124
        %v2177 = vpack.c.b16 %v2129, %v2125
        %v2178 = vpack.c.b16 %v2134, %v2130
        %v2179 = vpack.c.b16 %v2135, %v2131
        %v2180 = vpack.c.b16 %v2136, %v2132
        %v2181 = vpack.c.b16 %v2137, %v2133
        %v2182 = vpack.c.b16 %v2142, %v2138
        %v2183 = vpack.c.b16 %v2143, %v2139
        %v2184 = vpack.c.b16 %v2144, %v2140
        %v2185 = vpack.c.b16 %v2145, %v2141
        %v2186 = vpack.c.b16 %v2150, %v2146
        %v2187 = vpack.c.b16 %v2151, %v2147
        %v2188 = vpack.c.b16 %v2152, %v2148
        %v2189 = vpack.c.b16 %v2153, %v2149
        %v2190 = vpack.c.b16 %v2158, %v2154
        %v2191 = vpack.c.b16 %v2159, %v2155
        %v2192 = vpack.c.b16 %v2160, %v2156
        %v2193 = vpack.c.b16 %v2161, %v2157
        %2226 = vmatpush.bf16.msra.mxu0 %v2190
        %2227 = vmatpush.bf16.msra.mxu0 %v2186
        %2228 = vmatpush.bf16.msra.mxu0 %v2182
        %2229 = vmatpush.bf16.msra.mxu0 %v2178
        %2230 = vmatpush.bf16.msra.mxu0 %v2174
        %2231 = vmatpush.bf16.msra.mxu0 %v2170
        %2232 = vmatpush.bf16.msra.mxu0 %v2166
        %2233 = vmatpush.bf16.msra.mxu0 %v2162
        %2234 = vmatmul.bf16.gmra.mxu0 %v2033
        %v2235 = vpop.f32.mrf.mxu0
        %v2236 = vadd.f32 0.0, %v2235
        %v2237 = vpop.f32.mrf.mxu0
        %v2238 = vadd.f32 0.0, %v2237
        %2239 = vdwg.mxu0
        %2240 = vmatpush.bf16.msra.mxu0 %v2191
        %2241 = vmatpush.bf16.msra.mxu0 %v2187
        %2242 = vmatpush.bf16.msra.mxu0 %v2183
        %2243 = vmatpush.bf16.msra.mxu0 %v2179
        %2244 = vmatpush.bf16.msra.mxu0 %v2175
        %2245 = vmatpush.bf16.msra.mxu0 %v2171
        %2246 = vmatpush.bf16.msra.mxu0 %v2167
        %2247 = vmatpush.bf16.msra.mxu0 %v2163
        %2248 = vmatmul.bf16.gmra.mxu0 %v2033
        %v2249 = vpop.f32.mrf.mxu0
        %v2250 = vadd.f32 0.0, %v2249
        %v2251 = vpop.f32.mrf.mxu0
        %v2252 = vadd.f32 0.0, %v2251
        %2253 = vdwg.mxu0
        %2254 = vmatpush.bf16.msra.mxu0 %v2192
        %2255 = vmatpush.bf16.msra.mxu0 %v2188
        %2256 = vmatpush.bf16.msra.mxu0 %v2184
        %2257 = vmatpush.bf16.msra.mxu0 %v2180
        %2258 = vmatpush.bf16.msra.mxu0 %v2176
        %2259 = vmatpush.bf16.msra.mxu0 %v2172
        %2260 = vmatpush.bf16.msra.mxu0 %v2168
        %2261 = vmatpush.bf16.msra.mxu0 %v2164
        %2262 = vmatmul.bf16.gmra.mxu0 %v2033
        %v2263 = vpop.f32.mrf.mxu0
        %v2264 = vadd.f32 0.0, %v2263
        %v2265 = vpop.f32.mrf.mxu0
        %v2266 = vadd.f32 0.0, %v2265
        %2267 = vdwg.mxu0
        %2268 = vmatpush.bf16.msra.mxu0 %v2193
        %2269 = vmatpush.bf16.msra.mxu0 %v2189
        %2270 = vmatpush.bf16.msra.mxu0 %v2185
        %2271 = vmatpush.bf16.msra.mxu0 %v2181
        %2272 = vmatpush.bf16.msra.mxu0 %v2177
        %2273 = vmatpush.bf16.msra.mxu0 %v2173
        %2274 = vmatpush.bf16.msra.mxu0 %v2169
        %2275 = vmatpush.bf16.msra.mxu0 %v2165
        %2276 = vmatmul.bf16.gmra.mxu0 %v2033
        %v2277 = vpop.f32.mrf.mxu0
        %v2278 = vadd.f32 0.0, %v2277
        %v2279 = vpop.f32.mrf.mxu0
        %v2280 = vadd.f32 0.0, %v2279
        %2281 = vdwg.mxu0
        %v2282 = vadd.f32 %v2023, %v2236
        %v2283 = vadd.f32 %v2024, %v2250
        %v2284 = vadd.f32 %v2025, %v2264
        %v2285 = vadd.f32 %v2026, %v2278
        %v2286 = vadd.f32 %v2027, %v2238
        %v2287 = vadd.f32 %v2028, %v2252
        %v2288 = vadd.f32 %v2029, %v2266
        %v2289 = vadd.f32 %v2030, %v2280
        %v2290 = vxor.u32 %v2282, 2147483648
        %v2291 = vxor.u32 %v2283, 2147483648
        %v2292 = vxor.u32 %v2286, 2147483648
        %v2293 = vxor.u32 %v2287, 2147483648
        %v2294 = vmul.f32 %v2290, 1.442695
        %v2295 = vpow.pop %v2294
        %v2296 = vmul.f32 %v2291, 1.442695
        %v2297 = vpow.pop %v2296
        %v2298 = vmul.f32 %v2292, 1.442695
        %v2299 = vpow.pop %v2298
        %v2300 = vmul.f32 %v2293, 1.442695
        %v2301 = vpow.pop %v2300
        %v2302 = vadd.f32 %v2295, 1.0
        %v2303 = vadd.f32 %v2297, 1.0
        %v2304 = vadd.f32 %v2299, 1.0
        %v2305 = vadd.f32 %v2301, 1.0
        %v2306 = vrcp.pop %v2302
        %v2307 = vmul.f32 %v2302, %v2306
        %v2308 = vsub.f32 1.0, %v2307
        %v2309 = vmul.f32 %v2306, %v2308
        %v2310 = vadd.f32 %v2306, %v2309
        %vm2311 = vweird.f32 %v2302
        %vm2312 = vweird.f32 %v2306
        %vm2313 = vmor %vm2311, %vm2312
        %v2314 = vsel %vm2313, %v2306, %v2310
        %v2315 = vand.u32 2147483647, %v2302
        %vm2316 = vcmp.eq.f32.partialorder %v2315, 8.507059e+37
        %v2317 = vand.u32 %v2302, 2147483648
        %v2318 = vor.u32 1.1754944e-38, %v2317
        %v2319 = vsel %vm2316, %v2318, %v2314
        %v2320 = vmul.f32 1.0, %v2319
        %v2321 = vrcp.pop %v2303
        %v2322 = vmul.f32 %v2303, %v2321
        %v2323 = vsub.f32 1.0, %v2322
        %v2324 = vmul.f32 %v2321, %v2323
        %v2325 = vadd.f32 %v2321, %v2324
        %vm2326 = vweird.f32 %v2303
        %vm2327 = vweird.f32 %v2321
        %vm2328 = vmor %vm2326, %vm2327
        %v2329 = vsel %vm2328, %v2321, %v2325
        %v2330 = vand.u32 2147483647, %v2303
        %vm2331 = vcmp.eq.f32.partialorder %v2330, 8.507059e+37
        %v2332 = vand.u32 %v2303, 2147483648
        %v2333 = vor.u32 1.1754944e-38, %v2332
        %v2334 = vsel %vm2331, %v2333, %v2329
        %v2335 = vmul.f32 1.0, %v2334
        %v2336 = vrcp.pop %v2304
        %v2337 = vmul.f32 %v2304, %v2336
        %v2338 = vsub.f32 1.0, %v2337
        %v2339 = vmul.f32 %v2336, %v2338
        %v2340 = vadd.f32 %v2336, %v2339
        %vm2341 = vweird.f32 %v2304
        %vm2342 = vweird.f32 %v2336
        %vm2343 = vmor %vm2341, %vm2342
        %v2344 = vsel %vm2343, %v2336, %v2340
        %v2345 = vand.u32 2147483647, %v2304
        %vm2346 = vcmp.eq.f32.partialorder %v2345, 8.507059e+37
        %v2347 = vand.u32 %v2304, 2147483648
        %v2348 = vor.u32 1.1754944e-38, %v2347
        %v2349 = vsel %vm2346, %v2348, %v2344
        %v2350 = vmul.f32 1.0, %v2349
        %v2351 = vrcp.pop %v2305
        %v2352 = vmul.f32 %v2305, %v2351
        %v2353 = vsub.f32 1.0, %v2352
        %v2354 = vmul.f32 %v2351, %v2353
        %v2355 = vadd.f32 %v2351, %v2354
        %vm2356 = vweird.f32 %v2305
        %vm2357 = vweird.f32 %v2351
        %vm2358 = vmor %vm2356, %vm2357
        %v2359 = vsel %vm2358, %v2351, %v2355
        %v2360 = vand.u32 2147483647, %v2305
        %vm2361 = vcmp.eq.f32.partialorder %v2360, 8.507059e+37
        %v2362 = vand.u32 %v2305, 2147483648
        %v2363 = vor.u32 1.1754944e-38, %v2362
        %v2364 = vsel %vm2361, %v2363, %v2359
        %v2365 = vmul.f32 1.0, %v2364
        %v2366 = vtanh.pop %v2284
        %v2367 = vtanh.pop %v2288
        %v2368 = vxor.u32 %v2285, 2147483648
        %v2369 = vxor.u32 %v2289, 2147483648
        %v2370 = vmul.f32 %v2368, 1.442695
        %v2371 = vpow.pop %v2370
        %v2372 = vmul.f32 %v2369, 1.442695
        %v2373 = vpow.pop %v2372
        %v2374 = vadd.f32 %v2371, 1.0
        %v2375 = vadd.f32 %v2373, 1.0
        %v2376 = vrcp.pop %v2374
        %v2377 = vmul.f32 %v2374, %v2376
        %v2378 = vsub.f32 1.0, %v2377
        %v2379 = vmul.f32 %v2376, %v2378
        %v2380 = vadd.f32 %v2376, %v2379
        %vm2381 = vweird.f32 %v2374
        %vm2382 = vweird.f32 %v2376
        %vm2383 = vmor %vm2381, %vm2382
        %v2384 = vsel %vm2383, %v2376, %v2380
        %v2385 = vand.u32 2147483647, %v2374
        %vm2386 = vcmp.eq.f32.partialorder %v2385, 8.507059e+37
        %v2387 = vand.u32 %v2374, 2147483648
        %v2388 = vor.u32 1.1754944e-38, %v2387
        %v2389 = vsel %vm2386, %v2388, %v2384
        %v2390 = vmul.f32 1.0, %v2389
        %v2391 = vrcp.pop %v2375
        %v2392 = vmul.f32 %v2375, %v2391
        %v2393 = vsub.f32 1.0, %v2392
        %v2394 = vmul.f32 %v2391, %v2393
        %v2395 = vadd.f32 %v2391, %v2394
        %vm2396 = vweird.f32 %v2375
        %vm2397 = vweird.f32 %v2391
        %vm2398 = vmor %vm2396, %vm2397
        %v2399 = vsel %vm2398, %v2391, %v2395
        %v2400 = vand.u32 2147483647, %v2375
        %vm2401 = vcmp.eq.f32.partialorder %v2400, 8.507059e+37
        %v2402 = vand.u32 %v2375, 2147483648
        %v2403 = vor.u32 1.1754944e-38, %v2402
        %v2404 = vsel %vm2401, %v2403, %v2399
        %v2405 = vmul.f32 1.0, %v2404
        %v2406 = vld [vmem:[#allocation3] sm:$0xff]
        %v2407 = vld [vmem:[#allocation3 + $0x8] sm:$0xff]
        %v2408 = vmul.f32 %v2335, %v2406
        %v2409 = vmul.f32 %v2365, %v2407
        %v2410 = vmul.f32 %v2320, %v2366
        %v2411 = vmul.f32 %v2350, %v2367
        %v2412 = vadd.f32 %v2408, %v2410
        %v2413 = vadd.f32 %v2409, %v2411
        %v2414 = vtanh.pop %v2412
        %v2415 = vtanh.pop %v2413
        %v2416 = vmul.f32 %v2390, %v2414
        %v2417 = vmul.f32 %v2405, %v2415
        %2418 = vst [vmem:[#allocation3] sm:$0xff] %v2412
        %2419 = vst [vmem:[#allocation3 + $0x8] sm:$0xff] %v2413
        %2420 = vst [vmem:[#allocation2] sm:$0xff] %v2416
        %2421 = vst [vmem:[#allocation2 + $0x8] sm:$0xff] %v2417
        %v2422 = vpack.c.bf16 %v2416, %v2416
        %v2423 = vpack.c.bf16 %v2417, %v2417
        %s2424 = scalar_lea.vmem [#allocation5], 8
        %2425 = vst [vmem:[%s2424] sm:$0xf] %v2422
        %2426 = vst [vmem:[%s2424 + $0x4] sm:$0xf] %v2423
        %s2427 = smul.u32 4, 4
        %s2428 = smul.addr %s2427, 8
        %s2429 = scalar_lea.vmem [#allocation4], %s2428
        %v2430 = vld [vmem:[%s2429] sm:$0xff]
        %v2431 = vld [vmem:[%s2429 + $0x8] sm:$0xff]
        %v2432 = vld [vmem:[%s2429 + $0x10] sm:$0xff]
        %v2433 = vld [vmem:[%s2429 + $0x18] sm:$0xff]
        %v2434 = vld [vmem:[%s2429 + $0x20] sm:$0xff]
        %v2435 = vld [vmem:[%s2429 + $0x28] sm:$0xff]
        %v2436 = vld [vmem:[%s2429 + $0x30] sm:$0xff]
        %v2437 = vld [vmem:[%s2429 + $0x38] sm:$0xff]
        %v2438 = vld [vmem:[#allocation2] sm:$0xff]
        %v2439 = vld [vmem:[#allocation2 + $0x8] sm:$0xff]
        %v2440 = vpack.c.bf16 %v2439, %v2438
        %v2441 = vld [vmem:[%s475] sm:$0xff]
        %v2442 = vld [vmem:[%s475 + $0x8] sm:$0xff]
        %v2443 = vld [vmem:[%s475 + $0x10] sm:$0xff]
        %v2444 = vld [vmem:[%s475 + $0x18] sm:$0xff]
        %v2445 = vld [vmem:[%s475 + $0x20] sm:$0xff]
        %v2446 = vld [vmem:[%s475 + $0x28] sm:$0xff]
        %v2447 = vld [vmem:[%s475 + $0x30] sm:$0xff]
        %v2448 = vld [vmem:[%s475 + $0x38] sm:$0xff]
        %v2449 = vld [vmem:[%s475 + $0x40] sm:$0xff]
        %v2450 = vld [vmem:[%s475 + $0x48] sm:$0xff]
        %v2451 = vld [vmem:[%s475 + $0x50] sm:$0xff]
        %v2452 = vld [vmem:[%s475 + $0x58] sm:$0xff]
        %v2453 = vld [vmem:[%s475 + $0x60] sm:$0xff]
        %v2454 = vld [vmem:[%s475 + $0x68] sm:$0xff]
        %v2455 = vld [vmem:[%s475 + $0x70] sm:$0xff]
        %v2456 = vld [vmem:[%s475 + $0x78] sm:$0xff]
        %v2457 = vld [vmem:[%s475 + $0x80] sm:$0xff]
        %v2458 = vld [vmem:[%s475 + $0x88] sm:$0xff]
        %v2459 = vld [vmem:[%s475 + $0x90] sm:$0xff]
        %v2460 = vld [vmem:[%s475 + $0x98] sm:$0xff]
        %v2461 = vld [vmem:[%s475 + $0xa0] sm:$0xff]
        %v2462 = vld [vmem:[%s475 + $0xa8] sm:$0xff]
        %v2463 = vld [vmem:[%s475 + $0xb0] sm:$0xff]
        %v2464 = vld [vmem:[%s475 + $0xb8] sm:$0xff]
        %v2465 = vld [vmem:[%s475 + $0xc0] sm:$0xff]
        %v2466 = vld [vmem:[%s475 + $0xc8] sm:$0xff]
        %v2467 = vld [vmem:[%s475 + $0xd0] sm:$0xff]
        %v2468 = vld [vmem:[%s475 + $0xd8] sm:$0xff]
        %v2469 = vld [vmem:[%s475 + $0xe0] sm:$0xff]
        %v2470 = vld [vmem:[%s475 + $0xe8] sm:$0xff]
        %v2471 = vld [vmem:[%s475 + $0xf0] sm:$0xff]
        %v2472 = vld [vmem:[%s475 + $0xf8] sm:$0xff]
        %v2505 = vunpack.c.l.b16 %v2441
        %v2506 = vunpack.c.h.b16 %v2441
        %v2507 = vunpack.c.l.b16 %v2442
        %v2508 = vunpack.c.h.b16 %v2442
        %v2509 = vunpack.c.l.b16 %v2443
        %v2510 = vunpack.c.h.b16 %v2443
        %v2511 = vunpack.c.l.b16 %v2444
        %v2512 = vunpack.c.h.b16 %v2444
        %v2513 = vunpack.c.l.b16 %v2445
        %v2514 = vunpack.c.h.b16 %v2445
        %v2515 = vunpack.c.l.b16 %v2446
        %v2516 = vunpack.c.h.b16 %v2446
        %v2517 = vunpack.c.l.b16 %v2447
        %v2518 = vunpack.c.h.b16 %v2447
        %v2519 = vunpack.c.l.b16 %v2448
        %v2520 = vunpack.c.h.b16 %v2448
        %v2521 = vunpack.c.l.b16 %v2449
        %v2522 = vunpack.c.h.b16 %v2449
        %v2523 = vunpack.c.l.b16 %v2450
        %v2524 = vunpack.c.h.b16 %v2450
        %v2525 = vunpack.c.l.b16 %v2451
        %v2526 = vunpack.c.h.b16 %v2451
        %v2527 = vunpack.c.l.b16 %v2452
        %v2528 = vunpack.c.h.b16 %v2452
        %v2529 = vunpack.c.l.b16 %v2453
        %v2530 = vunpack.c.h.b16 %v2453
        %v2531 = vunpack.c.l.b16 %v2454
        %v2532 = vunpack.c.h.b16 %v2454
        %v2533 = vunpack.c.l.b16 %v2455
        %v2534 = vunpack.c.h.b16 %v2455
        %v2535 = vunpack.c.l.b16 %v2456
        %v2536 = vunpack.c.h.b16 %v2456
        %v2537 = vunpack.c.l.b16 %v2457
        %v2538 = vunpack.c.h.b16 %v2457
        %v2539 = vunpack.c.l.b16 %v2458
        %v2540 = vunpack.c.h.b16 %v2458
        %v2541 = vunpack.c.l.b16 %v2459
        %v2542 = vunpack.c.h.b16 %v2459
        %v2543 = vunpack.c.l.b16 %v2460
        %v2544 = vunpack.c.h.b16 %v2460
        %v2545 = vunpack.c.l.b16 %v2461
        %v2546 = vunpack.c.h.b16 %v2461
        %v2547 = vunpack.c.l.b16 %v2462
        %v2548 = vunpack.c.h.b16 %v2462
        %v2549 = vunpack.c.l.b16 %v2463
        %v2550 = vunpack.c.h.b16 %v2463
        %v2551 = vunpack.c.l.b16 %v2464
        %v2552 = vunpack.c.h.b16 %v2464
        %v2553 = vunpack.c.l.b16 %v2465
        %v2554 = vunpack.c.h.b16 %v2465
        %v2555 = vunpack.c.l.b16 %v2466
        %v2556 = vunpack.c.h.b16 %v2466
        %v2557 = vunpack.c.l.b16 %v2467
        %v2558 = vunpack.c.h.b16 %v2467
        %v2559 = vunpack.c.l.b16 %v2468
        %v2560 = vunpack.c.h.b16 %v2468
        %v2561 = vunpack.c.l.b16 %v2469
        %v2562 = vunpack.c.h.b16 %v2469
        %v2563 = vunpack.c.l.b16 %v2470
        %v2564 = vunpack.c.h.b16 %v2470
        %v2565 = vunpack.c.l.b16 %v2471
        %v2566 = vunpack.c.h.b16 %v2471
        %v2567 = vunpack.c.l.b16 %v2472
        %v2568 = vunpack.c.h.b16 %v2472
        %v2569 = vpack.c.b16 %v2509, %v2505
        %v2570 = vpack.c.b16 %v2510, %v2506
        %v2571 = vpack.c.b16 %v2511, %v2507
        %v2572 = vpack.c.b16 %v2512, %v2508
        %v2573 = vpack.c.b16 %v2517, %v2513
        %v2574 = vpack.c.b16 %v2518, %v2514
        %v2575 = vpack.c.b16 %v2519, %v2515
        %v2576 = vpack.c.b16 %v2520, %v2516
        %v2577 = vpack.c.b16 %v2525, %v2521
        %v2578 = vpack.c.b16 %v2526, %v2522
        %v2579 = vpack.c.b16 %v2527, %v2523
        %v2580 = vpack.c.b16 %v2528, %v2524
        %v2581 = vpack.c.b16 %v2533, %v2529
        %v2582 = vpack.c.b16 %v2534, %v2530
        %v2583 = vpack.c.b16 %v2535, %v2531
        %v2584 = vpack.c.b16 %v2536, %v2532
        %v2585 = vpack.c.b16 %v2541, %v2537
        %v2586 = vpack.c.b16 %v2542, %v2538
        %v2587 = vpack.c.b16 %v2543, %v2539
        %v2588 = vpack.c.b16 %v2544, %v2540
        %v2589 = vpack.c.b16 %v2549, %v2545
        %v2590 = vpack.c.b16 %v2550, %v2546
        %v2591 = vpack.c.b16 %v2551, %v2547
        %v2592 = vpack.c.b16 %v2552, %v2548
        %v2593 = vpack.c.b16 %v2557, %v2553
        %v2594 = vpack.c.b16 %v2558, %v2554
        %v2595 = vpack.c.b16 %v2559, %v2555
        %v2596 = vpack.c.b16 %v2560, %v2556
        %v2597 = vpack.c.b16 %v2565, %v2561
        %v2598 = vpack.c.b16 %v2566, %v2562
        %v2599 = vpack.c.b16 %v2567, %v2563
        %v2600 = vpack.c.b16 %v2568, %v2564
        %2633 = vmatpush.bf16.msra.mxu0 %v2597
        %2634 = vmatpush.bf16.msra.mxu0 %v2593
        %2635 = vmatpush.bf16.msra.mxu0 %v2589
        %2636 = vmatpush.bf16.msra.mxu0 %v2585
        %2637 = vmatpush.bf16.msra.mxu0 %v2581
        %2638 = vmatpush.bf16.msra.mxu0 %v2577
        %2639 = vmatpush.bf16.msra.mxu0 %v2573
        %2640 = vmatpush.bf16.msra.mxu0 %v2569
        %2641 = vmatmul.bf16.gmra.mxu0 %v2440
        %v2642 = vpop.f32.mrf.mxu0
        %v2643 = vadd.f32 0.0, %v2642
        %v2644 = vpop.f32.mrf.mxu0
        %v2645 = vadd.f32 0.0, %v2644
        %2646 = vdwg.mxu0
        %2647 = vmatpush.bf16.msra.mxu0 %v2598
        %2648 = vmatpush.bf16.msra.mxu0 %v2594
        %2649 = vmatpush.bf16.msra.mxu0 %v2590
        %2650 = vmatpush.bf16.msra.mxu0 %v2586
        %2651 = vmatpush.bf16.msra.mxu0 %v2582
        %2652 = vmatpush.bf16.msra.mxu0 %v2578
        %2653 = vmatpush.bf16.msra.mxu0 %v2574
        %2654 = vmatpush.bf16.msra.mxu0 %v2570
        %2655 = vmatmul.bf16.gmra.mxu0 %v2440
        %v2656 = vpop.f32.mrf.mxu0
        %v2657 = vadd.f32 0.0, %v2656
        %v2658 = vpop.f32.mrf.mxu0
        %v2659 = vadd.f32 0.0, %v2658
        %2660 = vdwg.mxu0
        %2661 = vmatpush.bf16.msra.mxu0 %v2599
        %2662 = vmatpush.bf16.msra.mxu0 %v2595
        %2663 = vmatpush.bf16.msra.mxu0 %v2591
        %2664 = vmatpush.bf16.msra.mxu0 %v2587
        %2665 = vmatpush.bf16.msra.mxu0 %v2583
        %2666 = vmatpush.bf16.msra.mxu0 %v2579
        %2667 = vmatpush.bf16.msra.mxu0 %v2575
        %2668 = vmatpush.bf16.msra.mxu0 %v2571
        %2669 = vmatmul.bf16.gmra.mxu0 %v2440
        %v2670 = vpop.f32.mrf.mxu0
        %v2671 = vadd.f32 0.0, %v2670
        %v2672 = vpop.f32.mrf.mxu0
        %v2673 = vadd.f32 0.0, %v2672
        %2674 = vdwg.mxu0
        %2675 = vmatpush.bf16.msra.mxu0 %v2600
        %2676 = vmatpush.bf16.msra.mxu0 %v2596
        %2677 = vmatpush.bf16.msra.mxu0 %v2592
        %2678 = vmatpush.bf16.msra.mxu0 %v2588
        %2679 = vmatpush.bf16.msra.mxu0 %v2584
        %2680 = vmatpush.bf16.msra.mxu0 %v2580
        %2681 = vmatpush.bf16.msra.mxu0 %v2576
        %2682 = vmatpush.bf16.msra.mxu0 %v2572
        %2683 = vmatmul.bf16.gmra.mxu0 %v2440
        %v2684 = vpop.f32.mrf.mxu0
        %v2685 = vadd.f32 0.0, %v2684
        %v2686 = vpop.f32.mrf.mxu0
        %v2687 = vadd.f32 0.0, %v2686
        %2688 = vdwg.mxu0
        %v2689 = vadd.f32 %v2430, %v2643
        %v2690 = vadd.f32 %v2431, %v2657
        %v2691 = vadd.f32 %v2432, %v2671
        %v2692 = vadd.f32 %v2433, %v2685
        %v2693 = vadd.f32 %v2434, %v2645
        %v2694 = vadd.f32 %v2435, %v2659
        %v2695 = vadd.f32 %v2436, %v2673
        %v2696 = vadd.f32 %v2437, %v2687
        %v2697 = vxor.u32 %v2689, 2147483648
        %v2698 = vxor.u32 %v2690, 2147483648
        %v2699 = vxor.u32 %v2693, 2147483648
        %v2700 = vxor.u32 %v2694, 2147483648
        %v2701 = vmul.f32 %v2697, 1.442695
        %v2702 = vpow.pop %v2701
        %v2703 = vmul.f32 %v2698, 1.442695
        %v2704 = vpow.pop %v2703
        %v2705 = vmul.f32 %v2699, 1.442695
        %v2706 = vpow.pop %v2705
        %v2707 = vmul.f32 %v2700, 1.442695
        %v2708 = vpow.pop %v2707
        %v2709 = vadd.f32 %v2702, 1.0
        %v2710 = vadd.f32 %v2704, 1.0
        %v2711 = vadd.f32 %v2706, 1.0
        %v2712 = vadd.f32 %v2708, 1.0
        %v2713 = vrcp.pop %v2709
        %v2714 = vmul.f32 %v2709, %v2713
        %v2715 = vsub.f32 1.0, %v2714
        %v2716 = vmul.f32 %v2713, %v2715
        %v2717 = vadd.f32 %v2713, %v2716
        %vm2718 = vweird.f32 %v2709
        %vm2719 = vweird.f32 %v2713
        %vm2720 = vmor %vm2718, %vm2719
        %v2721 = vsel %vm2720, %v2713, %v2717
        %v2722 = vand.u32 2147483647, %v2709
        %vm2723 = vcmp.eq.f32.partialorder %v2722, 8.507059e+37
        %v2724 = vand.u32 %v2709, 2147483648
        %v2725 = vor.u32 1.1754944e-38, %v2724
        %v2726 = vsel %vm2723, %v2725, %v2721
        %v2727 = vmul.f32 1.0, %v2726
        %v2728 = vrcp.pop %v2710
        %v2729 = vmul.f32 %v2710, %v2728
        %v2730 = vsub.f32 1.0, %v2729
        %v2731 = vmul.f32 %v2728, %v2730
        %v2732 = vadd.f32 %v2728, %v2731
        %vm2733 = vweird.f32 %v2710
        %vm2734 = vweird.f32 %v2728
        %vm2735 = vmor %vm2733, %vm2734
        %v2736 = vsel %vm2735, %v2728, %v2732
        %v2737 = vand.u32 2147483647, %v2710
        %vm2738 = vcmp.eq.f32.partialorder %v2737, 8.507059e+37
        %v2739 = vand.u32 %v2710, 2147483648
        %v2740 = vor.u32 1.1754944e-38, %v2739
        %v2741 = vsel %vm2738, %v2740, %v2736
        %v2742 = vmul.f32 1.0, %v2741
        %v2743 = vrcp.pop %v2711
        %v2744 = vmul.f32 %v2711, %v2743
        %v2745 = vsub.f32 1.0, %v2744
        %v2746 = vmul.f32 %v2743, %v2745
        %v2747 = vadd.f32 %v2743, %v2746
        %vm2748 = vweird.f32 %v2711
        %vm2749 = vweird.f32 %v2743
        %vm2750 = vmor %vm2748, %vm2749
        %v2751 = vsel %vm2750, %v2743, %v2747
        %v2752 = vand.u32 2147483647, %v2711
        %vm2753 = vcmp.eq.f32.partialorder %v2752, 8.507059e+37
        %v2754 = vand.u32 %v2711, 2147483648
        %v2755 = vor.u32 1.1754944e-38, %v2754
        %v2756 = vsel %vm2753, %v2755, %v2751
        %v2757 = vmul.f32 1.0, %v2756
        %v2758 = vrcp.pop %v2712
        %v2759 = vmul.f32 %v2712, %v2758
        %v2760 = vsub.f32 1.0, %v2759
        %v2761 = vmul.f32 %v2758, %v2760
        %v2762 = vadd.f32 %v2758, %v2761
        %vm2763 = vweird.f32 %v2712
        %vm2764 = vweird.f32 %v2758
        %vm2765 = vmor %vm2763, %vm2764
        %v2766 = vsel %vm2765, %v2758, %v2762
        %v2767 = vand.u32 2147483647, %v2712
        %vm2768 = vcmp.eq.f32.partialorder %v2767, 8.507059e+37
        %v2769 = vand.u32 %v2712, 2147483648
        %v2770 = vor.u32 1.1754944e-38, %v2769
        %v2771 = vsel %vm2768, %v2770, %v2766
        %v2772 = vmul.f32 1.0, %v2771
        %v2773 = vtanh.pop %v2691
        %v2774 = vtanh.pop %v2695
        %v2775 = vxor.u32 %v2692, 2147483648
        %v2776 = vxor.u32 %v2696, 2147483648
        %v2777 = vmul.f32 %v2775, 1.442695
        %v2778 = vpow.pop %v2777
        %v2779 = vmul.f32 %v2776, 1.442695
        %v2780 = vpow.pop %v2779
        %v2781 = vadd.f32 %v2778, 1.0
        %v2782 = vadd.f32 %v2780, 1.0
        %v2783 = vrcp.pop %v2781
        %v2784 = vmul.f32 %v2781, %v2783
        %v2785 = vsub.f32 1.0, %v2784
        %v2786 = vmul.f32 %v2783, %v2785
        %v2787 = vadd.f32 %v2783, %v2786
        %vm2788 = vweird.f32 %v2781
        %vm2789 = vweird.f32 %v2783
        %vm2790 = vmor %vm2788, %vm2789
        %v2791 = vsel %vm2790, %v2783, %v2787
        %v2792 = vand.u32 2147483647, %v2781
        %vm2793 = vcmp.eq.f32.partialorder %v2792, 8.507059e+37
        %v2794 = vand.u32 %v2781, 2147483648
        %v2795 = vor.u32 1.1754944e-38, %v2794
        %v2796 = vsel %vm2793, %v2795, %v2791
        %v2797 = vmul.f32 1.0, %v2796
        %v2798 = vrcp.pop %v2782
        %v2799 = vmul.f32 %v2782, %v2798
        %v2800 = vsub.f32 1.0, %v2799
        %v2801 = vmul.f32 %v2798, %v2800
        %v2802 = vadd.f32 %v2798, %v2801
        %vm2803 = vweird.f32 %v2782
        %vm2804 = vweird.f32 %v2798
        %vm2805 = vmor %vm2803, %vm2804
        %v2806 = vsel %vm2805, %v2798, %v2802
        %v2807 = vand.u32 2147483647, %v2782
        %vm2808 = vcmp.eq.f32.partialorder %v2807, 8.507059e+37
        %v2809 = vand.u32 %v2782, 2147483648
        %v2810 = vor.u32 1.1754944e-38, %v2809
        %v2811 = vsel %vm2808, %v2810, %v2806
        %v2812 = vmul.f32 1.0, %v2811
        %v2813 = vld [vmem:[#allocation3] sm:$0xff]
        %v2814 = vld [vmem:[#allocation3 + $0x8] sm:$0xff]
        %v2815 = vmul.f32 %v2742, %v2813
        %v2816 = vmul.f32 %v2772, %v2814
        %v2817 = vmul.f32 %v2727, %v2773
        %v2818 = vmul.f32 %v2757, %v2774
        %v2819 = vadd.f32 %v2815, %v2817
        %v2820 = vadd.f32 %v2816, %v2818
        %v2821 = vtanh.pop %v2819
        %v2822 = vtanh.pop %v2820
        %v2823 = vmul.f32 %v2797, %v2821
        %v2824 = vmul.f32 %v2812, %v2822
        %2825 = vst [vmem:[#allocation3] sm:$0xff] %v2819
        %2826 = vst [vmem:[#allocation3 + $0x8] sm:$0xff] %v2820
        %2827 = vst [vmem:[#allocation2] sm:$0xff] %v2823
        %2828 = vst [vmem:[#allocation2 + $0x8] sm:$0xff] %v2824
        %v2829 = vpack.c.bf16 %v2823, %v2823
        %v2830 = vpack.c.bf16 %v2824, %v2824
        %s2831 = scalar_lea.vmem [#allocation5], 16
        %2832 = vst [vmem:[%s2831] sm:$0xf] %v2829
        %2833 = vst [vmem:[%s2831 + $0x4] sm:$0xf] %v2830
        %s2834 = smul.u32 6, 4
        %s2835 = smul.addr %s2834, 8
        %s2836 = scalar_lea.vmem [#allocation4], %s2835
        %v2837 = vld [vmem:[%s2836] sm:$0xff]
        %v2838 = vld [vmem:[%s2836 + $0x8] sm:$0xff]
        %v2839 = vld [vmem:[%s2836 + $0x10] sm:$0xff]
        %v2840 = vld [vmem:[%s2836 + $0x18] sm:$0xff]
        %v2841 = vld [vmem:[%s2836 + $0x20] sm:$0xff]
        %v2842 = vld [vmem:[%s2836 + $0x28] sm:$0xff]
        %v2843 = vld [vmem:[%s2836 + $0x30] sm:$0xff]
        %v2844 = vld [vmem:[%s2836 + $0x38] sm:$0xff]
        %v2845 = vld [vmem:[#allocation2] sm:$0xff]
        %v2846 = vld [vmem:[#allocation2 + $0x8] sm:$0xff]
        %v2847 = vpack.c.bf16 %v2846, %v2845
        %v2848 = vld [vmem:[%s475] sm:$0xff]
        %v2849 = vld [vmem:[%s475 + $0x8] sm:$0xff]
        %v2850 = vld [vmem:[%s475 + $0x10] sm:$0xff]
        %v2851 = vld [vmem:[%s475 + $0x18] sm:$0xff]
        %v2852 = vld [vmem:[%s475 + $0x20] sm:$0xff]
        %v2853 = vld [vmem:[%s475 + $0x28] sm:$0xff]
        %v2854 = vld [vmem:[%s475 + $0x30] sm:$0xff]
        %v2855 = vld [vmem:[%s475 + $0x38] sm:$0xff]
        %v2856 = vld [vmem:[%s475 + $0x40] sm:$0xff]
        %v2857 = vld [vmem:[%s475 + $0x48] sm:$0xff]
        %v2858 = vld [vmem:[%s475 + $0x50] sm:$0xff]
        %v2859 = vld [vmem:[%s475 + $0x58] sm:$0xff]
        %v2860 = vld [vmem:[%s475 + $0x60] sm:$0xff]
        %v2861 = vld [vmem:[%s475 + $0x68] sm:$0xff]
        %v2862 = vld [vmem:[%s475 + $0x70] sm:$0xff]
        %v2863 = vld [vmem:[%s475 + $0x78] sm:$0xff]
        %v2864 = vld [vmem:[%s475 + $0x80] sm:$0xff]
        %v2865 = vld [vmem:[%s475 + $0x88] sm:$0xff]
        %v2866 = vld [vmem:[%s475 + $0x90] sm:$0xff]
        %v2867 = vld [vmem:[%s475 + $0x98] sm:$0xff]
        %v2868 = vld [vmem:[%s475 + $0xa0] sm:$0xff]
        %v2869 = vld [vmem:[%s475 + $0xa8] sm:$0xff]
        %v2870 = vld [vmem:[%s475 + $0xb0] sm:$0xff]
        %v2871 = vld [vmem:[%s475 + $0xb8] sm:$0xff]
        %v2872 = vld [vmem:[%s475 + $0xc0] sm:$0xff]
        %v2873 = vld [vmem:[%s475 + $0xc8] sm:$0xff]
        %v2874 = vld [vmem:[%s475 + $0xd0] sm:$0xff]
        %v2875 = vld [vmem:[%s475 + $0xd8] sm:$0xff]
        %v2876 = vld [vmem:[%s475 + $0xe0] sm:$0xff]
        %v2877 = vld [vmem:[%s475 + $0xe8] sm:$0xff]
        %v2878 = vld [vmem:[%s475 + $0xf0] sm:$0xff]
        %v2879 = vld [vmem:[%s475 + $0xf8] sm:$0xff]
        %v2912 = vunpack.c.l.b16 %v2848
        %v2913 = vunpack.c.h.b16 %v2848
        %v2914 = vunpack.c.l.b16 %v2849
        %v2915 = vunpack.c.h.b16 %v2849
        %v2916 = vunpack.c.l.b16 %v2850
        %v2917 = vunpack.c.h.b16 %v2850
        %v2918 = vunpack.c.l.b16 %v2851
        %v2919 = vunpack.c.h.b16 %v2851
        %v2920 = vunpack.c.l.b16 %v2852
        %v2921 = vunpack.c.h.b16 %v2852
        %v2922 = vunpack.c.l.b16 %v2853
        %v2923 = vunpack.c.h.b16 %v2853
        %v2924 = vunpack.c.l.b16 %v2854
        %v2925 = vunpack.c.h.b16 %v2854
        %v2926 = vunpack.c.l.b16 %v2855
        %v2927 = vunpack.c.h.b16 %v2855
        %v2928 = vunpack.c.l.b16 %v2856
        %v2929 = vunpack.c.h.b16 %v2856
        %v2930 = vunpack.c.l.b16 %v2857
        %v2931 = vunpack.c.h.b16 %v2857
        %v2932 = vunpack.c.l.b16 %v2858
        %v2933 = vunpack.c.h.b16 %v2858
        %v2934 = vunpack.c.l.b16 %v2859
        %v2935 = vunpack.c.h.b16 %v2859
        %v2936 = vunpack.c.l.b16 %v2860
        %v2937 = vunpack.c.h.b16 %v2860
        %v2938 = vunpack.c.l.b16 %v2861
        %v2939 = vunpack.c.h.b16 %v2861
        %v2940 = vunpack.c.l.b16 %v2862
        %v2941 = vunpack.c.h.b16 %v2862
        %v2942 = vunpack.c.l.b16 %v2863
        %v2943 = vunpack.c.h.b16 %v2863
        %v2944 = vunpack.c.l.b16 %v2864
        %v2945 = vunpack.c.h.b16 %v2864
        %v2946 = vunpack.c.l.b16 %v2865
        %v2947 = vunpack.c.h.b16 %v2865
        %v2948 = vunpack.c.l.b16 %v2866
        %v2949 = vunpack.c.h.b16 %v2866
        %v2950 = vunpack.c.l.b16 %v2867
        %v2951 = vunpack.c.h.b16 %v2867
        %v2952 = vunpack.c.l.b16 %v2868
        %v2953 = vunpack.c.h.b16 %v2868
        %v2954 = vunpack.c.l.b16 %v2869
        %v2955 = vunpack.c.h.b16 %v2869
        %v2956 = vunpack.c.l.b16 %v2870
        %v2957 = vunpack.c.h.b16 %v2870
        %v2958 = vunpack.c.l.b16 %v2871
        %v2959 = vunpack.c.h.b16 %v2871
        %v2960 = vunpack.c.l.b16 %v2872
        %v2961 = vunpack.c.h.b16 %v2872
        %v2962 = vunpack.c.l.b16 %v2873
        %v2963 = vunpack.c.h.b16 %v2873
        %v2964 = vunpack.c.l.b16 %v2874
        %v2965 = vunpack.c.h.b16 %v2874
        %v2966 = vunpack.c.l.b16 %v2875
        %v2967 = vunpack.c.h.b16 %v2875
        %v2968 = vunpack.c.l.b16 %v2876
        %v2969 = vunpack.c.h.b16 %v2876
        %v2970 = vunpack.c.l.b16 %v2877
        %v2971 = vunpack.c.h.b16 %v2877
        %v2972 = vunpack.c.l.b16 %v2878
        %v2973 = vunpack.c.h.b16 %v2878
        %v2974 = vunpack.c.l.b16 %v2879
        %v2975 = vunpack.c.h.b16 %v2879
        %v2976 = vpack.c.b16 %v2916, %v2912
        %v2977 = vpack.c.b16 %v2917, %v2913
        %v2978 = vpack.c.b16 %v2918, %v2914
        %v2979 = vpack.c.b16 %v2919, %v2915
        %v2980 = vpack.c.b16 %v2924, %v2920
        %v2981 = vpack.c.b16 %v2925, %v2921
        %v2982 = vpack.c.b16 %v2926, %v2922
        %v2983 = vpack.c.b16 %v2927, %v2923
        %v2984 = vpack.c.b16 %v2932, %v2928
        %v2985 = vpack.c.b16 %v2933, %v2929
        %v2986 = vpack.c.b16 %v2934, %v2930
        %v2987 = vpack.c.b16 %v2935, %v2931
        %v2988 = vpack.c.b16 %v2940, %v2936
        %v2989 = vpack.c.b16 %v2941, %v2937
        %v2990 = vpack.c.b16 %v2942, %v2938
        %v2991 = vpack.c.b16 %v2943, %v2939
        %v2992 = vpack.c.b16 %v2948, %v2944
        %v2993 = vpack.c.b16 %v2949, %v2945
        %v2994 = vpack.c.b16 %v2950, %v2946
        %v2995 = vpack.c.b16 %v2951, %v2947
        %v2996 = vpack.c.b16 %v2956, %v2952
        %v2997 = vpack.c.b16 %v2957, %v2953
        %v2998 = vpack.c.b16 %v2958, %v2954
        %v2999 = vpack.c.b16 %v2959, %v2955
        %v3000 = vpack.c.b16 %v2964, %v2960
        %v3001 = vpack.c.b16 %v2965, %v2961
        %v3002 = vpack.c.b16 %v2966, %v2962
        %v3003 = vpack.c.b16 %v2967, %v2963
        %v3004 = vpack.c.b16 %v2972, %v2968
        %v3005 = vpack.c.b16 %v2973, %v2969
        %v3006 = vpack.c.b16 %v2974, %v2970
        %v3007 = vpack.c.b16 %v2975, %v2971
        %3040 = vmatpush.bf16.msra.mxu0 %v3004
        %3041 = vmatpush.bf16.msra.mxu0 %v3000
        %3042 = vmatpush.bf16.msra.mxu0 %v2996
        %3043 = vmatpush.bf16.msra.mxu0 %v2992
        %3044 = vmatpush.bf16.msra.mxu0 %v2988
        %3045 = vmatpush.bf16.msra.mxu0 %v2984
        %3046 = vmatpush.bf16.msra.mxu0 %v2980
        %3047 = vmatpush.bf16.msra.mxu0 %v2976
        %3048 = vmatmul.bf16.gmra.mxu0 %v2847
        %v3049 = vpop.f32.mrf.mxu0
        %v3050 = vadd.f32 0.0, %v3049
        %v3051 = vpop.f32.mrf.mxu0
        %v3052 = vadd.f32 0.0, %v3051
        %3053 = vdwg.mxu0
        %3054 = vmatpush.bf16.msra.mxu0 %v3005
        %3055 = vmatpush.bf16.msra.mxu0 %v3001
        %3056 = vmatpush.bf16.msra.mxu0 %v2997
        %3057 = vmatpush.bf16.msra.mxu0 %v2993
        %3058 = vmatpush.bf16.msra.mxu0 %v2989
        %3059 = vmatpush.bf16.msra.mxu0 %v2985
        %3060 = vmatpush.bf16.msra.mxu0 %v2981
        %3061 = vmatpush.bf16.msra.mxu0 %v2977
        %3062 = vmatmul.bf16.gmra.mxu0 %v2847
        %v3063 = vpop.f32.mrf.mxu0
        %v3064 = vadd.f32 0.0, %v3063
        %v3065 = vpop.f32.mrf.mxu0
        %v3066 = vadd.f32 0.0, %v3065
        %3067 = vdwg.mxu0
        %3068 = vmatpush.bf16.msra.mxu0 %v3006
        %3069 = vmatpush.bf16.msra.mxu0 %v3002
        %3070 = vmatpush.bf16.msra.mxu0 %v2998
        %3071 = vmatpush.bf16.msra.mxu0 %v2994
        %3072 = vmatpush.bf16.msra.mxu0 %v2990
        %3073 = vmatpush.bf16.msra.mxu0 %v2986
        %3074 = vmatpush.bf16.msra.mxu0 %v2982
        %3075 = vmatpush.bf16.msra.mxu0 %v2978
        %3076 = vmatmul.bf16.gmra.mxu0 %v2847
        %v3077 = vpop.f32.mrf.mxu0
        %v3078 = vadd.f32 0.0, %v3077
        %v3079 = vpop.f32.mrf.mxu0
        %v3080 = vadd.f32 0.0, %v3079
        %3081 = vdwg.mxu0
        %3082 = vmatpush.bf16.msra.mxu0 %v3007
        %3083 = vmatpush.bf16.msra.mxu0 %v3003
        %3084 = vmatpush.bf16.msra.mxu0 %v2999
        %3085 = vmatpush.bf16.msra.mxu0 %v2995
        %3086 = vmatpush.bf16.msra.mxu0 %v2991
        %3087 = vmatpush.bf16.msra.mxu0 %v2987
        %3088 = vmatpush.bf16.msra.mxu0 %v2983
        %3089 = vmatpush.bf16.msra.mxu0 %v2979
        %3090 = vmatmul.bf16.gmra.mxu0 %v2847
        %v3091 = vpop.f32.mrf.mxu0
        %v3092 = vadd.f32 0.0, %v3091
        %v3093 = vpop.f32.mrf.mxu0
        %v3094 = vadd.f32 0.0, %v3093
        %3095 = vdwg.mxu0
        %v3096 = vadd.f32 %v2837, %v3050
        %v3097 = vadd.f32 %v2838, %v3064
        %v3098 = vadd.f32 %v2839, %v3078
        %v3099 = vadd.f32 %v2840, %v3092
        %v3100 = vadd.f32 %v2841, %v3052
        %v3101 = vadd.f32 %v2842, %v3066
        %v3102 = vadd.f32 %v2843, %v3080
        %v3103 = vadd.f32 %v2844, %v3094
        %v3104 = vxor.u32 %v3096, 2147483648
        %v3105 = vxor.u32 %v3097, 2147483648
        %v3106 = vxor.u32 %v3100, 2147483648
        %v3107 = vxor.u32 %v3101, 2147483648
        %v3108 = vmul.f32 %v3104, 1.442695
        %v3109 = vpow.pop %v3108
        %v3110 = vmul.f32 %v3105, 1.442695
        %v3111 = vpow.pop %v3110
        %v3112 = vmul.f32 %v3106, 1.442695
        %v3113 = vpow.pop %v3112
        %v3114 = vmul.f32 %v3107, 1.442695
        %v3115 = vpow.pop %v3114
        %v3116 = vadd.f32 %v3109, 1.0
        %v3117 = vadd.f32 %v3111, 1.0
        %v3118 = vadd.f32 %v3113, 1.0
        %v3119 = vadd.f32 %v3115, 1.0
        %v3120 = vrcp.pop %v3116
        %v3121 = vmul.f32 %v3116, %v3120
        %v3122 = vsub.f32 1.0, %v3121
        %v3123 = vmul.f32 %v3120, %v3122
        %v3124 = vadd.f32 %v3120, %v3123
        %vm3125 = vweird.f32 %v3116
        %vm3126 = vweird.f32 %v3120
        %vm3127 = vmor %vm3125, %vm3126
        %v3128 = vsel %vm3127, %v3120, %v3124
        %v3129 = vand.u32 2147483647, %v3116
        %vm3130 = vcmp.eq.f32.partialorder %v3129, 8.507059e+37
        %v3131 = vand.u32 %v3116, 2147483648
        %v3132 = vor.u32 1.1754944e-38, %v3131
        %v3133 = vsel %vm3130, %v3132, %v3128
        %v3134 = vmul.f32 1.0, %v3133
        %v3135 = vrcp.pop %v3117
        %v3136 = vmul.f32 %v3117, %v3135
        %v3137 = vsub.f32 1.0, %v3136
        %v3138 = vmul.f32 %v3135, %v3137
        %v3139 = vadd.f32 %v3135, %v3138
        %vm3140 = vweird.f32 %v3117
        %vm3141 = vweird.f32 %v3135
        %vm3142 = vmor %vm3140, %vm3141
        %v3143 = vsel %vm3142, %v3135, %v3139
        %v3144 = vand.u32 2147483647, %v3117
        %vm3145 = vcmp.eq.f32.partialorder %v3144, 8.507059e+37
        %v3146 = vand.u32 %v3117, 2147483648
        %v3147 = vor.u32 1.1754944e-38, %v3146
        %v3148 = vsel %vm3145, %v3147, %v3143
        %v3149 = vmul.f32 1.0, %v3148
        %v3150 = vrcp.pop %v3118
        %v3151 = vmul.f32 %v3118, %v3150
        %v3152 = vsub.f32 1.0, %v3151
        %v3153 = vmul.f32 %v3150, %v3152
        %v3154 = vadd.f32 %v3150, %v3153
        %vm3155 = vweird.f32 %v3118
        %vm3156 = vweird.f32 %v3150
        %vm3157 = vmor %vm3155, %vm3156
        %v3158 = vsel %vm3157, %v3150, %v3154
        %v3159 = vand.u32 2147483647, %v3118
        %vm3160 = vcmp.eq.f32.partialorder %v3159, 8.507059e+37
        %v3161 = vand.u32 %v3118, 2147483648
        %v3162 = vor.u32 1.1754944e-38, %v3161
        %v3163 = vsel %vm3160, %v3162, %v3158
        %v3164 = vmul.f32 1.0, %v3163
        %v3165 = vrcp.pop %v3119
        %v3166 = vmul.f32 %v3119, %v3165
        %v3167 = vsub.f32 1.0, %v3166
        %v3168 = vmul.f32 %v3165, %v3167
        %v3169 = vadd.f32 %v3165, %v3168
        %vm3170 = vweird.f32 %v3119
        %vm3171 = vweird.f32 %v3165
        %vm3172 = vmor %vm3170, %vm3171
        %v3173 = vsel %vm3172, %v3165, %v3169
        %v3174 = vand.u32 2147483647, %v3119
        %vm3175 = vcmp.eq.f32.partialorder %v3174, 8.507059e+37
        %v3176 = vand.u32 %v3119, 2147483648
        %v3177 = vor.u32 1.1754944e-38, %v3176
        %v3178 = vsel %vm3175, %v3177, %v3173
        %v3179 = vmul.f32 1.0, %v3178
        %v3180 = vtanh.pop %v3098
        %v3181 = vtanh.pop %v3102
        %v3182 = vxor.u32 %v3099, 2147483648
        %v3183 = vxor.u32 %v3103, 2147483648
        %v3184 = vmul.f32 %v3182, 1.442695
        %v3185 = vpow.pop %v3184
        %v3186 = vmul.f32 %v3183, 1.442695
        %v3187 = vpow.pop %v3186
        %v3188 = vadd.f32 %v3185, 1.0
        %v3189 = vadd.f32 %v3187, 1.0
        %v3190 = vrcp.pop %v3188
        %v3191 = vmul.f32 %v3188, %v3190
        %v3192 = vsub.f32 1.0, %v3191
        %v3193 = vmul.f32 %v3190, %v3192
        %v3194 = vadd.f32 %v3190, %v3193
        %vm3195 = vweird.f32 %v3188
        %vm3196 = vweird.f32 %v3190
        %vm3197 = vmor %vm3195, %vm3196
        %v3198 = vsel %vm3197, %v3190, %v3194
        %v3199 = vand.u32 2147483647, %v3188
        %vm3200 = vcmp.eq.f32.partialorder %v3199, 8.507059e+37
        %v3201 = vand.u32 %v3188, 2147483648
        %v3202 = vor.u32 1.1754944e-38, %v3201
        %v3203 = vsel %vm3200, %v3202, %v3198
        %v3204 = vmul.f32 1.0, %v3203
        %v3205 = vrcp.pop %v3189
        %v3206 = vmul.f32 %v3189, %v3205
        %v3207 = vsub.f32 1.0, %v3206
        %v3208 = vmul.f32 %v3205, %v3207
        %v3209 = vadd.f32 %v3205, %v3208
        %vm3210 = vweird.f32 %v3189
        %vm3211 = vweird.f32 %v3205
        %vm3212 = vmor %vm3210, %vm3211
        %v3213 = vsel %vm3212, %v3205, %v3209
        %v3214 = vand.u32 2147483647, %v3189
        %vm3215 = vcmp.eq.f32.partialorder %v3214, 8.507059e+37
        %v3216 = vand.u32 %v3189, 2147483648
        %v3217 = vor.u32 1.1754944e-38, %v3216
        %v3218 = vsel %vm3215, %v3217, %v3213
        %v3219 = vmul.f32 1.0, %v3218
        %v3220 = vld [vmem:[#allocation3] sm:$0xff]
        %v3221 = vld [vmem:[#allocation3 + $0x8] sm:$0xff]
        %v3222 = vmul.f32 %v3149, %v3220
        %v3223 = vmul.f32 %v3179, %v3221
        %v3224 = vmul.f32 %v3134, %v3180
        %v3225 = vmul.f32 %v3164, %v3181
        %v3226 = vadd.f32 %v3222, %v3224
        %v3227 = vadd.f32 %v3223, %v3225
        %v3228 = vtanh.pop %v3226
        %v3229 = vtanh.pop %v3227
        %v3230 = vmul.f32 %v3204, %v3228
        %v3231 = vmul.f32 %v3219, %v3229
        %3232 = vst [vmem:[#allocation3] sm:$0xff] %v3226
        %3233 = vst [vmem:[#allocation3 + $0x8] sm:$0xff] %v3227
        %3234 = vst [vmem:[#allocation2] sm:$0xff] %v3230
        %3235 = vst [vmem:[#allocation2 + $0x8] sm:$0xff] %v3231
        %v3236 = vpack.c.bf16 %v3230, %v3230
        %v3237 = vpack.c.bf16 %v3231, %v3231
        %s3238 = scalar_lea.vmem [#allocation5], 24
        %3239 = vst [vmem:[%s3238] sm:$0xf] %v3236
        %3240 = vst [vmem:[%s3238 + $0x4] sm:$0xf] %v3237
        %s3241 = smul.u32 8, 4
        %s3242 = smul.addr %s3241, 8
        %s3243 = scalar_lea.vmem [#allocation4], %s3242
        %v3244 = vld [vmem:[%s3243] sm:$0xff]
        %v3245 = vld [vmem:[%s3243 + $0x8] sm:$0xff]
        %v3246 = vld [vmem:[%s3243 + $0x10] sm:$0xff]
        %v3247 = vld [vmem:[%s3243 + $0x18] sm:$0xff]
        %v3248 = vld [vmem:[%s3243 + $0x20] sm:$0xff]
        %v3249 = vld [vmem:[%s3243 + $0x28] sm:$0xff]
        %v3250 = vld [vmem:[%s3243 + $0x30] sm:$0xff]
        %v3251 = vld [vmem:[%s3243 + $0x38] sm:$0xff]
        %v3252 = vld [vmem:[#allocation2] sm:$0xff]
        %v3253 = vld [vmem:[#allocation2 + $0x8] sm:$0xff]
        %v3254 = vpack.c.bf16 %v3253, %v3252
        %v3255 = vld [vmem:[%s475] sm:$0xff]
        %v3256 = vld [vmem:[%s475 + $0x8] sm:$0xff]
        %v3257 = vld [vmem:[%s475 + $0x10] sm:$0xff]
        %v3258 = vld [vmem:[%s475 + $0x18] sm:$0xff]
        %v3259 = vld [vmem:[%s475 + $0x20] sm:$0xff]
        %v3260 = vld [vmem:[%s475 + $0x28] sm:$0xff]
        %v3261 = vld [vmem:[%s475 + $0x30] sm:$0xff]
        %v3262 = vld [vmem:[%s475 + $0x38] sm:$0xff]
        %v3263 = vld [vmem:[%s475 + $0x40] sm:$0xff]
        %v3264 = vld [vmem:[%s475 + $0x48] sm:$0xff]
        %v3265 = vld [vmem:[%s475 + $0x50] sm:$0xff]
        %v3266 = vld [vmem:[%s475 + $0x58] sm:$0xff]
        %v3267 = vld [vmem:[%s475 + $0x60] sm:$0xff]
        %v3268 = vld [vmem:[%s475 + $0x68] sm:$0xff]
        %v3269 = vld [vmem:[%s475 + $0x70] sm:$0xff]
        %v3270 = vld [vmem:[%s475 + $0x78] sm:$0xff]
        %v3271 = vld [vmem:[%s475 + $0x80] sm:$0xff]
        %v3272 = vld [vmem:[%s475 + $0x88] sm:$0xff]
        %v3273 = vld [vmem:[%s475 + $0x90] sm:$0xff]
        %v3274 = vld [vmem:[%s475 + $0x98] sm:$0xff]
        %v3275 = vld [vmem:[%s475 + $0xa0] sm:$0xff]
        %v3276 = vld [vmem:[%s475 + $0xa8] sm:$0xff]
        %v3277 = vld [vmem:[%s475 + $0xb0] sm:$0xff]
        %v3278 = vld [vmem:[%s475 + $0xb8] sm:$0xff]
        %v3279 = vld [vmem:[%s475 + $0xc0] sm:$0xff]
        %v3280 = vld [vmem:[%s475 + $0xc8] sm:$0xff]
        %v3281 = vld [vmem:[%s475 + $0xd0] sm:$0xff]
        %v3282 = vld [vmem:[%s475 + $0xd8] sm:$0xff]
        %v3283 = vld [vmem:[%s475 + $0xe0] sm:$0xff]
        %v3284 = vld [vmem:[%s475 + $0xe8] sm:$0xff]
        %v3285 = vld [vmem:[%s475 + $0xf0] sm:$0xff]
        %v3286 = vld [vmem:[%s475 + $0xf8] sm:$0xff]
        %v3319 = vunpack.c.l.b16 %v3255
        %v3320 = vunpack.c.h.b16 %v3255
        %v3321 = vunpack.c.l.b16 %v3256
        %v3322 = vunpack.c.h.b16 %v3256
        %v3323 = vunpack.c.l.b16 %v3257
        %v3324 = vunpack.c.h.b16 %v3257
        %v3325 = vunpack.c.l.b16 %v3258
        %v3326 = vunpack.c.h.b16 %v3258
        %v3327 = vunpack.c.l.b16 %v3259
        %v3328 = vunpack.c.h.b16 %v3259
        %v3329 = vunpack.c.l.b16 %v3260
        %v3330 = vunpack.c.h.b16 %v3260
        %v3331 = vunpack.c.l.b16 %v3261
        %v3332 = vunpack.c.h.b16 %v3261
        %v3333 = vunpack.c.l.b16 %v3262
        %v3334 = vunpack.c.h.b16 %v3262
        %v3335 = vunpack.c.l.b16 %v3263
        %v3336 = vunpack.c.h.b16 %v3263
        %v3337 = vunpack.c.l.b16 %v3264
        %v3338 = vunpack.c.h.b16 %v3264
        %v3339 = vunpack.c.l.b16 %v3265
        %v3340 = vunpack.c.h.b16 %v3265
        %v3341 = vunpack.c.l.b16 %v3266
        %v3342 = vunpack.c.h.b16 %v3266
        %v3343 = vunpack.c.l.b16 %v3267
        %v3344 = vunpack.c.h.b16 %v3267
        %v3345 = vunpack.c.l.b16 %v3268
        %v3346 = vunpack.c.h.b16 %v3268
        %v3347 = vunpack.c.l.b16 %v3269
        %v3348 = vunpack.c.h.b16 %v3269
        %v3349 = vunpack.c.l.b16 %v3270
        %v3350 = vunpack.c.h.b16 %v3270
        %v3351 = vunpack.c.l.b16 %v3271
        %v3352 = vunpack.c.h.b16 %v3271
        %v3353 = vunpack.c.l.b16 %v3272
        %v3354 = vunpack.c.h.b16 %v3272
        %v3355 = vunpack.c.l.b16 %v3273
        %v3356 = vunpack.c.h.b16 %v3273
        %v3357 = vunpack.c.l.b16 %v3274
        %v3358 = vunpack.c.h.b16 %v3274
        %v3359 = vunpack.c.l.b16 %v3275
        %v3360 = vunpack.c.h.b16 %v3275
        %v3361 = vunpack.c.l.b16 %v3276
        %v3362 = vunpack.c.h.b16 %v3276
        %v3363 = vunpack.c.l.b16 %v3277
        %v3364 = vunpack.c.h.b16 %v3277
        %v3365 = vunpack.c.l.b16 %v3278
        %v3366 = vunpack.c.h.b16 %v3278
        %v3367 = vunpack.c.l.b16 %v3279
        %v3368 = vunpack.c.h.b16 %v3279
        %v3369 = vunpack.c.l.b16 %v3280
        %v3370 = vunpack.c.h.b16 %v3280
        %v3371 = vunpack.c.l.b16 %v3281
        %v3372 = vunpack.c.h.b16 %v3281
        %v3373 = vunpack.c.l.b16 %v3282
        %v3374 = vunpack.c.h.b16 %v3282
        %v3375 = vunpack.c.l.b16 %v3283
        %v3376 = vunpack.c.h.b16 %v3283
        %v3377 = vunpack.c.l.b16 %v3284
        %v3378 = vunpack.c.h.b16 %v3284
        %v3379 = vunpack.c.l.b16 %v3285
        %v3380 = vunpack.c.h.b16 %v3285
        %v3381 = vunpack.c.l.b16 %v3286
        %v3382 = vunpack.c.h.b16 %v3286
        %v3383 = vpack.c.b16 %v3323, %v3319
        %v3384 = vpack.c.b16 %v3324, %v3320
        %v3385 = vpack.c.b16 %v3325, %v3321
        %v3386 = vpack.c.b16 %v3326, %v3322
        %v3387 = vpack.c.b16 %v3331, %v3327
        %v3388 = vpack.c.b16 %v3332, %v3328
        %v3389 = vpack.c.b16 %v3333, %v3329
        %v3390 = vpack.c.b16 %v3334, %v3330
        %v3391 = vpack.c.b16 %v3339, %v3335
        %v3392 = vpack.c.b16 %v3340, %v3336
        %v3393 = vpack.c.b16 %v3341, %v3337
        %v3394 = vpack.c.b16 %v3342, %v3338
        %v3395 = vpack.c.b16 %v3347, %v3343
        %v3396 = vpack.c.b16 %v3348, %v3344
        %v3397 = vpack.c.b16 %v3349, %v3345
        %v3398 = vpack.c.b16 %v3350, %v3346
        %v3399 = vpack.c.b16 %v3355, %v3351
        %v3400 = vpack.c.b16 %v3356, %v3352
        %v3401 = vpack.c.b16 %v3357, %v3353
        %v3402 = vpack.c.b16 %v3358, %v3354
        %v3403 = vpack.c.b16 %v3363, %v3359
        %v3404 = vpack.c.b16 %v3364, %v3360
        %v3405 = vpack.c.b16 %v3365, %v3361
        %v3406 = vpack.c.b16 %v3366, %v3362
        %v3407 = vpack.c.b16 %v3371, %v3367
        %v3408 = vpack.c.b16 %v3372, %v3368
        %v3409 = vpack.c.b16 %v3373, %v3369
        %v3410 = vpack.c.b16 %v3374, %v3370
        %v3411 = vpack.c.b16 %v3379, %v3375
        %v3412 = vpack.c.b16 %v3380, %v3376
        %v3413 = vpack.c.b16 %v3381, %v3377
        %v3414 = vpack.c.b16 %v3382, %v3378
        %3447 = vmatpush.bf16.msra.mxu0 %v3411
        %3448 = vmatpush.bf16.msra.mxu0 %v3407
        %3449 = vmatpush.bf16.msra.mxu0 %v3403
        %3450 = vmatpush.bf16.msra.mxu0 %v3399
        %3451 = vmatpush.bf16.msra.mxu0 %v3395
        %3452 = vmatpush.bf16.msra.mxu0 %v3391
        %3453 = vmatpush.bf16.msra.mxu0 %v3387
        %3454 = vmatpush.bf16.msra.mxu0 %v3383
        %3455 = vmatmul.bf16.gmra.mxu0 %v3254
        %v3456 = vpop.f32.mrf.mxu0
        %v3457 = vadd.f32 0.0, %v3456
        %v3458 = vpop.f32.mrf.mxu0
        %v3459 = vadd.f32 0.0, %v3458
        %3460 = vdwg.mxu0
        %3461 = vmatpush.bf16.msra.mxu0 %v3412
        %3462 = vmatpush.bf16.msra.mxu0 %v3408
        %3463 = vmatpush.bf16.msra.mxu0 %v3404
        %3464 = vmatpush.bf16.msra.mxu0 %v3400
        %3465 = vmatpush.bf16.msra.mxu0 %v3396
        %3466 = vmatpush.bf16.msra.mxu0 %v3392
        %3467 = vmatpush.bf16.msra.mxu0 %v3388
        %3468 = vmatpush.bf16.msra.mxu0 %v3384
        %3469 = vmatmul.bf16.gmra.mxu0 %v3254
        %v3470 = vpop.f32.mrf.mxu0
        %v3471 = vadd.f32 0.0, %v3470
        %v3472 = vpop.f32.mrf.mxu0
        %v3473 = vadd.f32 0.0, %v3472
        %3474 = vdwg.mxu0
        %3475 = vmatpush.bf16.msra.mxu0 %v3413
        %3476 = vmatpush.bf16.msra.mxu0 %v3409
        %3477 = vmatpush.bf16.msra.mxu0 %v3405
        %3478 = vmatpush.bf16.msra.mxu0 %v3401
        %3479 = vmatpush.bf16.msra.mxu0 %v3397
        %3480 = vmatpush.bf16.msra.mxu0 %v3393
        %3481 = vmatpush.bf16.msra.mxu0 %v3389
        %3482 = vmatpush.bf16.msra.mxu0 %v3385
        %3483 = vmatmul.bf16.gmra.mxu0 %v3254
        %v3484 = vpop.f32.mrf.mxu0
        %v3485 = vadd.f32 0.0, %v3484
        %v3486 = vpop.f32.mrf.mxu0
        %v3487 = vadd.f32 0.0, %v3486
        %3488 = vdwg.mxu0
        %3489 = vmatpush.bf16.msra.mxu0 %v3414
        %3490 = vmatpush.bf16.msra.mxu0 %v3410
        %3491 = vmatpush.bf16.msra.mxu0 %v3406
        %3492 = vmatpush.bf16.msra.mxu0 %v3402
        %3493 = vmatpush.bf16.msra.mxu0 %v3398
        %3494 = vmatpush.bf16.msra.mxu0 %v3394
        %3495 = vmatpush.bf16.msra.mxu0 %v3390
        %3496 = vmatpush.bf16.msra.mxu0 %v3386
        %3497 = vmatmul.bf16.gmra.mxu0 %v3254
        %v3498 = vpop.f32.mrf.mxu0
        %v3499 = vadd.f32 0.0, %v3498
        %v3500 = vpop.f32.mrf.mxu0
        %v3501 = vadd.f32 0.0, %v3500
        %3502 = vdwg.mxu0
        %v3503 = vadd.f32 %v3244, %v3457
        %v3504 = vadd.f32 %v3245, %v3471
        %v3505 = vadd.f32 %v3246, %v3485
        %v3506 = vadd.f32 %v3247, %v3499
        %v3507 = vadd.f32 %v3248, %v3459
        %v3508 = vadd.f32 %v3249, %v3473
        %v3509 = vadd.f32 %v3250, %v3487
        %v3510 = vadd.f32 %v3251, %v3501
        %v3511 = vxor.u32 %v3503, 2147483648
        %v3512 = vxor.u32 %v3504, 2147483648
        %v3513 = vxor.u32 %v3507, 2147483648
        %v3514 = vxor.u32 %v3508, 2147483648
        %v3515 = vmul.f32 %v3511, 1.442695
        %v3516 = vpow.pop %v3515
        %v3517 = vmul.f32 %v3512, 1.442695
        %v3518 = vpow.pop %v3517
        %v3519 = vmul.f32 %v3513, 1.442695
        %v3520 = vpow.pop %v3519
        %v3521 = vmul.f32 %v3514, 1.442695
        %v3522 = vpow.pop %v3521
        %v3523 = vadd.f32 %v3516, 1.0
        %v3524 = vadd.f32 %v3518, 1.0
        %v3525 = vadd.f32 %v3520, 1.0
        %v3526 = vadd.f32 %v3522, 1.0
        %v3527 = vrcp.pop %v3523
        %v3528 = vmul.f32 %v3523, %v3527
        %v3529 = vsub.f32 1.0, %v3528
        %v3530 = vmul.f32 %v3527, %v3529
        %v3531 = vadd.f32 %v3527, %v3530
        %vm3532 = vweird.f32 %v3523
        %vm3533 = vweird.f32 %v3527
        %vm3534 = vmor %vm3532, %vm3533
        %v3535 = vsel %vm3534, %v3527, %v3531
        %v3536 = vand.u32 2147483647, %v3523
        %vm3537 = vcmp.eq.f32.partialorder %v3536, 8.507059e+37
        %v3538 = vand.u32 %v3523, 2147483648
        %v3539 = vor.u32 1.1754944e-38, %v3538
        %v3540 = vsel %vm3537, %v3539, %v3535
        %v3541 = vmul.f32 1.0, %v3540
        %v3542 = vrcp.pop %v3524
        %v3543 = vmul.f32 %v3524, %v3542
        %v3544 = vsub.f32 1.0, %v3543
        %v3545 = vmul.f32 %v3542, %v3544
        %v3546 = vadd.f32 %v3542, %v3545
        %vm3547 = vweird.f32 %v3524
        %vm3548 = vweird.f32 %v3542
        %vm3549 = vmor %vm3547, %vm3548
        %v3550 = vsel %vm3549, %v3542, %v3546
        %v3551 = vand.u32 2147483647, %v3524
        %vm3552 = vcmp.eq.f32.partialorder %v3551, 8.507059e+37
        %v3553 = vand.u32 %v3524, 2147483648
        %v3554 = vor.u32 1.1754944e-38, %v3553
        %v3555 = vsel %vm3552, %v3554, %v3550
        %v3556 = vmul.f32 1.0, %v3555
        %v3557 = vrcp.pop %v3525
        %v3558 = vmul.f32 %v3525, %v3557
        %v3559 = vsub.f32 1.0, %v3558
        %v3560 = vmul.f32 %v3557, %v3559
        %v3561 = vadd.f32 %v3557, %v3560
        %vm3562 = vweird.f32 %v3525
        %vm3563 = vweird.f32 %v3557
        %vm3564 = vmor %vm3562, %vm3563
        %v3565 = vsel %vm3564, %v3557, %v3561
        %v3566 = vand.u32 2147483647, %v3525
        %vm3567 = vcmp.eq.f32.partialorder %v3566, 8.507059e+37
        %v3568 = vand.u32 %v3525, 2147483648
        %v3569 = vor.u32 1.1754944e-38, %v3568
        %v3570 = vsel %vm3567, %v3569, %v3565
        %v3571 = vmul.f32 1.0, %v3570
        %v3572 = vrcp.pop %v3526
        %v3573 = vmul.f32 %v3526, %v3572
        %v3574 = vsub.f32 1.0, %v3573
        %v3575 = vmul.f32 %v3572, %v3574
        %v3576 = vadd.f32 %v3572, %v3575
        %vm3577 = vweird.f32 %v3526
        %vm3578 = vweird.f32 %v3572
        %vm3579 = vmor %vm3577, %vm3578
        %v3580 = vsel %vm3579, %v3572, %v3576
        %v3581 = vand.u32 2147483647, %v3526
        %vm3582 = vcmp.eq.f32.partialorder %v3581, 8.507059e+37
        %v3583 = vand.u32 %v3526, 2147483648
        %v3584 = vor.u32 1.1754944e-38, %v3583
        %v3585 = vsel %vm3582, %v3584, %v3580
        %v3586 = vmul.f32 1.0, %v3585
        %v3587 = vtanh.pop %v3505
        %v3588 = vtanh.pop %v3509
        %v3589 = vxor.u32 %v3506, 2147483648
        %v3590 = vxor.u32 %v3510, 2147483648
        %v3591 = vmul.f32 %v3589, 1.442695
        %v3592 = vpow.pop %v3591
        %v3593 = vmul.f32 %v3590, 1.442695
        %v3594 = vpow.pop %v3593
        %v3595 = vadd.f32 %v3592, 1.0
        %v3596 = vadd.f32 %v3594, 1.0
        %v3597 = vrcp.pop %v3595
        %v3598 = vmul.f32 %v3595, %v3597
        %v3599 = vsub.f32 1.0, %v3598
        %v3600 = vmul.f32 %v3597, %v3599
        %v3601 = vadd.f32 %v3597, %v3600
        %vm3602 = vweird.f32 %v3595
        %vm3603 = vweird.f32 %v3597
        %vm3604 = vmor %vm3602, %vm3603
        %v3605 = vsel %vm3604, %v3597, %v3601
        %v3606 = vand.u32 2147483647, %v3595
        %vm3607 = vcmp.eq.f32.partialorder %v3606, 8.507059e+37
        %v3608 = vand.u32 %v3595, 2147483648
        %v3609 = vor.u32 1.1754944e-38, %v3608
        %v3610 = vsel %vm3607, %v3609, %v3605
        %v3611 = vmul.f32 1.0, %v3610
        %v3612 = vrcp.pop %v3596
        %v3613 = vmul.f32 %v3596, %v3612
        %v3614 = vsub.f32 1.0, %v3613
        %v3615 = vmul.f32 %v3612, %v3614
        %v3616 = vadd.f32 %v3612, %v3615
        %vm3617 = vweird.f32 %v3596
        %vm3618 = vweird.f32 %v3612
        %vm3619 = vmor %vm3617, %vm3618
        %v3620 = vsel %vm3619, %v3612, %v3616
        %v3621 = vand.u32 2147483647, %v3596
        %vm3622 = vcmp.eq.f32.partialorder %v3621, 8.507059e+37
        %v3623 = vand.u32 %v3596, 2147483648
        %v3624 = vor.u32 1.1754944e-38, %v3623
        %v3625 = vsel %vm3622, %v3624, %v3620
        %v3626 = vmul.f32 1.0, %v3625
        %v3627 = vld [vmem:[#allocation3] sm:$0xff]
        %v3628 = vld [vmem:[#allocation3 + $0x8] sm:$0xff]
        %v3629 = vmul.f32 %v3556, %v3627
        %v3630 = vmul.f32 %v3586, %v3628
        %v3631 = vmul.f32 %v3541, %v3587
        %v3632 = vmul.f32 %v3571, %v3588
        %v3633 = vadd.f32 %v3629, %v3631
        %v3634 = vadd.f32 %v3630, %v3632
        %v3635 = vtanh.pop %v3633
        %v3636 = vtanh.pop %v3634
        %v3637 = vmul.f32 %v3611, %v3635
        %v3638 = vmul.f32 %v3626, %v3636
        %3639 = vst [vmem:[#allocation3] sm:$0xff] %v3633
        %3640 = vst [vmem:[#allocation3 + $0x8] sm:$0xff] %v3634
        %3641 = vst [vmem:[#allocation2] sm:$0xff] %v3637
        %3642 = vst [vmem:[#allocation2 + $0x8] sm:$0xff] %v3638
        %v3643 = vpack.c.bf16 %v3637, %v3637
        %v3644 = vpack.c.bf16 %v3638, %v3638
        %s3645 = scalar_lea.vmem [#allocation5], 32
        %3646 = vst [vmem:[%s3645] sm:$0xf] %v3643
        %3647 = vst [vmem:[%s3645 + $0x4] sm:$0xf] %v3644
        %s3648 = smul.u32 10, 4
        %s3649 = smul.addr %s3648, 8
        %s3650 = scalar_lea.vmem [#allocation4], %s3649
        %v3651 = vld [vmem:[%s3650] sm:$0xff]
        %v3652 = vld [vmem:[%s3650 + $0x8] sm:$0xff]
        %v3653 = vld [vmem:[%s3650 + $0x10] sm:$0xff]
        %v3654 = vld [vmem:[%s3650 + $0x18] sm:$0xff]
        %v3655 = vld [vmem:[%s3650 + $0x20] sm:$0xff]
        %v3656 = vld [vmem:[%s3650 + $0x28] sm:$0xff]
        %v3657 = vld [vmem:[%s3650 + $0x30] sm:$0xff]
        %v3658 = vld [vmem:[%s3650 + $0x38] sm:$0xff]
        %v3659 = vld [vmem:[#allocation2] sm:$0xff]
        %v3660 = vld [vmem:[#allocation2 + $0x8] sm:$0xff]
        %v3661 = vpack.c.bf16 %v3660, %v3659
        %v3662 = vld [vmem:[%s475] sm:$0xff]
        %v3663 = vld [vmem:[%s475 + $0x8] sm:$0xff]
        %v3664 = vld [vmem:[%s475 + $0x10] sm:$0xff]
        %v3665 = vld [vmem:[%s475 + $0x18] sm:$0xff]
        %v3666 = vld [vmem:[%s475 + $0x20] sm:$0xff]
        %v3667 = vld [vmem:[%s475 + $0x28] sm:$0xff]
        %v3668 = vld [vmem:[%s475 + $0x30] sm:$0xff]
        %v3669 = vld [vmem:[%s475 + $0x38] sm:$0xff]
        %v3670 = vld [vmem:[%s475 + $0x40] sm:$0xff]
        %v3671 = vld [vmem:[%s475 + $0x48] sm:$0xff]
        %v3672 = vld [vmem:[%s475 + $0x50] sm:$0xff]
        %v3673 = vld [vmem:[%s475 + $0x58] sm:$0xff]
        %v3674 = vld [vmem:[%s475 + $0x60] sm:$0xff]
        %v3675 = vld [vmem:[%s475 + $0x68] sm:$0xff]
        %v3676 = vld [vmem:[%s475 + $0x70] sm:$0xff]
        %v3677 = vld [vmem:[%s475 + $0x78] sm:$0xff]
        %v3678 = vld [vmem:[%s475 + $0x80] sm:$0xff]
        %v3679 = vld [vmem:[%s475 + $0x88] sm:$0xff]
        %v3680 = vld [vmem:[%s475 + $0x90] sm:$0xff]
        %v3681 = vld [vmem:[%s475 + $0x98] sm:$0xff]
        %v3682 = vld [vmem:[%s475 + $0xa0] sm:$0xff]
        %v3683 = vld [vmem:[%s475 + $0xa8] sm:$0xff]
        %v3684 = vld [vmem:[%s475 + $0xb0] sm:$0xff]
        %v3685 = vld [vmem:[%s475 + $0xb8] sm:$0xff]
        %v3686 = vld [vmem:[%s475 + $0xc0] sm:$0xff]
        %v3687 = vld [vmem:[%s475 + $0xc8] sm:$0xff]
        %v3688 = vld [vmem:[%s475 + $0xd0] sm:$0xff]
        %v3689 = vld [vmem:[%s475 + $0xd8] sm:$0xff]
        %v3690 = vld [vmem:[%s475 + $0xe0] sm:$0xff]
        %v3691 = vld [vmem:[%s475 + $0xe8] sm:$0xff]
        %v3692 = vld [vmem:[%s475 + $0xf0] sm:$0xff]
        %v3693 = vld [vmem:[%s475 + $0xf8] sm:$0xff]
        %v3726 = vunpack.c.l.b16 %v3662
        %v3727 = vunpack.c.h.b16 %v3662
        %v3728 = vunpack.c.l.b16 %v3663
        %v3729 = vunpack.c.h.b16 %v3663
        %v3730 = vunpack.c.l.b16 %v3664
        %v3731 = vunpack.c.h.b16 %v3664
        %v3732 = vunpack.c.l.b16 %v3665
        %v3733 = vunpack.c.h.b16 %v3665
        %v3734 = vunpack.c.l.b16 %v3666
        %v3735 = vunpack.c.h.b16 %v3666
        %v3736 = vunpack.c.l.b16 %v3667
        %v3737 = vunpack.c.h.b16 %v3667
        %v3738 = vunpack.c.l.b16 %v3668
        %v3739 = vunpack.c.h.b16 %v3668
        %v3740 = vunpack.c.l.b16 %v3669
        %v3741 = vunpack.c.h.b16 %v3669
        %v3742 = vunpack.c.l.b16 %v3670
        %v3743 = vunpack.c.h.b16 %v3670
        %v3744 = vunpack.c.l.b16 %v3671
        %v3745 = vunpack.c.h.b16 %v3671
        %v3746 = vunpack.c.l.b16 %v3672
        %v3747 = vunpack.c.h.b16 %v3672
        %v3748 = vunpack.c.l.b16 %v3673
        %v3749 = vunpack.c.h.b16 %v3673
        %v3750 = vunpack.c.l.b16 %v3674
        %v3751 = vunpack.c.h.b16 %v3674
        %v3752 = vunpack.c.l.b16 %v3675
        %v3753 = vunpack.c.h.b16 %v3675
        %v3754 = vunpack.c.l.b16 %v3676
        %v3755 = vunpack.c.h.b16 %v3676
        %v3756 = vunpack.c.l.b16 %v3677
        %v3757 = vunpack.c.h.b16 %v3677
        %v3758 = vunpack.c.l.b16 %v3678
        %v3759 = vunpack.c.h.b16 %v3678
        %v3760 = vunpack.c.l.b16 %v3679
        %v3761 = vunpack.c.h.b16 %v3679
        %v3762 = vunpack.c.l.b16 %v3680
        %v3763 = vunpack.c.h.b16 %v3680
        %v3764 = vunpack.c.l.b16 %v3681
        %v3765 = vunpack.c.h.b16 %v3681
        %v3766 = vunpack.c.l.b16 %v3682
        %v3767 = vunpack.c.h.b16 %v3682
        %v3768 = vunpack.c.l.b16 %v3683
        %v3769 = vunpack.c.h.b16 %v3683
        %v3770 = vunpack.c.l.b16 %v3684
        %v3771 = vunpack.c.h.b16 %v3684
        %v3772 = vunpack.c.l.b16 %v3685
        %v3773 = vunpack.c.h.b16 %v3685
        %v3774 = vunpack.c.l.b16 %v3686
        %v3775 = vunpack.c.h.b16 %v3686
        %v3776 = vunpack.c.l.b16 %v3687
        %v3777 = vunpack.c.h.b16 %v3687
        %v3778 = vunpack.c.l.b16 %v3688
        %v3779 = vunpack.c.h.b16 %v3688
        %v3780 = vunpack.c.l.b16 %v3689
        %v3781 = vunpack.c.h.b16 %v3689
        %v3782 = vunpack.c.l.b16 %v3690
        %v3783 = vunpack.c.h.b16 %v3690
        %v3784 = vunpack.c.l.b16 %v3691
        %v3785 = vunpack.c.h.b16 %v3691
        %v3786 = vunpack.c.l.b16 %v3692
        %v3787 = vunpack.c.h.b16 %v3692
        %v3788 = vunpack.c.l.b16 %v3693
        %v3789 = vunpack.c.h.b16 %v3693
        %v3790 = vpack.c.b16 %v3730, %v3726
        %v3791 = vpack.c.b16 %v3731, %v3727
        %v3792 = vpack.c.b16 %v3732, %v3728
        %v3793 = vpack.c.b16 %v3733, %v3729
        %v3794 = vpack.c.b16 %v3738, %v3734
        %v3795 = vpack.c.b16 %v3739, %v3735
        %v3796 = vpack.c.b16 %v3740, %v3736
        %v3797 = vpack.c.b16 %v3741, %v3737
        %v3798 = vpack.c.b16 %v3746, %v3742
        %v3799 = vpack.c.b16 %v3747, %v3743
        %v3800 = vpack.c.b16 %v3748, %v3744
        %v3801 = vpack.c.b16 %v3749, %v3745
        %v3802 = vpack.c.b16 %v3754, %v3750
        %v3803 = vpack.c.b16 %v3755, %v3751
        %v3804 = vpack.c.b16 %v3756, %v3752
        %v3805 = vpack.c.b16 %v3757, %v3753
        %v3806 = vpack.c.b16 %v3762, %v3758
        %v3807 = vpack.c.b16 %v3763, %v3759
        %v3808 = vpack.c.b16 %v3764, %v3760
        %v3809 = vpack.c.b16 %v3765, %v3761
        %v3810 = vpack.c.b16 %v3770, %v3766
        %v3811 = vpack.c.b16 %v3771, %v3767
        %v3812 = vpack.c.b16 %v3772, %v3768
        %v3813 = vpack.c.b16 %v3773, %v3769
        %v3814 = vpack.c.b16 %v3778, %v3774
        %v3815 = vpack.c.b16 %v3779, %v3775
        %v3816 = vpack.c.b16 %v3780, %v3776
        %v3817 = vpack.c.b16 %v3781, %v3777
        %v3818 = vpack.c.b16 %v3786, %v3782
        %v3819 = vpack.c.b16 %v3787, %v3783
        %v3820 = vpack.c.b16 %v3788, %v3784
        %v3821 = vpack.c.b16 %v3789, %v3785
        %3854 = vmatpush.bf16.msra.mxu0 %v3818
        %3855 = vmatpush.bf16.msra.mxu0 %v3814
        %3856 = vmatpush.bf16.msra.mxu0 %v3810
        %3857 = vmatpush.bf16.msra.mxu0 %v3806
        %3858 = vmatpush.bf16.msra.mxu0 %v3802
        %3859 = vmatpush.bf16.msra.mxu0 %v3798
        %3860 = vmatpush.bf16.msra.mxu0 %v3794
        %3861 = vmatpush.bf16.msra.mxu0 %v3790
        %3862 = vmatmul.bf16.gmra.mxu0 %v3661
        %v3863 = vpop.f32.mrf.mxu0
        %v3864 = vadd.f32 0.0, %v3863
        %v3865 = vpop.f32.mrf.mxu0
        %v3866 = vadd.f32 0.0, %v3865
        %3867 = vdwg.mxu0
        %3868 = vmatpush.bf16.msra.mxu0 %v3819
        %3869 = vmatpush.bf16.msra.mxu0 %v3815
        %3870 = vmatpush.bf16.msra.mxu0 %v3811
        %3871 = vmatpush.bf16.msra.mxu0 %v3807
        %3872 = vmatpush.bf16.msra.mxu0 %v3803
        %3873 = vmatpush.bf16.msra.mxu0 %v3799
        %3874 = vmatpush.bf16.msra.mxu0 %v3795
        %3875 = vmatpush.bf16.msra.mxu0 %v3791
        %3876 = vmatmul.bf16.gmra.mxu0 %v3661
        %v3877 = vpop.f32.mrf.mxu0
        %v3878 = vadd.f32 0.0, %v3877
        %v3879 = vpop.f32.mrf.mxu0
        %v3880 = vadd.f32 0.0, %v3879
        %3881 = vdwg.mxu0
        %3882 = vmatpush.bf16.msra.mxu0 %v3820
        %3883 = vmatpush.bf16.msra.mxu0 %v3816
        %3884 = vmatpush.bf16.msra.mxu0 %v3812
        %3885 = vmatpush.bf16.msra.mxu0 %v3808
        %3886 = vmatpush.bf16.msra.mxu0 %v3804
        %3887 = vmatpush.bf16.msra.mxu0 %v3800
        %3888 = vmatpush.bf16.msra.mxu0 %v3796
        %3889 = vmatpush.bf16.msra.mxu0 %v3792
        %3890 = vmatmul.bf16.gmra.mxu0 %v3661
        %v3891 = vpop.f32.mrf.mxu0
        %v3892 = vadd.f32 0.0, %v3891
        %v3893 = vpop.f32.mrf.mxu0
        %v3894 = vadd.f32 0.0, %v3893
        %3895 = vdwg.mxu0
        %3896 = vmatpush.bf16.msra.mxu0 %v3821
        %3897 = vmatpush.bf16.msra.mxu0 %v3817
        %3898 = vmatpush.bf16.msra.mxu0 %v3813
        %3899 = vmatpush.bf16.msra.mxu0 %v3809
        %3900 = vmatpush.bf16.msra.mxu0 %v3805
        %3901 = vmatpush.bf16.msra.mxu0 %v3801
        %3902 = vmatpush.bf16.msra.mxu0 %v3797
        %3903 = vmatpush.bf16.msra.mxu0 %v3793
        %3904 = vmatmul.bf16.gmra.mxu0 %v3661
        %v3905 = vpop.f32.mrf.mxu0
        %v3906 = vadd.f32 0.0, %v3905
        %v3907 = vpop.f32.mrf.mxu0
        %v3908 = vadd.f32 0.0, %v3907
        %3909 = vdwg.mxu0
        %v3910 = vadd.f32 %v3651, %v3864
        %v3911 = vadd.f32 %v3652, %v3878
        %v3912 = vadd.f32 %v3653, %v3892
        %v3913 = vadd.f32 %v3654, %v3906
        %v3914 = vadd.f32 %v3655, %v3866
        %v3915 = vadd.f32 %v3656, %v3880
        %v3916 = vadd.f32 %v3657, %v3894
        %v3917 = vadd.f32 %v3658, %v3908
        %v3918 = vxor.u32 %v3910, 2147483648
        %v3919 = vxor.u32 %v3911, 2147483648
        %v3920 = vxor.u32 %v3914, 2147483648
        %v3921 = vxor.u32 %v3915, 2147483648
        %v3922 = vmul.f32 %v3918, 1.442695
        %v3923 = vpow.pop %v3922
        %v3924 = vmul.f32 %v3919, 1.442695
        %v3925 = vpow.pop %v3924
        %v3926 = vmul.f32 %v3920, 1.442695
        %v3927 = vpow.pop %v3926
        %v3928 = vmul.f32 %v3921, 1.442695
        %v3929 = vpow.pop %v3928
        %v3930 = vadd.f32 %v3923, 1.0
        %v3931 = vadd.f32 %v3925, 1.0
        %v3932 = vadd.f32 %v3927, 1.0
        %v3933 = vadd.f32 %v3929, 1.0
        %v3934 = vrcp.pop %v3930
        %v3935 = vmul.f32 %v3930, %v3934
        %v3936 = vsub.f32 1.0, %v3935
        %v3937 = vmul.f32 %v3934, %v3936
        %v3938 = vadd.f32 %v3934, %v3937
        %vm3939 = vweird.f32 %v3930
        %vm3940 = vweird.f32 %v3934
        %vm3941 = vmor %vm3939, %vm3940
        %v3942 = vsel %vm3941, %v3934, %v3938
        %v3943 = vand.u32 2147483647, %v3930
        %vm3944 = vcmp.eq.f32.partialorder %v3943, 8.507059e+37
        %v3945 = vand.u32 %v3930, 2147483648
        %v3946 = vor.u32 1.1754944e-38, %v3945
        %v3947 = vsel %vm3944, %v3946, %v3942
        %v3948 = vmul.f32 1.0, %v3947
        %v3949 = vrcp.pop %v3931
        %v3950 = vmul.f32 %v3931, %v3949
        %v3951 = vsub.f32 1.0, %v3950
        %v3952 = vmul.f32 %v3949, %v3951
        %v3953 = vadd.f32 %v3949, %v3952
        %vm3954 = vweird.f32 %v3931
        %vm3955 = vweird.f32 %v3949
        %vm3956 = vmor %vm3954, %vm3955
        %v3957 = vsel %vm3956, %v3949, %v3953
        %v3958 = vand.u32 2147483647, %v3931
        %vm3959 = vcmp.eq.f32.partialorder %v3958, 8.507059e+37
        %v3960 = vand.u32 %v3931, 2147483648
        %v3961 = vor.u32 1.1754944e-38, %v3960
        %v3962 = vsel %vm3959, %v3961, %v3957
        %v3963 = vmul.f32 1.0, %v3962
        %v3964 = vrcp.pop %v3932
        %v3965 = vmul.f32 %v3932, %v3964
        %v3966 = vsub.f32 1.0, %v3965
        %v3967 = vmul.f32 %v3964, %v3966
        %v3968 = vadd.f32 %v3964, %v3967
        %vm3969 = vweird.f32 %v3932
        %vm3970 = vweird.f32 %v3964
        %vm3971 = vmor %vm3969, %vm3970
        %v3972 = vsel %vm3971, %v3964, %v3968
        %v3973 = vand.u32 2147483647, %v3932
        %vm3974 = vcmp.eq.f32.partialorder %v3973, 8.507059e+37
        %v3975 = vand.u32 %v3932, 2147483648
        %v3976 = vor.u32 1.1754944e-38, %v3975
        %v3977 = vsel %vm3974, %v3976, %v3972
        %v3978 = vmul.f32 1.0, %v3977
        %v3979 = vrcp.pop %v3933
        %v3980 = vmul.f32 %v3933, %v3979
        %v3981 = vsub.f32 1.0, %v3980
        %v3982 = vmul.f32 %v3979, %v3981
        %v3983 = vadd.f32 %v3979, %v3982
        %vm3984 = vweird.f32 %v3933
        %vm3985 = vweird.f32 %v3979
        %vm3986 = vmor %vm3984, %vm3985
        %v3987 = vsel %vm3986, %v3979, %v3983
        %v3988 = vand.u32 2147483647, %v3933
        %vm3989 = vcmp.eq.f32.partialorder %v3988, 8.507059e+37
        %v3990 = vand.u32 %v3933, 2147483648
        %v3991 = vor.u32 1.1754944e-38, %v3990
        %v3992 = vsel %vm3989, %v3991, %v3987
        %v3993 = vmul.f32 1.0, %v3992
        %v3994 = vtanh.pop %v3912
        %v3995 = vtanh.pop %v3916
        %v3996 = vxor.u32 %v3913, 2147483648
        %v3997 = vxor.u32 %v3917, 2147483648
        %v3998 = vmul.f32 %v3996, 1.442695
        %v3999 = vpow.pop %v3998
        %v4000 = vmul.f32 %v3997, 1.442695
        %v4001 = vpow.pop %v4000
        %v4002 = vadd.f32 %v3999, 1.0
        %v4003 = vadd.f32 %v4001, 1.0
        %v4004 = vrcp.pop %v4002
        %v4005 = vmul.f32 %v4002, %v4004
        %v4006 = vsub.f32 1.0, %v4005
        %v4007 = vmul.f32 %v4004, %v4006
        %v4008 = vadd.f32 %v4004, %v4007
        %vm4009 = vweird.f32 %v4002
        %vm4010 = vweird.f32 %v4004
        %vm4011 = vmor %vm4009, %vm4010
        %v4012 = vsel %vm4011, %v4004, %v4008
        %v4013 = vand.u32 2147483647, %v4002
        %vm4014 = vcmp.eq.f32.partialorder %v4013, 8.507059e+37
        %v4015 = vand.u32 %v4002, 2147483648
        %v4016 = vor.u32 1.1754944e-38, %v4015
        %v4017 = vsel %vm4014, %v4016, %v4012
        %v4018 = vmul.f32 1.0, %v4017
        %v4019 = vrcp.pop %v4003
        %v4020 = vmul.f32 %v4003, %v4019
        %v4021 = vsub.f32 1.0, %v4020
        %v4022 = vmul.f32 %v4019, %v4021
        %v4023 = vadd.f32 %v4019, %v4022
        %vm4024 = vweird.f32 %v4003
        %vm4025 = vweird.f32 %v4019
        %vm4026 = vmor %vm4024, %vm4025
        %v4027 = vsel %vm4026, %v4019, %v4023
        %v4028 = vand.u32 2147483647, %v4003
        %vm4029 = vcmp.eq.f32.partialorder %v4028, 8.507059e+37
        %v4030 = vand.u32 %v4003, 2147483648
        %v4031 = vor.u32 1.1754944e-38, %v4030
        %v4032 = vsel %vm4029, %v4031, %v4027
        %v4033 = vmul.f32 1.0, %v4032
        %v4034 = vld [vmem:[#allocation3] sm:$0xff]
        %v4035 = vld [vmem:[#allocation3 + $0x8] sm:$0xff]
        %v4036 = vmul.f32 %v3963, %v4034
        %v4037 = vmul.f32 %v3993, %v4035
        %v4038 = vmul.f32 %v3948, %v3994
        %v4039 = vmul.f32 %v3978, %v3995
        %v4040 = vadd.f32 %v4036, %v4038
        %v4041 = vadd.f32 %v4037, %v4039
        %v4042 = vtanh.pop %v4040
        %v4043 = vtanh.pop %v4041
        %v4044 = vmul.f32 %v4018, %v4042
        %v4045 = vmul.f32 %v4033, %v4043
        %4046 = vst [vmem:[#allocation3] sm:$0xff] %v4040
        %4047 = vst [vmem:[#allocation3 + $0x8] sm:$0xff] %v4041
        %4048 = vst [vmem:[#allocation2] sm:$0xff] %v4044
        %4049 = vst [vmem:[#allocation2 + $0x8] sm:$0xff] %v4045
        %v4050 = vpack.c.bf16 %v4044, %v4044
        %v4051 = vpack.c.bf16 %v4045, %v4045
        %s4052 = scalar_lea.vmem [#allocation5], 40
        %4053 = vst [vmem:[%s4052] sm:$0xf] %v4050
        %4054 = vst [vmem:[%s4052 + $0x4] sm:$0xf] %v4051
        %s4055 = smul.u32 12, 4
        %s4056 = smul.addr %s4055, 8
        %s4057 = scalar_lea.vmem [#allocation4], %s4056
        %v4058 = vld [vmem:[%s4057] sm:$0xff]
        %v4059 = vld [vmem:[%s4057 + $0x8] sm:$0xff]
        %v4060 = vld [vmem:[%s4057 + $0x10] sm:$0xff]
        %v4061 = vld [vmem:[%s4057 + $0x18] sm:$0xff]
        %v4062 = vld [vmem:[%s4057 + $0x20] sm:$0xff]
        %v4063 = vld [vmem:[%s4057 + $0x28] sm:$0xff]
        %v4064 = vld [vmem:[%s4057 + $0x30] sm:$0xff]
        %v4065 = vld [vmem:[%s4057 + $0x38] sm:$0xff]
        %v4066 = vld [vmem:[#allocation2] sm:$0xff]
        %v4067 = vld [vmem:[#allocation2 + $0x8] sm:$0xff]
        %v4068 = vpack.c.bf16 %v4067, %v4066
        %v4069 = vld [vmem:[%s475] sm:$0xff]
        %v4070 = vld [vmem:[%s475 + $0x8] sm:$0xff]
        %v4071 = vld [vmem:[%s475 + $0x10] sm:$0xff]
        %v4072 = vld [vmem:[%s475 + $0x18] sm:$0xff]
        %v4073 = vld [vmem:[%s475 + $0x20] sm:$0xff]
        %v4074 = vld [vmem:[%s475 + $0x28] sm:$0xff]
        %v4075 = vld [vmem:[%s475 + $0x30] sm:$0xff]
        %v4076 = vld [vmem:[%s475 + $0x38] sm:$0xff]
        %v4077 = vld [vmem:[%s475 + $0x40] sm:$0xff]
        %v4078 = vld [vmem:[%s475 + $0x48] sm:$0xff]
        %v4079 = vld [vmem:[%s475 + $0x50] sm:$0xff]
        %v4080 = vld [vmem:[%s475 + $0x58] sm:$0xff]
        %v4081 = vld [vmem:[%s475 + $0x60] sm:$0xff]
        %v4082 = vld [vmem:[%s475 + $0x68] sm:$0xff]
        %v4083 = vld [vmem:[%s475 + $0x70] sm:$0xff]
        %v4084 = vld [vmem:[%s475 + $0x78] sm:$0xff]
        %v4085 = vld [vmem:[%s475 + $0x80] sm:$0xff]
        %v4086 = vld [vmem:[%s475 + $0x88] sm:$0xff]
        %v4087 = vld [vmem:[%s475 + $0x90] sm:$0xff]
        %v4088 = vld [vmem:[%s475 + $0x98] sm:$0xff]
        %v4089 = vld [vmem:[%s475 + $0xa0] sm:$0xff]
        %v4090 = vld [vmem:[%s475 + $0xa8] sm:$0xff]
        %v4091 = vld [vmem:[%s475 + $0xb0] sm:$0xff]
        %v4092 = vld [vmem:[%s475 + $0xb8] sm:$0xff]
        %v4093 = vld [vmem:[%s475 + $0xc0] sm:$0xff]
        %v4094 = vld [vmem:[%s475 + $0xc8] sm:$0xff]
        %v4095 = vld [vmem:[%s475 + $0xd0] sm:$0xff]
        %v4096 = vld [vmem:[%s475 + $0xd8] sm:$0xff]
        %v4097 = vld [vmem:[%s475 + $0xe0] sm:$0xff]
        %v4098 = vld [vmem:[%s475 + $0xe8] sm:$0xff]
        %v4099 = vld [vmem:[%s475 + $0xf0] sm:$0xff]
        %v4100 = vld [vmem:[%s475 + $0xf8] sm:$0xff]
        %v4133 = vunpack.c.l.b16 %v4069
        %v4134 = vunpack.c.h.b16 %v4069
        %v4135 = vunpack.c.l.b16 %v4070
        %v4136 = vunpack.c.h.b16 %v4070
        %v4137 = vunpack.c.l.b16 %v4071
        %v4138 = vunpack.c.h.b16 %v4071
        %v4139 = vunpack.c.l.b16 %v4072
        %v4140 = vunpack.c.h.b16 %v4072
        %v4141 = vunpack.c.l.b16 %v4073
        %v4142 = vunpack.c.h.b16 %v4073
        %v4143 = vunpack.c.l.b16 %v4074
        %v4144 = vunpack.c.h.b16 %v4074
        %v4145 = vunpack.c.l.b16 %v4075
        %v4146 = vunpack.c.h.b16 %v4075
        %v4147 = vunpack.c.l.b16 %v4076
        %v4148 = vunpack.c.h.b16 %v4076
        %v4149 = vunpack.c.l.b16 %v4077
        %v4150 = vunpack.c.h.b16 %v4077
        %v4151 = vunpack.c.l.b16 %v4078
        %v4152 = vunpack.c.h.b16 %v4078
        %v4153 = vunpack.c.l.b16 %v4079
        %v4154 = vunpack.c.h.b16 %v4079
        %v4155 = vunpack.c.l.b16 %v4080
        %v4156 = vunpack.c.h.b16 %v4080
        %v4157 = vunpack.c.l.b16 %v4081
        %v4158 = vunpack.c.h.b16 %v4081
        %v4159 = vunpack.c.l.b16 %v4082
        %v4160 = vunpack.c.h.b16 %v4082
        %v4161 = vunpack.c.l.b16 %v4083
        %v4162 = vunpack.c.h.b16 %v4083
        %v4163 = vunpack.c.l.b16 %v4084
        %v4164 = vunpack.c.h.b16 %v4084
        %v4165 = vunpack.c.l.b16 %v4085
        %v4166 = vunpack.c.h.b16 %v4085
        %v4167 = vunpack.c.l.b16 %v4086
        %v4168 = vunpack.c.h.b16 %v4086
        %v4169 = vunpack.c.l.b16 %v4087
        %v4170 = vunpack.c.h.b16 %v4087
        %v4171 = vunpack.c.l.b16 %v4088
        %v4172 = vunpack.c.h.b16 %v4088
        %v4173 = vunpack.c.l.b16 %v4089
        %v4174 = vunpack.c.h.b16 %v4089
        %v4175 = vunpack.c.l.b16 %v4090
        %v4176 = vunpack.c.h.b16 %v4090
        %v4177 = vunpack.c.l.b16 %v4091
        %v4178 = vunpack.c.h.b16 %v4091
        %v4179 = vunpack.c.l.b16 %v4092
        %v4180 = vunpack.c.h.b16 %v4092
        %v4181 = vunpack.c.l.b16 %v4093
        %v4182 = vunpack.c.h.b16 %v4093
        %v4183 = vunpack.c.l.b16 %v4094
        %v4184 = vunpack.c.h.b16 %v4094
        %v4185 = vunpack.c.l.b16 %v4095
        %v4186 = vunpack.c.h.b16 %v4095
        %v4187 = vunpack.c.l.b16 %v4096
        %v4188 = vunpack.c.h.b16 %v4096
        %v4189 = vunpack.c.l.b16 %v4097
        %v4190 = vunpack.c.h.b16 %v4097
        %v4191 = vunpack.c.l.b16 %v4098
        %v4192 = vunpack.c.h.b16 %v4098
        %v4193 = vunpack.c.l.b16 %v4099
        %v4194 = vunpack.c.h.b16 %v4099
        %v4195 = vunpack.c.l.b16 %v4100
        %v4196 = vunpack.c.h.b16 %v4100
        %v4197 = vpack.c.b16 %v4137, %v4133
        %v4198 = vpack.c.b16 %v4138, %v4134
        %v4199 = vpack.c.b16 %v4139, %v4135
        %v4200 = vpack.c.b16 %v4140, %v4136
        %v4201 = vpack.c.b16 %v4145, %v4141
        %v4202 = vpack.c.b16 %v4146, %v4142
        %v4203 = vpack.c.b16 %v4147, %v4143
        %v4204 = vpack.c.b16 %v4148, %v4144
        %v4205 = vpack.c.b16 %v4153, %v4149
        %v4206 = vpack.c.b16 %v4154, %v4150
        %v4207 = vpack.c.b16 %v4155, %v4151
        %v4208 = vpack.c.b16 %v4156, %v4152
        %v4209 = vpack.c.b16 %v4161, %v4157
        %v4210 = vpack.c.b16 %v4162, %v4158
        %v4211 = vpack.c.b16 %v4163, %v4159
        %v4212 = vpack.c.b16 %v4164, %v4160
        %v4213 = vpack.c.b16 %v4169, %v4165
        %v4214 = vpack.c.b16 %v4170, %v4166
        %v4215 = vpack.c.b16 %v4171, %v4167
        %v4216 = vpack.c.b16 %v4172, %v4168
        %v4217 = vpack.c.b16 %v4177, %v4173
        %v4218 = vpack.c.b16 %v4178, %v4174
        %v4219 = vpack.c.b16 %v4179, %v4175
        %v4220 = vpack.c.b16 %v4180, %v4176
        %v4221 = vpack.c.b16 %v4185, %v4181
        %v4222 = vpack.c.b16 %v4186, %v4182
        %v4223 = vpack.c.b16 %v4187, %v4183
        %v4224 = vpack.c.b16 %v4188, %v4184
        %v4225 = vpack.c.b16 %v4193, %v4189
        %v4226 = vpack.c.b16 %v4194, %v4190
        %v4227 = vpack.c.b16 %v4195, %v4191
        %v4228 = vpack.c.b16 %v4196, %v4192
        %4261 = vmatpush.bf16.msra.mxu0 %v4225
        %4262 = vmatpush.bf16.msra.mxu0 %v4221
        %4263 = vmatpush.bf16.msra.mxu0 %v4217
        %4264 = vmatpush.bf16.msra.mxu0 %v4213
        %4265 = vmatpush.bf16.msra.mxu0 %v4209
        %4266 = vmatpush.bf16.msra.mxu0 %v4205
        %4267 = vmatpush.bf16.msra.mxu0 %v4201
        %4268 = vmatpush.bf16.msra.mxu0 %v4197
        %4269 = vmatmul.bf16.gmra.mxu0 %v4068
        %v4270 = vpop.f32.mrf.mxu0
        %v4271 = vadd.f32 0.0, %v4270
        %v4272 = vpop.f32.mrf.mxu0
        %v4273 = vadd.f32 0.0, %v4272
        %4274 = vdwg.mxu0
        %4275 = vmatpush.bf16.msra.mxu0 %v4226
        %4276 = vmatpush.bf16.msra.mxu0 %v4222
        %4277 = vmatpush.bf16.msra.mxu0 %v4218
        %4278 = vmatpush.bf16.msra.mxu0 %v4214
        %4279 = vmatpush.bf16.msra.mxu0 %v4210
        %4280 = vmatpush.bf16.msra.mxu0 %v4206
        %4281 = vmatpush.bf16.msra.mxu0 %v4202
        %4282 = vmatpush.bf16.msra.mxu0 %v4198
        %4283 = vmatmul.bf16.gmra.mxu0 %v4068
        %v4284 = vpop.f32.mrf.mxu0
        %v4285 = vadd.f32 0.0, %v4284
        %v4286 = vpop.f32.mrf.mxu0
        %v4287 = vadd.f32 0.0, %v4286
        %4288 = vdwg.mxu0
        %4289 = vmatpush.bf16.msra.mxu0 %v4227
        %4290 = vmatpush.bf16.msra.mxu0 %v4223
        %4291 = vmatpush.bf16.msra.mxu0 %v4219
        %4292 = vmatpush.bf16.msra.mxu0 %v4215
        %4293 = vmatpush.bf16.msra.mxu0 %v4211
        %4294 = vmatpush.bf16.msra.mxu0 %v4207
        %4295 = vmatpush.bf16.msra.mxu0 %v4203
        %4296 = vmatpush.bf16.msra.mxu0 %v4199
        %4297 = vmatmul.bf16.gmra.mxu0 %v4068
        %v4298 = vpop.f32.mrf.mxu0
        %v4299 = vadd.f32 0.0, %v4298
        %v4300 = vpop.f32.mrf.mxu0
        %v4301 = vadd.f32 0.0, %v4300
        %4302 = vdwg.mxu0
        %4303 = vmatpush.bf16.msra.mxu0 %v4228
        %4304 = vmatpush.bf16.msra.mxu0 %v4224
        %4305 = vmatpush.bf16.msra.mxu0 %v4220
        %4306 = vmatpush.bf16.msra.mxu0 %v4216
        %4307 = vmatpush.bf16.msra.mxu0 %v4212
        %4308 = vmatpush.bf16.msra.mxu0 %v4208
        %4309 = vmatpush.bf16.msra.mxu0 %v4204
        %4310 = vmatpush.bf16.msra.mxu0 %v4200
        %4311 = vmatmul.bf16.gmra.mxu0 %v4068
        %v4312 = vpop.f32.mrf.mxu0
        %v4313 = vadd.f32 0.0, %v4312
        %v4314 = vpop.f32.mrf.mxu0
        %v4315 = vadd.f32 0.0, %v4314
        %4316 = vdwg.mxu0
        %v4317 = vadd.f32 %v4058, %v4271
        %v4318 = vadd.f32 %v4059, %v4285
        %v4319 = vadd.f32 %v4060, %v4299
        %v4320 = vadd.f32 %v4061, %v4313
        %v4321 = vadd.f32 %v4062, %v4273
        %v4322 = vadd.f32 %v4063, %v4287
        %v4323 = vadd.f32 %v4064, %v4301
        %v4324 = vadd.f32 %v4065, %v4315
        %v4325 = vxor.u32 %v4317, 2147483648
        %v4326 = vxor.u32 %v4318, 2147483648
        %v4327 = vxor.u32 %v4321, 2147483648
        %v4328 = vxor.u32 %v4322, 2147483648
        %v4329 = vmul.f32 %v4325, 1.442695
        %v4330 = vpow.pop %v4329
        %v4331 = vmul.f32 %v4326, 1.442695
        %v4332 = vpow.pop %v4331
        %v4333 = vmul.f32 %v4327, 1.442695
        %v4334 = vpow.pop %v4333
        %v4335 = vmul.f32 %v4328, 1.442695
        %v4336 = vpow.pop %v4335
        %v4337 = vadd.f32 %v4330, 1.0
        %v4338 = vadd.f32 %v4332, 1.0
        %v4339 = vadd.f32 %v4334, 1.0
        %v4340 = vadd.f32 %v4336, 1.0
        %v4341 = vrcp.pop %v4337
        %v4342 = vmul.f32 %v4337, %v4341
        %v4343 = vsub.f32 1.0, %v4342
        %v4344 = vmul.f32 %v4341, %v4343
        %v4345 = vadd.f32 %v4341, %v4344
        %vm4346 = vweird.f32 %v4337
        %vm4347 = vweird.f32 %v4341
        %vm4348 = vmor %vm4346, %vm4347
        %v4349 = vsel %vm4348, %v4341, %v4345
        %v4350 = vand.u32 2147483647, %v4337
        %vm4351 = vcmp.eq.f32.partialorder %v4350, 8.507059e+37
        %v4352 = vand.u32 %v4337, 2147483648
        %v4353 = vor.u32 1.1754944e-38, %v4352
        %v4354 = vsel %vm4351, %v4353, %v4349
        %v4355 = vmul.f32 1.0, %v4354
        %v4356 = vrcp.pop %v4338
        %v4357 = vmul.f32 %v4338, %v4356
        %v4358 = vsub.f32 1.0, %v4357
        %v4359 = vmul.f32 %v4356, %v4358
        %v4360 = vadd.f32 %v4356, %v4359
        %vm4361 = vweird.f32 %v4338
        %vm4362 = vweird.f32 %v4356
        %vm4363 = vmor %vm4361, %vm4362
        %v4364 = vsel %vm4363, %v4356, %v4360
        %v4365 = vand.u32 2147483647, %v4338
        %vm4366 = vcmp.eq.f32.partialorder %v4365, 8.507059e+37
        %v4367 = vand.u32 %v4338, 2147483648
        %v4368 = vor.u32 1.1754944e-38, %v4367
        %v4369 = vsel %vm4366, %v4368, %v4364
        %v4370 = vmul.f32 1.0, %v4369
        %v4371 = vrcp.pop %v4339
        %v4372 = vmul.f32 %v4339, %v4371
        %v4373 = vsub.f32 1.0, %v4372
        %v4374 = vmul.f32 %v4371, %v4373
        %v4375 = vadd.f32 %v4371, %v4374
        %vm4376 = vweird.f32 %v4339
        %vm4377 = vweird.f32 %v4371
        %vm4378 = vmor %vm4376, %vm4377
        %v4379 = vsel %vm4378, %v4371, %v4375
        %v4380 = vand.u32 2147483647, %v4339
        %vm4381 = vcmp.eq.f32.partialorder %v4380, 8.507059e+37
        %v4382 = vand.u32 %v4339, 2147483648
        %v4383 = vor.u32 1.1754944e-38, %v4382
        %v4384 = vsel %vm4381, %v4383, %v4379
        %v4385 = vmul.f32 1.0, %v4384
        %v4386 = vrcp.pop %v4340
        %v4387 = vmul.f32 %v4340, %v4386
        %v4388 = vsub.f32 1.0, %v4387
        %v4389 = vmul.f32 %v4386, %v4388
        %v4390 = vadd.f32 %v4386, %v4389
        %vm4391 = vweird.f32 %v4340
        %vm4392 = vweird.f32 %v4386
        %vm4393 = vmor %vm4391, %vm4392
        %v4394 = vsel %vm4393, %v4386, %v4390
        %v4395 = vand.u32 2147483647, %v4340
        %vm4396 = vcmp.eq.f32.partialorder %v4395, 8.507059e+37
        %v4397 = vand.u32 %v4340, 2147483648
        %v4398 = vor.u32 1.1754944e-38, %v4397
        %v4399 = vsel %vm4396, %v4398, %v4394
        %v4400 = vmul.f32 1.0, %v4399
        %v4401 = vtanh.pop %v4319
        %v4402 = vtanh.pop %v4323
        %v4403 = vxor.u32 %v4320, 2147483648
        %v4404 = vxor.u32 %v4324, 2147483648
        %v4405 = vmul.f32 %v4403, 1.442695
        %v4406 = vpow.pop %v4405
        %v4407 = vmul.f32 %v4404, 1.442695
        %v4408 = vpow.pop %v4407
        %v4409 = vadd.f32 %v4406, 1.0
        %v4410 = vadd.f32 %v4408, 1.0
        %v4411 = vrcp.pop %v4409
        %v4412 = vmul.f32 %v4409, %v4411
        %v4413 = vsub.f32 1.0, %v4412
        %v4414 = vmul.f32 %v4411, %v4413
        %v4415 = vadd.f32 %v4411, %v4414
        %vm4416 = vweird.f32 %v4409
        %vm4417 = vweird.f32 %v4411
        %vm4418 = vmor %vm4416, %vm4417
        %v4419 = vsel %vm4418, %v4411, %v4415
        %v4420 = vand.u32 2147483647, %v4409
        %vm4421 = vcmp.eq.f32.partialorder %v4420, 8.507059e+37
        %v4422 = vand.u32 %v4409, 2147483648
        %v4423 = vor.u32 1.1754944e-38, %v4422
        %v4424 = vsel %vm4421, %v4423, %v4419
        %v4425 = vmul.f32 1.0, %v4424
        %v4426 = vrcp.pop %v4410
        %v4427 = vmul.f32 %v4410, %v4426
        %v4428 = vsub.f32 1.0, %v4427
        %v4429 = vmul.f32 %v4426, %v4428
        %v4430 = vadd.f32 %v4426, %v4429
        %vm4431 = vweird.f32 %v4410
        %vm4432 = vweird.f32 %v4426
        %vm4433 = vmor %vm4431, %vm4432
        %v4434 = vsel %vm4433, %v4426, %v4430
        %v4435 = vand.u32 2147483647, %v4410
        %vm4436 = vcmp.eq.f32.partialorder %v4435, 8.507059e+37
        %v4437 = vand.u32 %v4410, 2147483648
        %v4438 = vor.u32 1.1754944e-38, %v4437
        %v4439 = vsel %vm4436, %v4438, %v4434
        %v4440 = vmul.f32 1.0, %v4439
        %v4441 = vld [vmem:[#allocation3] sm:$0xff]
        %v4442 = vld [vmem:[#allocation3 + $0x8] sm:$0xff]
        %v4443 = vmul.f32 %v4370, %v4441
        %v4444 = vmul.f32 %v4400, %v4442
        %v4445 = vmul.f32 %v4355, %v4401
        %v4446 = vmul.f32 %v4385, %v4402
        %v4447 = vadd.f32 %v4443, %v4445
        %v4448 = vadd.f32 %v4444, %v4446
        %v4449 = vtanh.pop %v4447
        %v4450 = vtanh.pop %v4448
        %v4451 = vmul.f32 %v4425, %v4449
        %v4452 = vmul.f32 %v4440, %v4450
        %4453 = vst [vmem:[#allocation3] sm:$0xff] %v4447
        %4454 = vst [vmem:[#allocation3 + $0x8] sm:$0xff] %v4448
        %4455 = vst [vmem:[#allocation2] sm:$0xff] %v4451
        %4456 = vst [vmem:[#allocation2 + $0x8] sm:$0xff] %v4452
        %v4457 = vpack.c.bf16 %v4451, %v4451
        %v4458 = vpack.c.bf16 %v4452, %v4452
        %s4459 = scalar_lea.vmem [#allocation5], 48
        %4460 = vst [vmem:[%s4459] sm:$0xf] %v4457
        %4461 = vst [vmem:[%s4459 + $0x4] sm:$0xf] %v4458
        %s4462 = smul.u32 14, 4
        %s4463 = smul.addr %s4462, 8
        %s4464 = scalar_lea.vmem [#allocation4], %s4463
        %v4465 = vld [vmem:[%s4464] sm:$0xff]
        %v4466 = vld [vmem:[%s4464 + $0x8] sm:$0xff]
        %v4467 = vld [vmem:[%s4464 + $0x10] sm:$0xff]
        %v4468 = vld [vmem:[%s4464 + $0x18] sm:$0xff]
        %v4469 = vld [vmem:[%s4464 + $0x20] sm:$0xff]
        %v4470 = vld [vmem:[%s4464 + $0x28] sm:$0xff]
        %v4471 = vld [vmem:[%s4464 + $0x30] sm:$0xff]
        %v4472 = vld [vmem:[%s4464 + $0x38] sm:$0xff]
        %v4473 = vld [vmem:[#allocation2] sm:$0xff]
        %v4474 = vld [vmem:[#allocation2 + $0x8] sm:$0xff]
        %v4475 = vpack.c.bf16 %v4474, %v4473
        %v4476 = vld [vmem:[%s475] sm:$0xff]
        %v4477 = vld [vmem:[%s475 + $0x8] sm:$0xff]
        %v4478 = vld [vmem:[%s475 + $0x10] sm:$0xff]
        %v4479 = vld [vmem:[%s475 + $0x18] sm:$0xff]
        %v4480 = vld [vmem:[%s475 + $0x20] sm:$0xff]
        %v4481 = vld [vmem:[%s475 + $0x28] sm:$0xff]
        %v4482 = vld [vmem:[%s475 + $0x30] sm:$0xff]
        %v4483 = vld [vmem:[%s475 + $0x38] sm:$0xff]
        %v4484 = vld [vmem:[%s475 + $0x40] sm:$0xff]
        %v4485 = vld [vmem:[%s475 + $0x48] sm:$0xff]
        %v4486 = vld [vmem:[%s475 + $0x50] sm:$0xff]
        %v4487 = vld [vmem:[%s475 + $0x58] sm:$0xff]
        %v4488 = vld [vmem:[%s475 + $0x60] sm:$0xff]
        %v4489 = vld [vmem:[%s475 + $0x68] sm:$0xff]
        %v4490 = vld [vmem:[%s475 + $0x70] sm:$0xff]
        %v4491 = vld [vmem:[%s475 + $0x78] sm:$0xff]
        %v4492 = vld [vmem:[%s475 + $0x80] sm:$0xff]
        %v4493 = vld [vmem:[%s475 + $0x88] sm:$0xff]
        %v4494 = vld [vmem:[%s475 + $0x90] sm:$0xff]
        %v4495 = vld [vmem:[%s475 + $0x98] sm:$0xff]
        %v4496 = vld [vmem:[%s475 + $0xa0] sm:$0xff]
        %v4497 = vld [vmem:[%s475 + $0xa8] sm:$0xff]
        %v4498 = vld [vmem:[%s475 + $0xb0] sm:$0xff]
        %v4499 = vld [vmem:[%s475 + $0xb8] sm:$0xff]
        %v4500 = vld [vmem:[%s475 + $0xc0] sm:$0xff]
        %v4501 = vld [vmem:[%s475 + $0xc8] sm:$0xff]
        %v4502 = vld [vmem:[%s475 + $0xd0] sm:$0xff]
        %v4503 = vld [vmem:[%s475 + $0xd8] sm:$0xff]
        %v4504 = vld [vmem:[%s475 + $0xe0] sm:$0xff]
        %v4505 = vld [vmem:[%s475 + $0xe8] sm:$0xff]
        %v4506 = vld [vmem:[%s475 + $0xf0] sm:$0xff]
        %v4507 = vld [vmem:[%s475 + $0xf8] sm:$0xff]
        %v4540 = vunpack.c.l.b16 %v4476
        %v4541 = vunpack.c.h.b16 %v4476
        %v4542 = vunpack.c.l.b16 %v4477
        %v4543 = vunpack.c.h.b16 %v4477
        %v4544 = vunpack.c.l.b16 %v4478
        %v4545 = vunpack.c.h.b16 %v4478
        %v4546 = vunpack.c.l.b16 %v4479
        %v4547 = vunpack.c.h.b16 %v4479
        %v4548 = vunpack.c.l.b16 %v4480
        %v4549 = vunpack.c.h.b16 %v4480
        %v4550 = vunpack.c.l.b16 %v4481
        %v4551 = vunpack.c.h.b16 %v4481
        %v4552 = vunpack.c.l.b16 %v4482
        %v4553 = vunpack.c.h.b16 %v4482
        %v4554 = vunpack.c.l.b16 %v4483
        %v4555 = vunpack.c.h.b16 %v4483
        %v4556 = vunpack.c.l.b16 %v4484
        %v4557 = vunpack.c.h.b16 %v4484
        %v4558 = vunpack.c.l.b16 %v4485
        %v4559 = vunpack.c.h.b16 %v4485
        %v4560 = vunpack.c.l.b16 %v4486
        %v4561 = vunpack.c.h.b16 %v4486
        %v4562 = vunpack.c.l.b16 %v4487
        %v4563 = vunpack.c.h.b16 %v4487
        %v4564 = vunpack.c.l.b16 %v4488
        %v4565 = vunpack.c.h.b16 %v4488
        %v4566 = vunpack.c.l.b16 %v4489
        %v4567 = vunpack.c.h.b16 %v4489
        %v4568 = vunpack.c.l.b16 %v4490
        %v4569 = vunpack.c.h.b16 %v4490
        %v4570 = vunpack.c.l.b16 %v4491
        %v4571 = vunpack.c.h.b16 %v4491
        %v4572 = vunpack.c.l.b16 %v4492
        %v4573 = vunpack.c.h.b16 %v4492
        %v4574 = vunpack.c.l.b16 %v4493
        %v4575 = vunpack.c.h.b16 %v4493
        %v4576 = vunpack.c.l.b16 %v4494
        %v4577 = vunpack.c.h.b16 %v4494
        %v4578 = vunpack.c.l.b16 %v4495
        %v4579 = vunpack.c.h.b16 %v4495
        %v4580 = vunpack.c.l.b16 %v4496
        %v4581 = vunpack.c.h.b16 %v4496
        %v4582 = vunpack.c.l.b16 %v4497
        %v4583 = vunpack.c.h.b16 %v4497
        %v4584 = vunpack.c.l.b16 %v4498
        %v4585 = vunpack.c.h.b16 %v4498
        %v4586 = vunpack.c.l.b16 %v4499
        %v4587 = vunpack.c.h.b16 %v4499
        %v4588 = vunpack.c.l.b16 %v4500
        %v4589 = vunpack.c.h.b16 %v4500
        %v4590 = vunpack.c.l.b16 %v4501
        %v4591 = vunpack.c.h.b16 %v4501
        %v4592 = vunpack.c.l.b16 %v4502
        %v4593 = vunpack.c.h.b16 %v4502
        %v4594 = vunpack.c.l.b16 %v4503
        %v4595 = vunpack.c.h.b16 %v4503
        %v4596 = vunpack.c.l.b16 %v4504
        %v4597 = vunpack.c.h.b16 %v4504
        %v4598 = vunpack.c.l.b16 %v4505
        %v4599 = vunpack.c.h.b16 %v4505
        %v4600 = vunpack.c.l.b16 %v4506
        %v4601 = vunpack.c.h.b16 %v4506
        %v4602 = vunpack.c.l.b16 %v4507
        %v4603 = vunpack.c.h.b16 %v4507
        %v4604 = vpack.c.b16 %v4544, %v4540
        %v4605 = vpack.c.b16 %v4545, %v4541
        %v4606 = vpack.c.b16 %v4546, %v4542
        %v4607 = vpack.c.b16 %v4547, %v4543
        %v4608 = vpack.c.b16 %v4552, %v4548
        %v4609 = vpack.c.b16 %v4553, %v4549
        %v4610 = vpack.c.b16 %v4554, %v4550
        %v4611 = vpack.c.b16 %v4555, %v4551
        %v4612 = vpack.c.b16 %v4560, %v4556
        %v4613 = vpack.c.b16 %v4561, %v4557
        %v4614 = vpack.c.b16 %v4562, %v4558
        %v4615 = vpack.c.b16 %v4563, %v4559
        %v4616 = vpack.c.b16 %v4568, %v4564
        %v4617 = vpack.c.b16 %v4569, %v4565
        %v4618 = vpack.c.b16 %v4570, %v4566
        %v4619 = vpack.c.b16 %v4571, %v4567
        %v4620 = vpack.c.b16 %v4576, %v4572
        %v4621 = vpack.c.b16 %v4577, %v4573
        %v4622 = vpack.c.b16 %v4578, %v4574
        %v4623 = vpack.c.b16 %v4579, %v4575
        %v4624 = vpack.c.b16 %v4584, %v4580
        %v4625 = vpack.c.b16 %v4585, %v4581
        %v4626 = vpack.c.b16 %v4586, %v4582
        %v4627 = vpack.c.b16 %v4587, %v4583
        %v4628 = vpack.c.b16 %v4592, %v4588
        %v4629 = vpack.c.b16 %v4593, %v4589
        %v4630 = vpack.c.b16 %v4594, %v4590
        %v4631 = vpack.c.b16 %v4595, %v4591
        %v4632 = vpack.c.b16 %v4600, %v4596
        %v4633 = vpack.c.b16 %v4601, %v4597
        %v4634 = vpack.c.b16 %v4602, %v4598
        %v4635 = vpack.c.b16 %v4603, %v4599
        %4668 = vmatpush.bf16.msra.mxu0 %v4632
        %4669 = vmatpush.bf16.msra.mxu0 %v4628
        %4670 = vmatpush.bf16.msra.mxu0 %v4624
        %4671 = vmatpush.bf16.msra.mxu0 %v4620
        %4672 = vmatpush.bf16.msra.mxu0 %v4616
        %4673 = vmatpush.bf16.msra.mxu0 %v4612
        %4674 = vmatpush.bf16.msra.mxu0 %v4608
        %4675 = vmatpush.bf16.msra.mxu0 %v4604
        %4676 = vmatmul.bf16.gmra.mxu0 %v4475
        %v4677 = vpop.f32.mrf.mxu0
        %v4678 = vadd.f32 0.0, %v4677
        %v4679 = vpop.f32.mrf.mxu0
        %v4680 = vadd.f32 0.0, %v4679
        %4681 = vdwg.mxu0
        %4682 = vmatpush.bf16.msra.mxu0 %v4633
        %4683 = vmatpush.bf16.msra.mxu0 %v4629
        %4684 = vmatpush.bf16.msra.mxu0 %v4625
        %4685 = vmatpush.bf16.msra.mxu0 %v4621
        %4686 = vmatpush.bf16.msra.mxu0 %v4617
        %4687 = vmatpush.bf16.msra.mxu0 %v4613
        %4688 = vmatpush.bf16.msra.mxu0 %v4609
        %4689 = vmatpush.bf16.msra.mxu0 %v4605
        %4690 = vmatmul.bf16.gmra.mxu0 %v4475
        %v4691 = vpop.f32.mrf.mxu0
        %v4692 = vadd.f32 0.0, %v4691
        %v4693 = vpop.f32.mrf.mxu0
        %v4694 = vadd.f32 0.0, %v4693
        %4695 = vdwg.mxu0
        %4696 = vmatpush.bf16.msra.mxu0 %v4634
        %4697 = vmatpush.bf16.msra.mxu0 %v4630
        %4698 = vmatpush.bf16.msra.mxu0 %v4626
        %4699 = vmatpush.bf16.msra.mxu0 %v4622
        %4700 = vmatpush.bf16.msra.mxu0 %v4618
        %4701 = vmatpush.bf16.msra.mxu0 %v4614
        %4702 = vmatpush.bf16.msra.mxu0 %v4610
        %4703 = vmatpush.bf16.msra.mxu0 %v4606
        %4704 = vmatmul.bf16.gmra.mxu0 %v4475
        %v4705 = vpop.f32.mrf.mxu0
        %v4706 = vadd.f32 0.0, %v4705
        %v4707 = vpop.f32.mrf.mxu0
        %v4708 = vadd.f32 0.0, %v4707
        %4709 = vdwg.mxu0
        %4710 = vmatpush.bf16.msra.mxu0 %v4635
        %4711 = vmatpush.bf16.msra.mxu0 %v4631
        %4712 = vmatpush.bf16.msra.mxu0 %v4627
        %4713 = vmatpush.bf16.msra.mxu0 %v4623
        %4714 = vmatpush.bf16.msra.mxu0 %v4619
        %4715 = vmatpush.bf16.msra.mxu0 %v4615
        %4716 = vmatpush.bf16.msra.mxu0 %v4611
        %4717 = vmatpush.bf16.msra.mxu0 %v4607
        %4718 = vmatmul.bf16.gmra.mxu0 %v4475
        %v4719 = vpop.f32.mrf.mxu0
        %v4720 = vadd.f32 0.0, %v4719
        %v4721 = vpop.f32.mrf.mxu0
        %v4722 = vadd.f32 0.0, %v4721
        %4723 = vdwg.mxu0
        %v4724 = vadd.f32 %v4465, %v4678
        %v4725 = vadd.f32 %v4466, %v4692
        %v4726 = vadd.f32 %v4467, %v4706
        %v4727 = vadd.f32 %v4468, %v4720
        %v4728 = vadd.f32 %v4469, %v4680
        %v4729 = vadd.f32 %v4470, %v4694
        %v4730 = vadd.f32 %v4471, %v4708
        %v4731 = vadd.f32 %v4472, %v4722
        %v4732 = vxor.u32 %v4724, 2147483648
        %v4733 = vxor.u32 %v4725, 2147483648
        %v4734 = vxor.u32 %v4728, 2147483648
        %v4735 = vxor.u32 %v4729, 2147483648
        %v4736 = vmul.f32 %v4732, 1.442695
        %v4737 = vpow.pop %v4736
        %v4738 = vmul.f32 %v4733, 1.442695
        %v4739 = vpow.pop %v4738
        %v4740 = vmul.f32 %v4734, 1.442695
        %v4741 = vpow.pop %v4740
        %v4742 = vmul.f32 %v4735, 1.442695
        %v4743 = vpow.pop %v4742
        %v4744 = vadd.f32 %v4737, 1.0
        %v4745 = vadd.f32 %v4739, 1.0
        %v4746 = vadd.f32 %v4741, 1.0
        %v4747 = vadd.f32 %v4743, 1.0
        %v4748 = vrcp.pop %v4744
        %v4749 = vmul.f32 %v4744, %v4748
        %v4750 = vsub.f32 1.0, %v4749
        %v4751 = vmul.f32 %v4748, %v4750
        %v4752 = vadd.f32 %v4748, %v4751
        %vm4753 = vweird.f32 %v4744
        %vm4754 = vweird.f32 %v4748
        %vm4755 = vmor %vm4753, %vm4754
        %v4756 = vsel %vm4755, %v4748, %v4752
        %v4757 = vand.u32 2147483647, %v4744
        %vm4758 = vcmp.eq.f32.partialorder %v4757, 8.507059e+37
        %v4759 = vand.u32 %v4744, 2147483648
        %v4760 = vor.u32 1.1754944e-38, %v4759
        %v4761 = vsel %vm4758, %v4760, %v4756
        %v4762 = vmul.f32 1.0, %v4761
        %v4763 = vrcp.pop %v4745
        %v4764 = vmul.f32 %v4745, %v4763
        %v4765 = vsub.f32 1.0, %v4764
        %v4766 = vmul.f32 %v4763, %v4765
        %v4767 = vadd.f32 %v4763, %v4766
        %vm4768 = vweird.f32 %v4745
        %vm4769 = vweird.f32 %v4763
        %vm4770 = vmor %vm4768, %vm4769
        %v4771 = vsel %vm4770, %v4763, %v4767
        %v4772 = vand.u32 2147483647, %v4745
        %vm4773 = vcmp.eq.f32.partialorder %v4772, 8.507059e+37
        %v4774 = vand.u32 %v4745, 2147483648
        %v4775 = vor.u32 1.1754944e-38, %v4774
        %v4776 = vsel %vm4773, %v4775, %v4771
        %v4777 = vmul.f32 1.0, %v4776
        %v4778 = vrcp.pop %v4746
        %v4779 = vmul.f32 %v4746, %v4778
        %v4780 = vsub.f32 1.0, %v4779
        %v4781 = vmul.f32 %v4778, %v4780
        %v4782 = vadd.f32 %v4778, %v4781
        %vm4783 = vweird.f32 %v4746
        %vm4784 = vweird.f32 %v4778
        %vm4785 = vmor %vm4783, %vm4784
        %v4786 = vsel %vm4785, %v4778, %v4782
        %v4787 = vand.u32 2147483647, %v4746
        %vm4788 = vcmp.eq.f32.partialorder %v4787, 8.507059e+37
        %v4789 = vand.u32 %v4746, 2147483648
        %v4790 = vor.u32 1.1754944e-38, %v4789
        %v4791 = vsel %vm4788, %v4790, %v4786
        %v4792 = vmul.f32 1.0, %v4791
        %v4793 = vrcp.pop %v4747
        %v4794 = vmul.f32 %v4747, %v4793
        %v4795 = vsub.f32 1.0, %v4794
        %v4796 = vmul.f32 %v4793, %v4795
        %v4797 = vadd.f32 %v4793, %v4796
        %vm4798 = vweird.f32 %v4747
        %vm4799 = vweird.f32 %v4793
        %vm4800 = vmor %vm4798, %vm4799
        %v4801 = vsel %vm4800, %v4793, %v4797
        %v4802 = vand.u32 2147483647, %v4747
        %vm4803 = vcmp.eq.f32.partialorder %v4802, 8.507059e+37
        %v4804 = vand.u32 %v4747, 2147483648
        %v4805 = vor.u32 1.1754944e-38, %v4804
        %v4806 = vsel %vm4803, %v4805, %v4801
        %v4807 = vmul.f32 1.0, %v4806
        %v4808 = vtanh.pop %v4726
        %v4809 = vtanh.pop %v4730
        %v4810 = vxor.u32 %v4727, 2147483648
        %v4811 = vxor.u32 %v4731, 2147483648
        %v4812 = vmul.f32 %v4810, 1.442695
        %v4813 = vpow.pop %v4812
        %v4814 = vmul.f32 %v4811, 1.442695
        %v4815 = vpow.pop %v4814
        %v4816 = vadd.f32 %v4813, 1.0
        %v4817 = vadd.f32 %v4815, 1.0
        %v4818 = vrcp.pop %v4816
        %v4819 = vmul.f32 %v4816, %v4818
        %v4820 = vsub.f32 1.0, %v4819
        %v4821 = vmul.f32 %v4818, %v4820
        %v4822 = vadd.f32 %v4818, %v4821
        %vm4823 = vweird.f32 %v4816
        %vm4824 = vweird.f32 %v4818
        %vm4825 = vmor %vm4823, %vm4824
        %v4826 = vsel %vm4825, %v4818, %v4822
        %v4827 = vand.u32 2147483647, %v4816
        %vm4828 = vcmp.eq.f32.partialorder %v4827, 8.507059e+37
        %v4829 = vand.u32 %v4816, 2147483648
        %v4830 = vor.u32 1.1754944e-38, %v4829
        %v4831 = vsel %vm4828, %v4830, %v4826
        %v4832 = vmul.f32 1.0, %v4831
        %v4833 = vrcp.pop %v4817
        %v4834 = vmul.f32 %v4817, %v4833
        %v4835 = vsub.f32 1.0, %v4834
        %v4836 = vmul.f32 %v4833, %v4835
        %v4837 = vadd.f32 %v4833, %v4836
        %vm4838 = vweird.f32 %v4817
        %vm4839 = vweird.f32 %v4833
        %vm4840 = vmor %vm4838, %vm4839
        %v4841 = vsel %vm4840, %v4833, %v4837
        %v4842 = vand.u32 2147483647, %v4817
        %vm4843 = vcmp.eq.f32.partialorder %v4842, 8.507059e+37
        %v4844 = vand.u32 %v4817, 2147483648
        %v4845 = vor.u32 1.1754944e-38, %v4844
        %v4846 = vsel %vm4843, %v4845, %v4841
        %v4847 = vmul.f32 1.0, %v4846
        %v4848 = vld [vmem:[#allocation3] sm:$0xff]
        %v4849 = vld [vmem:[#allocation3 + $0x8] sm:$0xff]
        %v4850 = vmul.f32 %v4777, %v4848
        %v4851 = vmul.f32 %v4807, %v4849
        %v4852 = vmul.f32 %v4762, %v4808
        %v4853 = vmul.f32 %v4792, %v4809
        %v4854 = vadd.f32 %v4850, %v4852
        %v4855 = vadd.f32 %v4851, %v4853
        %v4856 = vtanh.pop %v4854
        %v4857 = vtanh.pop %v4855
        %v4858 = vmul.f32 %v4832, %v4856
        %v4859 = vmul.f32 %v4847, %v4857
        %4860 = vst [vmem:[#allocation3] sm:$0xff] %v4854
        %4861 = vst [vmem:[#allocation3 + $0x8] sm:$0xff] %v4855
        %4862 = vst [vmem:[#allocation2] sm:$0xff] %v4858
        %4863 = vst [vmem:[#allocation2 + $0x8] sm:$0xff] %v4859
        %v4864 = vpack.c.bf16 %v4858, %v4858
        %v4865 = vpack.c.bf16 %v4859, %v4859
        %s4866 = scalar_lea.vmem [#allocation5], 56
        %4867 = vst [vmem:[%s4866] sm:$0xf] %v4864
        %4868 = vst [vmem:[%s4866 + $0x4] sm:$0xf] %v4865
        %v4869 = vld [vmem:[#allocation2] sm:$0xff]
        %v4870 = vld [vmem:[#allocation2 + $0x8] sm:$0xff]
        %4871 = vst [vmem:[%s538] sm:$0xff] %v4869
        %4872 = vst [vmem:[%s538 + $0x8] sm:$0xff] %v4870
        %v4873 = vld [vmem:[#allocation3] sm:$0xff]
        %v4874 = vld [vmem:[#allocation3 + $0x8] sm:$0xff]
        %4875 = vst [vmem:[%s545] sm:$0xff] %v4873
        %4876 = vst [vmem:[%s545 + $0x8] sm:$0xff] %v4874
        %p4877 = scmp.eq.s32.totalorder %s30, 1
        // Predicated region
        $region85: #{tpu_custom_call.1} parent=47 // pred_check
          %p4878 = pneg %p4877
        $region86: #{tpu_custom_call.1} parent=47 // pred_check_branch
          %4880 = sbr.rel (%p4878) target = $region88
        $region87: #{tpu_custom_call.1} parent=47 // pred_region
          %v4881 = vld [vmem:[#allocation5] sm:$0xf]
          %v4882 = vld [vmem:[#allocation5 + $0x4] sm:$0xf]
          %v4883 = vld [vmem:[#allocation5 + $0x8] sm:$0xf]
          %v4884 = vld [vmem:[#allocation5 + $0xc] sm:$0xf]
          %v4885 = vld [vmem:[#allocation5 + $0x10] sm:$0xf]
          %v4886 = vld [vmem:[#allocation5 + $0x14] sm:$0xf]
          %v4887 = vld [vmem:[#allocation5 + $0x18] sm:$0xf]
          %v4888 = vld [vmem:[#allocation5 + $0x1c] sm:$0xf]
          %v4889 = vld [vmem:[#allocation5 + $0x20] sm:$0xf]
          %v4890 = vld [vmem:[#allocation5 + $0x24] sm:$0xf]
          %v4891 = vld [vmem:[#allocation5 + $0x28] sm:$0xf]
          %v4892 = vld [vmem:[#allocation5 + $0x2c] sm:$0xf]
          %v4893 = vld [vmem:[#allocation5 + $0x30] sm:$0xf]
          %v4894 = vld [vmem:[#allocation5 + $0x34] sm:$0xf]
          %v4895 = vld [vmem:[#allocation5 + $0x38] sm:$0xf]
          %v4896 = vld [vmem:[#allocation5 + $0x3c] sm:$0xf]
          %4897 = vst [vmem:[#allocation17] sm:$0xf] %v4881
          %4898 = vst [vmem:[#allocation17 + $0x4] sm:$0xf] %v4882
          %4899 = vst [vmem:[#allocation17 + $0x8] sm:$0xf] %v4883
          %4900 = vst [vmem:[#allocation17 + $0xc] sm:$0xf] %v4884
          %4901 = vst [vmem:[#allocation17 + $0x10] sm:$0xf] %v4885
          %4902 = vst [vmem:[#allocation17 + $0x14] sm:$0xf] %v4886
          %4903 = vst [vmem:[#allocation17 + $0x18] sm:$0xf] %v4887
          %4904 = vst [vmem:[#allocation17 + $0x1c] sm:$0xf] %v4888
          %4905 = vst [vmem:[#allocation17 + $0x20] sm:$0xf] %v4889
          %4906 = vst [vmem:[#allocation17 + $0x24] sm:$0xf] %v4890
          %4907 = vst [vmem:[#allocation17 + $0x28] sm:$0xf] %v4891
          %4908 = vst [vmem:[#allocation17 + $0x2c] sm:$0xf] %v4892
          %4909 = vst [vmem:[#allocation17 + $0x30] sm:$0xf] %v4893
          %4910 = vst [vmem:[#allocation17 + $0x34] sm:$0xf] %v4894
          %4911 = vst [vmem:[#allocation17 + $0x38] sm:$0xf] %v4895
          %4912 = vst [vmem:[#allocation17 + $0x3c] sm:$0xf] %v4896
        $region88: #{tpu_custom_call.1} parent=47 // pred_fallthru
          _
        %s4913 = sand.u32 %s30, 1
        %s4914 = scalar_lea.sflag [#allocation19], %s4913
        %s4915 = sand.u32 %s231, 1
        %s4916 = smul.addr %s4915, 16
        %s4917 = scalar_lea.vmem [#allocation18], %s4916
        %s4918 = sand.u32 %s30, 1
        %s4919 = scalar_lea.sflag [#allocation19], %s4918
        %s4920 = sand.u32 %s257, 1
        %s4921 = smul.addr %s4920, 16
        %s4922 = scalar_lea.vmem [#allocation20], %s4921
        // Predicated region
        $region89: #{tpu_custom_call.1} parent=47 // pred_check
          %p4923 = pneg %p215
        $region90: #{tpu_custom_call.1} parent=47 // pred_check_branch
          %4925 = sbr.rel (%p4923) target = $region92
        $region91: #{tpu_custom_call.1} parent=47 // pred_region
          %4927 = vsyncadd [#allocation8], 0
          %s4928 = sshll.u32 [#allocation17], 4
          %s4929 = int_to_ptr.vmem [resolvable:$true] %s4928
          %s4930 = sshll.u32 %s7, 4
          %s4931 = int_to_ptr.hbm [resolvable:$true] %s4930
          %4936 = dma.vmem_to_hbm [thread:$0]  %s4929, 1024, %s4931, [#allocation8], 64, 64, 4
        $region92: #{tpu_custom_call.1} parent=47 // pred_fallthru
          _
        // Predicated region
        $region93: #{tpu_custom_call.1} parent=47 // pred_check
          %p4937 = pneg %p241
        $region94: #{tpu_custom_call.1} parent=47 // pred_check_branch
          %4939 = sbr.rel (%p4937) target = $region96
        $region95: #{tpu_custom_call.1} parent=47 // pred_region
          %4941 = vsyncadd %s4914, 0
          %s4942 = smul.addr %s30, 2
          %s4943 = smul.addr %s4942, 8
          %s4944 = scalar_lea.hbm %s8, %s4943
          %s4945 = sshll.u32 %s4917, 4
          %s4946 = int_to_ptr.vmem [resolvable:$true] %s4945
          %s4947 = sshll.u32 %s4944, 4
          %s4948 = int_to_ptr.hbm [resolvable:$true] %s4947
          %4953 = dma.vmem_to_hbm [thread:$0]  %s4946, 256, %s4948, %s4914, 128, 128, 8
        $region96: #{tpu_custom_call.1} parent=47 // pred_fallthru
          _
        // Predicated region
        $region97: #{tpu_custom_call.1} parent=47 // pred_check
          %p4954 = pneg %p267
        $region98: #{tpu_custom_call.1} parent=47 // pred_check_branch
          %4956 = sbr.rel (%p4954) target = $region100
        $region99: #{tpu_custom_call.1} parent=47 // pred_region
          %4958 = vsyncadd %s4919, 0
          %s4959 = smul.addr %s30, 2
          %s4960 = smul.addr %s4959, 8
          %s4961 = scalar_lea.hbm %s9, %s4960
          %s4962 = sshll.u32 %s4922, 4
          %s4963 = int_to_ptr.vmem [resolvable:$true] %s4962
          %s4964 = sshll.u32 %s4961, 4
          %s4965 = int_to_ptr.hbm [resolvable:$true] %s4964
          %4970 = dma.vmem_to_hbm [thread:$0]  %s4963, 256, %s4965, %s4919, 128, 128, 8
        $region100: #{tpu_custom_call.1} parent=47 // pred_fallthru
          _
        // Predicated region
        $region101: #{tpu_custom_call.1} parent=47 // pred_check
          %p4971 = pneg %p215
        $region102: #{tpu_custom_call.1} parent=47 // pred_check_branch
          %4973 = sbr.rel (%p4971) target = $region104
        $region103: #{tpu_custom_call.1} parent=47 // pred_region
          %4975 = dma.done [#allocation8], 1024
        $region104: #{tpu_custom_call.1} parent=47 // pred_fallthru
          _
      $region48: #{tpu_custom_call.1} parent=5 // pred_fallthru
        _
      %p4976 = scmp.le.s32.totalorder 2, %s25
      // Predicated region
      $region105: #{tpu_custom_call.1} parent=5 // pred_check
        %p4977 = pneg %p4976
      $region106: #{tpu_custom_call.1} parent=5 // pred_check_branch
        %4979 = sbr.rel (%p4977) target = $region108
      $region107: #{tpu_custom_call.1} parent=5 // pred_region
        %s4980 = ssub.s32 %s25, 2
        // Predicated region
        $region109: #{tpu_custom_call.1} parent=107 // pred_check
          %p4981 = pneg %p247
        $region110: #{tpu_custom_call.1} parent=107 // pred_check_branch
          %4983 = sbr.rel (%p4981) target = $region112
        $region111: #{tpu_custom_call.1} parent=107 // pred_region
          %s4984 = sand.u32 %s31, 1
          %s4985 = scalar_lea.sflag [#allocation19], %s4984
          %s4986 = sand.u32 %s232, 1
          %s4987 = smul.addr %s4986, 16
          %s4988 = scalar_lea.vmem [#allocation18], %s4987
          %4990 = dma.done %s4985, 256
        $region112: #{tpu_custom_call.1} parent=107 // pred_fallthru
          _
        // Predicated region
        $region113: #{tpu_custom_call.1} parent=107 // pred_check
          %p4991 = pneg %p273
        $region114: #{tpu_custom_call.1} parent=107 // pred_check_branch
          %4993 = sbr.rel (%p4991) target = $region116
        $region115: #{tpu_custom_call.1} parent=107 // pred_region
          %s4994 = sand.u32 %s31, 1
          %s4995 = scalar_lea.sflag [#allocation19], %s4994
          %s4996 = sand.u32 %s258, 1
          %s4997 = smul.addr %s4996, 16
          %s4998 = scalar_lea.vmem [#allocation20], %s4997
          %5000 = dma.done %s4995, 256
        $region116: #{tpu_custom_call.1} parent=107 // pred_fallthru
          _
      $region108: #{tpu_custom_call.1} parent=5 // pred_fallthru
        _
    $region6: #{tpu_custom_call.1} parent=1 // loop_footer
      %s29 = sadd.s32 1, %s25
    $region7: #{tpu_custom_call.1} parent=1 // loop_footer_branch
      %24 = sbr.rel target = $region3
    $region8: #{tpu_custom_call.1} parent=1 // loop_exit
      _
    %5001 = vsyncpa [#allocation7], 1
    %s5002 = scalar_lea.sflag [#allocation7], 1
    %5003 = vsyncpa %s5002, 1
    %5004 = vsyncpa [#allocation10], 1
    %s5005 = scalar_lea.sflag [#allocation10], 1
    %5006 = vsyncpa %s5005, 1
    %5007 = vsyncpa [#allocation13], 1
    %5008 = vsyncpa [#allocation8], 1
    %s5009 = scalar_lea.sflag [#allocation8], 1
    %5010 = vsyncpa %s5009, 1
    %5011 = vsyncpa [#allocation19], 1
    %s5012 = scalar_lea.sflag [#allocation19], 1
    %5013 = vsyncpa %s5012, 1

</llo_original>
